<compile_context>
chip_gen: v7x
topology: tpu7x:2x2x1
jax: 0.10.0
libtpu: 0.0.40
codegen_flags: <defaults>
</compile_context>

<pallas_src>
import math

import jax
import jax.numpy as jnp
from jax.experimental import pallas as pl
from jax.experimental.pallas import tpu as pltpu

B, S, D = 2, 8, 32          # batch, seq, d_model
HEADS = 4
D_HEAD = D // HEADS
D_FF = 2048                 # FeedForward default d_ff
EPS = 1e-6

# Row offsets inside the packed small-param slab (all rows are 32 lanes wide).
ROW_ALPHA1, ROW_BETA1, ROW_ALPHA2, ROW_BETA2 = 0, 1, 2, 3
ROW_BQ, ROW_BK, ROW_BO, ROW_B2 = 4, 5, 6, 7
ROW_WQ, ROW_WK, ROW_WO = 8, 40, 72
PACKED_ROWS = 104


def encoder_layer_kernel(x_ref, p_ref, b1_ref, w1_hbm, w2_hbm, o_ref,
                         w1_vmem, w2_vmem, dma_sem):
    # Kick off the FFN-weight fetches immediately; they overlap with
    # norm_1 + Q/K projections + attention + norm_2.
    cp_w1 = pltpu.make_async_copy(w1_hbm, w1_vmem, dma_sem.at[0])
    cp_w2 = pltpu.make_async_copy(w2_hbm, w2_vmem, dma_sem.at[1])
    cp_w1.start()
    cp_w2.start()

    x = x_ref[...]                                    # (B*S, D) f32
    p = p_ref[...]                                    # (104, D) f32 packed slab

    alpha1 = p[ROW_ALPHA1:ROW_ALPHA1 + 1, :]
    beta1 = p[ROW_BETA1:ROW_BETA1 + 1, :]
    alpha2 = p[ROW_ALPHA2:ROW_ALPHA2 + 1, :]
    beta2 = p[ROW_BETA2:ROW_BETA2 + 1, :]
    bq = p[ROW_BQ:ROW_BQ + 1, :]                      # pre-scaled by 1/sqrt(d_head)
    bk = p[ROW_BK:ROW_BK + 1, :]
    bo = p[ROW_BO:ROW_BO + 1, :]
    b2 = p[ROW_B2:ROW_B2 + 1, :]
    wq = p[ROW_WQ:ROW_WQ + D, :]                      # pre-scaled by 1/sqrt(d_head)
    wk = p[ROW_WK:ROW_WK + D, :]
    wo = p[ROW_WO:ROW_WO + D, :]

    def torch_like_norm(v, alpha, bias):
        mean = jnp.mean(v, axis=-1, keepdims=True)
        # torch .std() is unbiased (ddof=1); eps added OUTSIDE the division,
        # exactly as in the PyTorch NormLayer.  rsqrt rides the EUP slot.
        var = jnp.sum((v - mean) ** 2, axis=-1, keepdims=True) * (1.0 / (D - 1))
        return alpha * ((v - mean) * jax.lax.rsqrt(var) + EPS) + bias

    # ---- norm_1 ----
    xn = torch_like_norm(x, alpha1, beta1)

    # ---- multi-head self-attention (projections on flattened rows) ----
    q = jnp.dot(xn, wq, preferred_element_type=jnp.float32) + bq
    k = jnp.dot(xn, wk, preferred_element_type=jnp.float32) + bk
    # Reference module applies k_linear to v -> v == k; reuse k directly.

    q3 = q.reshape(B, S, D)                           # sublane-major split, no relayout
    k3 = k.reshape(B, S, D)

    head_ctx = []
    for h in range(HEADS):                            # short static unrolled loop
        lo = h * D_HEAD
        qh = q3[:, :, lo:lo + D_HEAD]                 # (B, S, dh)
        kh = k3[:, :, lo:lo + D_HEAD]
        scores = jnp.einsum("bqd,bkd->bqk", qh, kh,
                            preferred_element_type=jnp.float32)      # scale folded into wq/bq
        scores = scores - jnp.max(scores, axis=-1, keepdims=True)
        e = jnp.exp(scores)
        prob = e / jnp.sum(e, axis=-1, keepdims=True)                 # exact softmax
        head_ctx.append(jnp.einsum("bqk,bkd->bqd", prob, kh,          # v == k
                                   preferred_element_type=jnp.float32))
    concat = jnp.concatenate(head_ctx, axis=-1).reshape(B * S, D)

    attn_out = jnp.dot(concat, wo, preferred_element_type=jnp.float32) + bo

    # dropout_1 = identity; no residual add in the reference module.
    # ---- norm_2 ----
    x2n = torch_like_norm(attn_out, alpha2, beta2)

    # ---- feed forward: bf16 weights (manually DMA'd), f32 accumulation ----
    cp_w1.wait()
    cp_w2.wait()
    hid = jnp.dot(x2n.astype(jnp.bfloat16), w1_vmem[...],
                  preferred_element_type=jnp.float32) + b1_ref[...]
    hid = jnp.maximum(hid, 0.0)
    out = jnp.dot(hid.astype(jnp.bfloat16), w2_vmem[...],
                  preferred_element_type=jnp.float32) + b2
    o_ref[...] = out


def make_params(key):
    ks = jax.random.split(key, 8)
    scale = 0.05
    p = {
        "alpha1": jnp.ones((1, D), jnp.float32),
        "beta1": jnp.zeros((1, D), jnp.float32),
        "alpha2": jnp.ones((1, D), jnp.float32),
        "beta2": jnp.zeros((1, D), jnp.float32),
        "wq": scale * jax.random.normal(ks[0], (D, D), jnp.float32),
        "bq": scale * jax.random.normal(ks[1], (1, D), jnp.float32),
        "wk": scale * jax.random.normal(ks[2], (D, D), jnp.float32),
        "bk": scale * jax.random.normal(ks[3], (1, D), jnp.float32),
        # v_linear params exist in the module but are never used by its forward
        # (k_linear is applied to v); kept for documentation, not passed to the kernel.
        "wv": scale * jax.random.normal(ks[4], (D, D), jnp.float32),
        "bv": scale * jax.random.normal(ks[5], (1, D), jnp.float32),
        "wo": scale * jax.random.normal(ks[6], (D, D), jnp.float32),
        "bo": jnp.zeros((1, D), jnp.float32),
        # FFN weights stored bf16 (dominant HBM traffic); biases stay f32.
        "w1": (scale * jax.random.normal(ks[7], (D, D_FF), jnp.float32)
               ).astype(jnp.bfloat16),
        "b1": jnp.zeros((1, D_FF), jnp.float32),
        "w2": (scale * jax.random.normal(jax.random.fold_in(key, 99),
                                         (D_FF, D), jnp.float32)
               ).astype(jnp.bfloat16),
        "b2": jnp.zeros((1, D), jnp.float32),
    }
    return p


def _pack_small_params(params):
    """Concatenate all small f32 params into one (104, 32) slab (one DMA).

    The 1/sqrt(d_head) attention scale is folded into wq / bq here (host-side
    constant fold), so the kernel never multiplies scores by a scale.
    """
    inv_sqrt_dh = 1.0 / math.sqrt(float(D) / float(HEADS))
    rows = [
        params["alpha1"], params["beta1"], params["alpha2"], params["beta2"],
        params["bq"] * inv_sqrt_dh, params["bk"], params["bo"], params["b2"],
        params["wq"] * inv_sqrt_dh, params["wk"], params["wo"],
    ]
    packed = jnp.concatenate(rows, axis=0)
    assert packed.shape == (PACKED_ROWS, D)
    return packed


@jax.jit
def encoder_layer(x, params):
    # HBM-side reshapes are free; present the kernel a flat (B*S, D) slab.
    x_flat = x.reshape(B * S, D)
    packed = _pack_small_params(params)

    out_flat = pl.pallas_call(
        encoder_layer_kernel,
        out_shape=jax.ShapeDtypeStruct((B * S, D), jnp.float32),
        # Single invocation (no grid): whole arrays resident in VMEM, no
        # per-step grid overhead, no redundant weight double-buffering.
        in_specs=[
            pl.BlockSpec(memory_space=pltpu.MemorySpace.VMEM),   # x
            pl.BlockSpec(memory_space=pltpu.MemorySpace.VMEM),   # packed small params
            pl.BlockSpec(memory_space=pltpu.MemorySpace.VMEM),   # b1
            pl.BlockSpec(memory_space=pl.ANY),                   # w1 -> manual DMA
            pl.BlockSpec(memory_space=pl.ANY),                   # w2 -> manual DMA
        ],
        out_specs=pl.BlockSpec(memory_space=pltpu.MemorySpace.VMEM),
        scratch_shapes=[
            pltpu.VMEM((D, D_FF), jnp.bfloat16),                 # w1 landing buffer
            pltpu.VMEM((D_FF, D), jnp.bfloat16),                 # w2 landing buffer
            pltpu.SemaphoreType.DMA((2,)),
        ],
    )(x_flat, packed, params["b1"], params["w1"], params["w2"])
    return out_flat.reshape(B, S, D)


def reference(x, p):
    """Pure-JAX replica of the (eval-mode) PyTorch forward, for verification.

    Mirrors the kernel's bf16 storage of w1/w2 (cast at the matmul inputs, f32
    accumulation); f32 matmuls use HIGHEST precision to match the kernel's
    exact f32 MXU matmuls, so the comparison isolates the Pallas lowering.
    """
    hp = jax.lax.Precision.HIGHEST

    def norm(v, a, b):
        mean = v.mean(-1, keepdims=True)
        std = jnp.sqrt(((v - mean) ** 2).sum(-1, keepdims=True) / (D - 1))
        return a * ((v - mean) / std + EPS) + b

    xn = norm(x, p["alpha1"], p["beta1"])
    q = jnp.dot(xn, p["wq"], precision=hp) + p["bq"]
    k = jnp.dot(xn, p["wk"], precision=hp) + p["bk"]
    v = jnp.dot(xn, p["wk"], precision=hp) + p["bk"]   # k_linear applied to v, as in reference
    qh = q.reshape(B, S, HEADS, D_HEAD).transpose(0, 2, 1, 3)
    kh = k.reshape(B, S, HEADS, D_HEAD).transpose(0, 2, 1, 3)
    vh = v.reshape(B, S, HEADS, D_HEAD).transpose(0, 2, 1, 3)
    scores = jnp.einsum("bhqd,bhkd->bhqk", qh, kh,
                        precision=hp) / math.sqrt(D / HEADS)
    attn = jax.nn.softmax(scores, axis=-1)
    ctx = jnp.einsum("bhqk,bhkd->bhqd", attn, vh, precision=hp)
    ctx = ctx.transpose(0, 2, 1, 3).reshape(B, S, D)
    attn_out = jnp.dot(ctx, p["wo"], precision=hp) + p["bo"]
    x2n = norm(attn_out, p["alpha2"], p["beta2"])
    hid = jax.nn.relu(jnp.dot(x2n.astype(jnp.bfloat16), p["w1"],
                              preferred_element_type=jnp.float32) + p["b1"])
    return jnp.dot(hid.astype(jnp.bfloat16), p["w2"],
                   preferred_element_type=jnp.float32) + p["b2"]


if __name__ == "__main__":
    key = jax.random.PRNGKey(0)
    kx, kp = jax.random.split(key)
    x = jax.random.normal(kx, (B, S, D), jnp.float32)
    params = make_params(kp)

    y = jax.block_until_ready(encoder_layer(x, params))
    y_ref = jax.block_until_ready(reference(x, params))

    assert y.shape == (B, S, D)
    max_err = float(jnp.max(jnp.abs(y - y_ref)))
    assert jnp.allclose(y, y_ref, rtol=5e-3, atol=5e-3), f"max_err={max_err}"
    print("KERNEL_OK")
</pallas_src>

<mosaic_0001>
module attributes {stable_mosaic.version = 11 : i64} {
  func.func @encoder_layer_kernel(%arg0: memref<16x32xf32, #tpu.memory_space<vmem>>, %arg1: memref<104x32xf32, #tpu.memory_space<vmem>>, %arg2: memref<1x2048xf32, #tpu.memory_space<vmem>>, %arg3: memref<32x2048xbf16, #tpu.memory_space<any>>, %arg4: memref<2048x32xbf16, #tpu.memory_space<any>>, %arg5: memref<16x32xf32, #tpu.memory_space<vmem>>, %arg6: memref<32x2048xbf16, #tpu.memory_space<vmem>>, %arg7: memref<2048x32xbf16, #tpu.memory_space<vmem>>, %arg8: memref<2x!tpu.dma_semaphore, #tpu.memory_space<semaphore_mem>>) attributes {dimension_semantics = [], scalar_prefetch = 0 : i64, scratch_operands = 3 : i64, tpu.core_type = #tpu.core_type<tc>} {
    %c0_i32 = arith.constant 0 : i32
    %0 = tpu.memref_slice %arg8[%c0_i32] : memref<2x!tpu.dma_semaphore, #tpu.memory_space<semaphore_mem>> -> memref<1x!tpu.dma_semaphore, #tpu.memory_space<semaphore_mem>>
    %1 = tpu.memref_squeeze %0 : memref<1x!tpu.dma_semaphore, #tpu.memory_space<semaphore_mem>> -> memref<!tpu.dma_semaphore, #tpu.memory_space<semaphore_mem>>
    tpu.enqueue_dma source(%arg3 : memref<32x2048xbf16, #tpu.memory_space<any>>) target(%arg6 : memref<32x2048xbf16, #tpu.memory_space<vmem>>) target_semaphore(%1 : memref<!tpu.dma_semaphore, #tpu.memory_space<semaphore_mem>>)
    %c1_i32 = arith.constant 1 : i32
    %2 = tpu.memref_slice %arg8[%c1_i32] : memref<2x!tpu.dma_semaphore, #tpu.memory_space<semaphore_mem>> -> memref<1x!tpu.dma_semaphore, #tpu.memory_space<semaphore_mem>>
    %3 = tpu.memref_squeeze %2 : memref<1x!tpu.dma_semaphore, #tpu.memory_space<semaphore_mem>> -> memref<!tpu.dma_semaphore, #tpu.memory_space<semaphore_mem>>
    tpu.enqueue_dma source(%arg4 : memref<2048x32xbf16, #tpu.memory_space<any>>) target(%arg7 : memref<2048x32xbf16, #tpu.memory_space<vmem>>) target_semaphore(%3 : memref<!tpu.dma_semaphore, #tpu.memory_space<semaphore_mem>>)
    %c0 = arith.constant 0 : index
    %c0_0 = arith.constant 0 : index
    %4 = vector.load %arg0[%c0, %c0_0] : memref<16x32xf32, #tpu.memory_space<vmem>>, vector<16x32xf32>
    %c0_1 = arith.constant 0 : index
    %c0_2 = arith.constant 0 : index
    %5 = vector.load %arg1[%c0_1, %c0_2] : memref<104x32xf32, #tpu.memory_space<vmem>>, vector<104x32xf32>
    %6 = vector.extract_strided_slice %5 {offsets = [0, 0], sizes = [1, 32], strides = [1, 1]} : vector<104x32xf32> to vector<1x32xf32>
    %7 = vector.extract_strided_slice %5 {offsets = [1, 0], sizes = [1, 32], strides = [1, 1]} : vector<104x32xf32> to vector<1x32xf32>
    %8 = vector.extract_strided_slice %5 {offsets = [2, 0], sizes = [1, 32], strides = [1, 1]} : vector<104x32xf32> to vector<1x32xf32>
    %9 = vector.extract_strided_slice %5 {offsets = [3, 0], sizes = [1, 32], strides = [1, 1]} : vector<104x32xf32> to vector<1x32xf32>
    %10 = vector.extract_strided_slice %5 {offsets = [4, 0], sizes = [1, 32], strides = [1, 1]} : vector<104x32xf32> to vector<1x32xf32>
    %11 = vector.extract_strided_slice %5 {offsets = [5, 0], sizes = [1, 32], strides = [1, 1]} : vector<104x32xf32> to vector<1x32xf32>
    %12 = vector.extract_strided_slice %5 {offsets = [6, 0], sizes = [1, 32], strides = [1, 1]} : vector<104x32xf32> to vector<1x32xf32>
    %13 = vector.extract_strided_slice %5 {offsets = [7, 0], sizes = [1, 32], strides = [1, 1]} : vector<104x32xf32> to vector<1x32xf32>
    %14 = vector.extract_strided_slice %5 {offsets = [8, 0], sizes = [32, 32], strides = [1, 1]} : vector<104x32xf32> to vector<32x32xf32>
    %15 = vector.extract_strided_slice %5 {offsets = [40, 0], sizes = [32, 32], strides = [1, 1]} : vector<104x32xf32> to vector<32x32xf32>
    %16 = vector.extract_strided_slice %5 {offsets = [72, 0], sizes = [32, 32], strides = [1, 1]} : vector<104x32xf32> to vector<32x32xf32>
    %cst = arith.constant dense<0.000000e+00> : vector<16xf32>
    %17 = vector.multi_reduction <add>, %4, %cst [1] : vector<16x32xf32> to vector<16xf32>
    %18 = vector.shape_cast %17 : vector<16xf32> to vector<16x1xf32>
    %cst_3 = arith.constant 3.200000e+01 : f32
    %19 = vector.broadcast %cst_3 : f32 to vector<16x1xf32>
    %20 = arith.divf %18, %19 : vector<16x1xf32>
    %21 = vector.broadcast %20 : vector<16x1xf32> to vector<16x32xf32>
    %22 = arith.subf %4, %21 : vector<16x32xf32>
    %23 = arith.mulf %22, %22 : vector<16x32xf32>
    %cst_4 = arith.constant dense<0.000000e+00> : vector<16xf32>
    %24 = vector.multi_reduction <add>, %23, %cst_4 [1] : vector<16x32xf32> to vector<16xf32>
    %25 = vector.shape_cast %24 : vector<16xf32> to vector<16x1xf32>
    %cst_5 = arith.constant 0.0322580636 : f32
    %26 = vector.broadcast %cst_5 : f32 to vector<16x1xf32>
    %27 = arith.mulf %25, %26 : vector<16x1xf32>
    %28 = vector.broadcast %20 : vector<16x1xf32> to vector<16x32xf32>
    %29 = arith.subf %4, %28 : vector<16x32xf32>
    %30 = math.rsqrt %27 : vector<16x1xf32>
    %31 = vector.broadcast %30 : vector<16x1xf32> to vector<16x32xf32>
    %32 = arith.mulf %29, %31 : vector<16x32xf32>
    %cst_6 = arith.constant 9.99999997E-7 : f32
    %33 = vector.broadcast %cst_6 : f32 to vector<16x32xf32>
    %34 = arith.addf %32, %33 : vector<16x32xf32>
    %35 = vector.broadcast %6 : vector<1x32xf32> to vector<16x32xf32>
    %36 = arith.mulf %35, %34 : vector<16x32xf32>
    %37 = vector.broadcast %7 : vector<1x32xf32> to vector<16x32xf32>
    %38 = arith.addf %36, %37 : vector<16x32xf32>
    %cst_7 = arith.constant dense<0.000000e+00> : vector<16x32xf32>
    %39 = tpu.matmul %38, %14, %cst_7 {dimension_numbers = #tpu.dot_dimension_numbers<[1], [0], [0], [1], [0, 0, 1, 1], [], []>} : vector<16x32xf32>, vector<32x32xf32>, vector<16x32xf32> -> vector<16x32xf32>
    %40 = vector.broadcast %10 : vector<1x32xf32> to vector<16x32xf32>
    %41 = arith.addf %39, %40 : vector<16x32xf32>
    %cst_8 = arith.constant dense<0.000000e+00> : vector<16x32xf32>
    %42 = tpu.matmul %38, %15, %cst_8 {dimension_numbers = #tpu.dot_dimension_numbers<[1], [0], [0], [1], [0, 0, 1, 1], [], []>} : vector<16x32xf32>, vector<32x32xf32>, vector<16x32xf32> -> vector<16x32xf32>
    %43 = vector.broadcast %11 : vector<1x32xf32> to vector<16x32xf32>
    %44 = arith.addf %42, %43 : vector<16x32xf32>
    %45 = vector.shape_cast %41 : vector<16x32xf32> to vector<2x8x32xf32>
    %46 = vector.shape_cast %44 : vector<16x32xf32> to vector<2x8x32xf32>
    %47 = vector.extract_strided_slice %45 {offsets = [0, 0, 0], sizes = [2, 8, 8], strides = [1, 1, 1]} : vector<2x8x32xf32> to vector<2x8x8xf32>
    %48 = vector.extract_strided_slice %46 {offsets = [0, 0, 0], sizes = [2, 8, 8], strides = [1, 1, 1]} : vector<2x8x32xf32> to vector<2x8x8xf32>
    "tpu.trace_start"() <{level = 10 : i32, message = "bqd,bkd->bqk"}> : () -> ()
    %cst_9 = arith.constant dense<0.000000e+00> : vector<2x8x8xf32>
    %49 = tpu.matmul %47, %48, %cst_9 {dimension_numbers = #tpu.dot_dimension_numbers<[2], [2], [1], [1], [0, 0, 0, 1, 1, 1], [0], [0]>} : vector<2x8x8xf32>, vector<2x8x8xf32>, vector<2x8x8xf32> -> vector<2x8x8xf32>
    "tpu.trace_stop"() : () -> ()
    %cst_10 = arith.constant dense<0xFF800000> : vector<2x8xf32>
    %50 = vector.multi_reduction <maximumf>, %49, %cst_10 [2] : vector<2x8x8xf32> to vector<2x8xf32>
    %51 = vector.shape_cast %50 : vector<2x8xf32> to vector<2x8x1xf32>
    %52 = vector.broadcast %51 : vector<2x8x1xf32> to vector<2x8x8xf32>
    %53 = arith.subf %49, %52 : vector<2x8x8xf32>
    %54 = math.exp %53 : vector<2x8x8xf32>
    %cst_11 = arith.constant dense<0.000000e+00> : vector<2x8xf32>
    %55 = vector.multi_reduction <add>, %54, %cst_11 [2] : vector<2x8x8xf32> to vector<2x8xf32>
    %56 = vector.shape_cast %55 : vector<2x8xf32> to vector<2x8x1xf32>
    %57 = vector.broadcast %56 : vector<2x8x1xf32> to vector<2x8x8xf32>
    %58 = arith.divf %54, %57 : vector<2x8x8xf32>
    "tpu.trace_start"() <{level = 10 : i32, message = "bqk,bkd->bqd"}> : () -> ()
    %cst_12 = arith.constant dense<0.000000e+00> : vector<2x8x8xf32>
    %59 = tpu.matmul %58, %48, %cst_12 {dimension_numbers = #tpu.dot_dimension_numbers<[2], [1], [1], [2], [0, 0, 0, 1, 1, 2], [0], [0]>} : vector<2x8x8xf32>, vector<2x8x8xf32>, vector<2x8x8xf32> -> vector<2x8x8xf32>
    "tpu.trace_stop"() : () -> ()
    %60 = vector.extract_strided_slice %45 {offsets = [0, 0, 8], sizes = [2, 8, 8], strides = [1, 1, 1]} : vector<2x8x32xf32> to vector<2x8x8xf32>
    %61 = vector.extract_strided_slice %46 {offsets = [0, 0, 8], sizes = [2, 8, 8], strides = [1, 1, 1]} : vector<2x8x32xf32> to vector<2x8x8xf32>
    "tpu.trace_start"() <{level = 10 : i32, message = "bqd,bkd->bqk"}> : () -> ()
    %cst_13 = arith.constant dense<0.000000e+00> : vector<2x8x8xf32>
    %62 = tpu.matmul %60, %61, %cst_13 {dimension_numbers = #tpu.dot_dimension_numbers<[2], [2], [1], [1], [0, 0, 0, 1, 1, 1], [0], [0]>} : vector<2x8x8xf32>, vector<2x8x8xf32>, vector<2x8x8xf32> -> vector<2x8x8xf32>
    "tpu.trace_stop"() : () -> ()
    %cst_14 = arith.constant dense<0xFF800000> : vector<2x8xf32>
    %63 = vector.multi_reduction <maximumf>, %62, %cst_14 [2] : vector<2x8x8xf32> to vector<2x8xf32>
    %64 = vector.shape_cast %63 : vector<2x8xf32> to vector<2x8x1xf32>
    %65 = vector.broadcast %64 : vector<2x8x1xf32> to vector<2x8x8xf32>
    %66 = arith.subf %62, %65 : vector<2x8x8xf32>
    %67 = math.exp %66 : vector<2x8x8xf32>
    %cst_15 = arith.constant dense<0.000000e+00> : vector<2x8xf32>
    %68 = vector.multi_reduction <add>, %67, %cst_15 [2] : vector<2x8x8xf32> to vector<2x8xf32>
    %69 = vector.shape_cast %68 : vector<2x8xf32> to vector<2x8x1xf32>
    %70 = vector.broadcast %69 : vector<2x8x1xf32> to vector<2x8x8xf32>
    %71 = arith.divf %67, %70 : vector<2x8x8xf32>
    "tpu.trace_start"() <{level = 10 : i32, message = "bqk,bkd->bqd"}> : () -> ()
    %cst_16 = arith.constant dense<0.000000e+00> : vector<2x8x8xf32>
    %72 = tpu.matmul %71, %61, %cst_16 {dimension_numbers = #tpu.dot_dimension_numbers<[2], [1], [1], [2], [0, 0, 0, 1, 1, 2], [0], [0]>} : vector<2x8x8xf32>, vector<2x8x8xf32>, vector<2x8x8xf32> -> vector<2x8x8xf32>
    "tpu.trace_stop"() : () -> ()
    %73 = vector.extract_strided_slice %45 {offsets = [0, 0, 16], sizes = [2, 8, 8], strides = [1, 1, 1]} : vector<2x8x32xf32> to vector<2x8x8xf32>
    %74 = vector.extract_strided_slice %46 {offsets = [0, 0, 16], sizes = [2, 8, 8], strides = [1, 1, 1]} : vector<2x8x32xf32> to vector<2x8x8xf32>
    "tpu.trace_start"() <{level = 10 : i32, message = "bqd,bkd->bqk"}> : () -> ()
    %cst_17 = arith.constant dense<0.000000e+00> : vector<2x8x8xf32>
    %75 = tpu.matmul %73, %74, %cst_17 {dimension_numbers = #tpu.dot_dimension_numbers<[2], [2], [1], [1], [0, 0, 0, 1, 1, 1], [0], [0]>} : vector<2x8x8xf32>, vector<2x8x8xf32>, vector<2x8x8xf32> -> vector<2x8x8xf32>
    "tpu.trace_stop"() : () -> ()
    %cst_18 = arith.constant dense<0xFF800000> : vector<2x8xf32>
    %76 = vector.multi_reduction <maximumf>, %75, %cst_18 [2] : vector<2x8x8xf32> to vector<2x8xf32>
    %77 = vector.shape_cast %76 : vector<2x8xf32> to vector<2x8x1xf32>
    %78 = vector.broadcast %77 : vector<2x8x1xf32> to vector<2x8x8xf32>
    %79 = arith.subf %75, %78 : vector<2x8x8xf32>
    %80 = math.exp %79 : vector<2x8x8xf32>
    %cst_19 = arith.constant dense<0.000000e+00> : vector<2x8xf32>
    %81 = vector.multi_reduction <add>, %80, %cst_19 [2] : vector<2x8x8xf32> to vector<2x8xf32>
    %82 = vector.shape_cast %81 : vector<2x8xf32> to vector<2x8x1xf32>
    %83 = vector.broadcast %82 : vector<2x8x1xf32> to vector<2x8x8xf32>
    %84 = arith.divf %80, %83 : vector<2x8x8xf32>
    "tpu.trace_start"() <{level = 10 : i32, message = "bqk,bkd->bqd"}> : () -> ()
    %cst_20 = arith.constant dense<0.000000e+00> : vector<2x8x8xf32>
    %85 = tpu.matmul %84, %74, %cst_20 {dimension_numbers = #tpu.dot_dimension_numbers<[2], [1], [1], [2], [0, 0, 0, 1, 1, 2], [0], [0]>} : vector<2x8x8xf32>, vector<2x8x8xf32>, vector<2x8x8xf32> -> vector<2x8x8xf32>
    "tpu.trace_stop"() : () -> ()
    %86 = vector.extract_strided_slice %45 {offsets = [0, 0, 24], sizes = [2, 8, 8], strides = [1, 1, 1]} : vector<2x8x32xf32> to vector<2x8x8xf32>
    %87 = vector.extract_strided_slice %46 {offsets = [0, 0, 24], sizes = [2, 8, 8], strides = [1, 1, 1]} : vector<2x8x32xf32> to vector<2x8x8xf32>
    "tpu.trace_start"() <{level = 10 : i32, message = "bqd,bkd->bqk"}> : () -> ()
    %cst_21 = arith.constant dense<0.000000e+00> : vector<2x8x8xf32>
    %88 = tpu.matmul %86, %87, %cst_21 {dimension_numbers = #tpu.dot_dimension_numbers<[2], [2], [1], [1], [0, 0, 0, 1, 1, 1], [0], [0]>} : vector<2x8x8xf32>, vector<2x8x8xf32>, vector<2x8x8xf32> -> vector<2x8x8xf32>
    "tpu.trace_stop"() : () -> ()
    %cst_22 = arith.constant dense<0xFF800000> : vector<2x8xf32>
    %89 = vector.multi_reduction <maximumf>, %88, %cst_22 [2] : vector<2x8x8xf32> to vector<2x8xf32>
    %90 = vector.shape_cast %89 : vector<2x8xf32> to vector<2x8x1xf32>
    %91 = vector.broadcast %90 : vector<2x8x1xf32> to vector<2x8x8xf32>
    %92 = arith.subf %88, %91 : vector<2x8x8xf32>
    %93 = math.exp %92 : vector<2x8x8xf32>
    %cst_23 = arith.constant dense<0.000000e+00> : vector<2x8xf32>
    %94 = vector.multi_reduction <add>, %93, %cst_23 [2] : vector<2x8x8xf32> to vector<2x8xf32>
    %95 = vector.shape_cast %94 : vector<2x8xf32> to vector<2x8x1xf32>
    %96 = vector.broadcast %95 : vector<2x8x1xf32> to vector<2x8x8xf32>
    %97 = arith.divf %93, %96 : vector<2x8x8xf32>
    "tpu.trace_start"() <{level = 10 : i32, message = "bqk,bkd->bqd"}> : () -> ()
    %cst_24 = arith.constant dense<0.000000e+00> : vector<2x8x8xf32>
    %98 = tpu.matmul %97, %87, %cst_24 {dimension_numbers = #tpu.dot_dimension_numbers<[2], [1], [1], [2], [0, 0, 0, 1, 1, 2], [0], [0]>} : vector<2x8x8xf32>, vector<2x8x8xf32>, vector<2x8x8xf32> -> vector<2x8x8xf32>
    "tpu.trace_stop"() : () -> ()
    %99 = tpu.concatenate %59, %72, %85, %98 in 2 : vector<2x8x8xf32>, vector<2x8x8xf32>, vector<2x8x8xf32>, vector<2x8x8xf32> -> vector<2x8x32xf32>
    %100 = vector.shape_cast %99 : vector<2x8x32xf32> to vector<16x32xf32>
    %cst_25 = arith.constant dense<0.000000e+00> : vector<16x32xf32>
    %101 = tpu.matmul %100, %16, %cst_25 {dimension_numbers = #tpu.dot_dimension_numbers<[1], [0], [0], [1], [0, 0, 1, 1], [], []>} : vector<16x32xf32>, vector<32x32xf32>, vector<16x32xf32> -> vector<16x32xf32>
    %102 = vector.broadcast %12 : vector<1x32xf32> to vector<16x32xf32>
    %103 = arith.addf %101, %102 : vector<16x32xf32>
    %cst_26 = arith.constant dense<0.000000e+00> : vector<16xf32>
    %104 = vector.multi_reduction <add>, %103, %cst_26 [1] : vector<16x32xf32> to vector<16xf32>
    %105 = vector.shape_cast %104 : vector<16xf32> to vector<16x1xf32>
    %cst_27 = arith.constant 3.200000e+01 : f32
    %106 = vector.broadcast %cst_27 : f32 to vector<16x1xf32>
    %107 = arith.divf %105, %106 : vector<16x1xf32>
    %108 = vector.broadcast %107 : vector<16x1xf32> to vector<16x32xf32>
    %109 = arith.subf %103, %108 : vector<16x32xf32>
    %110 = arith.mulf %109, %109 : vector<16x32xf32>
    %cst_28 = arith.constant dense<0.000000e+00> : vector<16xf32>
    %111 = vector.multi_reduction <add>, %110, %cst_28 [1] : vector<16x32xf32> to vector<16xf32>
    %112 = vector.shape_cast %111 : vector<16xf32> to vector<16x1xf32>
    %cst_29 = arith.constant 0.0322580636 : f32
    %113 = vector.broadcast %cst_29 : f32 to vector<16x1xf32>
    %114 = arith.mulf %112, %113 : vector<16x1xf32>
    %115 = vector.broadcast %107 : vector<16x1xf32> to vector<16x32xf32>
    %116 = arith.subf %103, %115 : vector<16x32xf32>
    %117 = math.rsqrt %114 : vector<16x1xf32>
    %118 = vector.broadcast %117 : vector<16x1xf32> to vector<16x32xf32>
    %119 = arith.mulf %116, %118 : vector<16x32xf32>
    %cst_30 = arith.constant 9.99999997E-7 : f32
    %120 = vector.broadcast %cst_30 : f32 to vector<16x32xf32>
    %121 = arith.addf %119, %120 : vector<16x32xf32>
    %122 = vector.broadcast %8 : vector<1x32xf32> to vector<16x32xf32>
    %123 = arith.mulf %122, %121 : vector<16x32xf32>
    %124 = vector.broadcast %9 : vector<1x32xf32> to vector<16x32xf32>
    %125 = arith.addf %123, %124 : vector<16x32xf32>
    %c0_i32_31 = arith.constant 0 : i32
    %126 = tpu.memref_slice %arg8[%c0_i32_31] : memref<2x!tpu.dma_semaphore, #tpu.memory_space<semaphore_mem>> -> memref<1x!tpu.dma_semaphore, #tpu.memory_space<semaphore_mem>>
    %127 = tpu.memref_squeeze %126 : memref<1x!tpu.dma_semaphore, #tpu.memory_space<semaphore_mem>> -> memref<!tpu.dma_semaphore, #tpu.memory_space<semaphore_mem>>
    tpu.wait_dma2 semaphore(%127 : memref<!tpu.dma_semaphore, #tpu.memory_space<semaphore_mem>>) src(%arg3 : memref<32x2048xbf16, #tpu.memory_space<any>>) dst(%arg6 : memref<32x2048xbf16, #tpu.memory_space<vmem>>)
    %c1_i32_32 = arith.constant 1 : i32
    %128 = tpu.memref_slice %arg8[%c1_i32_32] : memref<2x!tpu.dma_semaphore, #tpu.memory_space<semaphore_mem>> -> memref<1x!tpu.dma_semaphore, #tpu.memory_space<semaphore_mem>>
    %129 = tpu.memref_squeeze %128 : memref<1x!tpu.dma_semaphore, #tpu.memory_space<semaphore_mem>> -> memref<!tpu.dma_semaphore, #tpu.memory_space<semaphore_mem>>
    tpu.wait_dma2 semaphore(%129 : memref<!tpu.dma_semaphore, #tpu.memory_space<semaphore_mem>>) src(%arg4 : memref<2048x32xbf16, #tpu.memory_space<any>>) dst(%arg7 : memref<2048x32xbf16, #tpu.memory_space<vmem>>)
    %130 = arith.truncf %125 : vector<16x32xf32> to vector<16x32xbf16>
    %c0_33 = arith.constant 0 : index
    %c0_34 = arith.constant 0 : index
    %131 = vector.load %arg6[%c0_33, %c0_34] : memref<32x2048xbf16, #tpu.memory_space<vmem>>, vector<32x2048xbf16>
    %cst_35 = arith.constant dense<0.000000e+00> : vector<16x2048xf32>
    %132 = tpu.matmul %130, %131, %cst_35 {dimension_numbers = #tpu.dot_dimension_numbers<[1], [0], [0], [1], [0, 0, 1, 1], [], []>} : vector<16x32xbf16>, vector<32x2048xbf16>, vector<16x2048xf32> -> vector<16x2048xf32>
    %c0_36 = arith.constant 0 : index
    %c0_37 = arith.constant 0 : index
    %133 = vector.load %arg2[%c0_36, %c0_37] : memref<1x2048xf32, #tpu.memory_space<vmem>>, vector<1x2048xf32>
    %134 = vector.broadcast %133 : vector<1x2048xf32> to vector<16x2048xf32>
    %135 = arith.addf %132, %134 : vector<16x2048xf32>
    %cst_38 = arith.constant 0.000000e+00 : f32
    %136 = vector.broadcast %cst_38 : f32 to vector<16x2048xf32>
    %137 = arith.maximumf %135, %136 : vector<16x2048xf32>
    %138 = arith.truncf %137 : vector<16x2048xf32> to vector<16x2048xbf16>
    %c0_39 = arith.constant 0 : index
    %c0_40 = arith.constant 0 : index
    %139 = vector.load %arg7[%c0_39, %c0_40] : memref<2048x32xbf16, #tpu.memory_space<vmem>>, vector<2048x32xbf16>
    %cst_41 = arith.constant dense<0.000000e+00> : vector<16x32xf32>
    %140 = tpu.matmul %138, %139, %cst_41 {dimension_numbers = #tpu.dot_dimension_numbers<[1], [0], [0], [1], [0, 0, 1, 1], [], []>} : vector<16x2048xbf16>, vector<2048x32xbf16>, vector<16x32xf32> -> vector<16x32xf32>
    %141 = vector.broadcast %13 : vector<1x32xf32> to vector<16x32xf32>
    %142 = arith.addf %140, %141 : vector<16x32xf32>
    %c0_42 = arith.constant 0 : index
    %c0_43 = arith.constant 0 : index
    %143 = vector.load %arg5[%c0_42, %c0_43] : memref<16x32xf32, #tpu.memory_space<vmem>>, vector<16x32xf32>
    tpu.vector_store %arg5[%c0_42, %c0_43], %142 {strides = array<i32>} : memref<16x32xf32, #tpu.memory_space<vmem>>, vector<16x32xf32>,
    return
  }
}

</mosaic_0001>

<llo_original>
// kernel: encoder_layer.1
$region0: #{encoder_layer.1}
  #allocation0 [shape = 'u32[]', space=smem, size = 0x4, offset = 0x4, fixed_abs, tag = 'smem constant byte address 0x4 - core index']
  #allocation1 [shape = 'u32[144,128]{1,0:T(1,128)}', space=vmem, size = 0x12000, scoped, tag = 'internal scratch']
  #allocation2 [shape = 'bf16[32,2048]{1,0:T(16,128)(2,1)}', space=vmem, size = 0x20000, scoped, tag = 'scratch operand']
  #allocation3 [shape = 'bf16[2048,32]{1,0:T(16,128)(2,1)}', space=vmem, size = 0x80000, scoped, tag = 'scratch operand']
  #allocation4 [shape = 's32[2]{0}', space=sflag, size = 0x8, scoped, tag = 'scratch operand']
  #allocation7 [shape = 's32[]', space=sflag, size = 0x4, offset = 0, fixed_abs, tag = 'sflag constant byte address 0x0 - dummy sync flag']
  #allocation8 [shape = 's32[]', space=sflag, size = 0x4, offset = 0, fixed_abs, tag = 'sflag constant byte address 0x0 - dummy sync flag']
  %s0 = inlined_call_operand.vmem [shape: f32[16,32], index: 0, kind: input, shape index: {}]
  %s1 = inlined_call_operand.vmem [shape: f32[104,32], index: 1, kind: input, shape index: {}]
  %s2 = inlined_call_operand.vmem [shape: f32[1,2048], index: 2, kind: input, shape index: {}]
  %s3 = inlined_call_operand.vmem [shape: bf16[32,2048], index: 3, kind: input, shape index: {}]
  %s4 = inlined_call_operand.vmem [shape: bf16[2048,32], index: 4, kind: input, shape index: {}]
  %s5 = inlined_call_operand.hbm [shape: f32[16,32], index: 5, kind: output, shape index: {}]
  %s6 = sld [smem:[#allocation0]]
  $region93: #{encoder_layer.1} parent=0
    _
  %s8 = ssub.s32 1, %s6
  %s9 = scalar_select 0, %s8, %s6
  $region1: #{encoder_layer.1} parent=0
    #allocation5 [shape = 'u8[8192]{0}', space=vmem, size = 0x2000, scoped, tag = 'output window, operand 0, single buffered']
    #allocation6 [shape = 's32[1]{0}', space=sflag, size = 0x4, scoped, tag = 'scoped memory for encoder_layer.1']
    %10 = vsyncpa [#allocation6], 0
    // Predicated region
    $region2: #{encoder_layer.1} parent=1 // pred_check
      _
    $region3: #{encoder_layer.1} parent=1 // pred_check_branch
      %12 = sbr.rel (0) target = $region5
    $region4: #{encoder_layer.1} parent=1 // pred_region
      _
    $region5: #{encoder_layer.1} parent=1 // pred_fallthru
      _
    // Predicated region
    $region6: #{encoder_layer.1} parent=1 // pred_check
      _
    $region7: #{encoder_layer.1} parent=1 // pred_check_branch
      %14 = sbr.rel (0) target = $region9
    $region8: #{encoder_layer.1} parent=1 // pred_region
      _
    $region9: #{encoder_layer.1} parent=1 // pred_fallthru
      _
    // Predicated region
    $region10: #{encoder_layer.1} parent=1 // pred_check
      _
    $region11: #{encoder_layer.1} parent=1 // pred_check_branch
      %16 = sbr.rel (0) target = $region13
    $region12: #{encoder_layer.1} parent=1 // pred_region
      _
    $region13: #{encoder_layer.1} parent=1 // pred_fallthru
      _
    %p19 = scmp.lt.u32.totalorder 4, 8
    %p20 = pneg %p19
    // Predicated region
    $region14: #{encoder_layer.1} parent=1 // pred_check
      _
    $region15: #{encoder_layer.1} parent=1 // pred_check_branch
      %22 = sbr.rel (%p19) target = $region17
    $region16: #{encoder_layer.1} parent=1 // pred_region
      %s163 = sand.u32 4, 7
      %p164 = scmp.eq.s32.totalorder %s163, 0
      %p165 = pneg %p164
      // Predicated region
      $region29: #{encoder_layer.1} parent=16 // pred_check
        _
      $region30: #{encoder_layer.1} parent=16 // pred_check_branch
        %167 = sbr.rel (%p164) target = $region32
      $region31: #{encoder_layer.1} parent=16 // pred_region
        %s168 = sand.u32 4, 7
        %s169 = ssub.s32 4, %s168
        %s170 = scalar_lea.vmem %s3, %s169
        %s171 = ssub.s32 4, %s168
        %s172 = scalar_lea.vmem [#allocation2], %s171
        loop: start=0, step=1, limit=1
        $region33: #{encoder_layer.1} parent=31 // loop_pre_header
          _
        $region34: #{encoder_layer.1} parent=31 // loop_header
          %s174 = sphi 0, %s178
          %p175 = scmp.ge.s32.totalorder %s174, 1
          %s179 = sphi %s3, %s3
          %s180 = sphi [#allocation2], [#allocation2]
        $region35: #{encoder_layer.1} parent=31 // loop_header_branch
          %177 = sbr.rel (%p175) target = $region39
        $region36: #{encoder_layer.1} parent=31 // loop_body
          _
        $region37: #{encoder_layer.1} parent=31 // loop_footer
          %s178 = sadd.s32 1, %s174
        $region38: #{encoder_layer.1} parent=31 // loop_footer_branch
          %173 = sbr.rel target = $region34
        $region39: #{encoder_layer.1} parent=31 // loop_exit
          _
        %s181 = sshllo.u32 0, %s168
        loop: start=0, step=1, limit=1
        $region40: #{encoder_layer.1} parent=31 // loop_pre_header
          _
        $region41: #{encoder_layer.1} parent=31 // loop_header
          %s183 = sphi 0, %s187
          %p184 = scmp.ge.s32.totalorder %s183, 1
          %s188 = sphi %s170, %s170
          %s189 = sphi %s172, %s172
        $region42: #{encoder_layer.1} parent=31 // loop_header_branch
          %186 = sbr.rel (%p184) target = $region46
        $region43: #{encoder_layer.1} parent=31 // loop_body
          %v190 = vld [vmem:[%s188] sm:%s181]
          %191 = vst [vmem:[%s189] sm:%s181] %v190
          %v192 = vld [vmem:[%s188 + $0x40] sm:%s181]
          %193 = vst [vmem:[%s189 + $0x4] sm:%s181] %v192
          %v194 = vld [vmem:[%s188 + $0x4] sm:%s181]
          %195 = vst [vmem:[%s189 + $0x8] sm:%s181] %v194
          %v196 = vld [vmem:[%s188 + $0x44] sm:%s181]
          %197 = vst [vmem:[%s189 + $0xc] sm:%s181] %v196
          %v198 = vld [vmem:[%s188 + $0x8] sm:%s181]
          %199 = vst [vmem:[%s189 + $0x10] sm:%s181] %v198
          %v200 = vld [vmem:[%s188 + $0x48] sm:%s181]
          %201 = vst [vmem:[%s189 + $0x14] sm:%s181] %v200
          %v202 = vld [vmem:[%s188 + $0xc] sm:%s181]
          %203 = vst [vmem:[%s189 + $0x18] sm:%s181] %v202
          %v204 = vld [vmem:[%s188 + $0x4c] sm:%s181]
          %205 = vst [vmem:[%s189 + $0x1c] sm:%s181] %v204
          %v206 = vld [vmem:[%s188 + $0x10] sm:%s181]
          %207 = vst [vmem:[%s189 + $0x20] sm:%s181] %v206
          %v208 = vld [vmem:[%s188 + $0x50] sm:%s181]
          %209 = vst [vmem:[%s189 + $0x24] sm:%s181] %v208
          %v210 = vld [vmem:[%s188 + $0x14] sm:%s181]
          %211 = vst [vmem:[%s189 + $0x28] sm:%s181] %v210
          %v212 = vld [vmem:[%s188 + $0x54] sm:%s181]
          %213 = vst [vmem:[%s189 + $0x2c] sm:%s181] %v212
          %v214 = vld [vmem:[%s188 + $0x18] sm:%s181]
          %215 = vst [vmem:[%s189 + $0x30] sm:%s181] %v214
          %v216 = vld [vmem:[%s188 + $0x58] sm:%s181]
          %217 = vst [vmem:[%s189 + $0x34] sm:%s181] %v216
          %v218 = vld [vmem:[%s188 + $0x1c] sm:%s181]
          %219 = vst [vmem:[%s189 + $0x38] sm:%s181] %v218
          %v220 = vld [vmem:[%s188 + $0x5c] sm:%s181]
          %221 = vst [vmem:[%s189 + $0x3c] sm:%s181] %v220
          %v222 = vld [vmem:[%s188 + $0x20] sm:%s181]
          %223 = vst [vmem:[%s189 + $0x40] sm:%s181] %v222
          %v224 = vld [vmem:[%s188 + $0x60] sm:%s181]
          %225 = vst [vmem:[%s189 + $0x44] sm:%s181] %v224
          %v226 = vld [vmem:[%s188 + $0x24] sm:%s181]
          %227 = vst [vmem:[%s189 + $0x48] sm:%s181] %v226
          %v228 = vld [vmem:[%s188 + $0x64] sm:%s181]
          %229 = vst [vmem:[%s189 + $0x4c] sm:%s181] %v228
          %v230 = vld [vmem:[%s188 + $0x28] sm:%s181]
          %231 = vst [vmem:[%s189 + $0x50] sm:%s181] %v230
          %v232 = vld [vmem:[%s188 + $0x68] sm:%s181]
          %233 = vst [vmem:[%s189 + $0x54] sm:%s181] %v232
          %v234 = vld [vmem:[%s188 + $0x2c] sm:%s181]
          %235 = vst [vmem:[%s189 + $0x58] sm:%s181] %v234
          %v236 = vld [vmem:[%s188 + $0x6c] sm:%s181]
          %237 = vst [vmem:[%s189 + $0x5c] sm:%s181] %v236
          %v238 = vld [vmem:[%s188 + $0x30] sm:%s181]
          %239 = vst [vmem:[%s189 + $0x60] sm:%s181] %v238
          %v240 = vld [vmem:[%s188 + $0x70] sm:%s181]
          %241 = vst [vmem:[%s189 + $0x64] sm:%s181] %v240
          %v242 = vld [vmem:[%s188 + $0x34] sm:%s181]
          %243 = vst [vmem:[%s189 + $0x68] sm:%s181] %v242
          %v244 = vld [vmem:[%s188 + $0x74] sm:%s181]
          %245 = vst [vmem:[%s189 + $0x6c] sm:%s181] %v244
          %v246 = vld [vmem:[%s188 + $0x38] sm:%s181]
          %247 = vst [vmem:[%s189 + $0x70] sm:%s181] %v246
          %v248 = vld [vmem:[%s188 + $0x78] sm:%s181]
          %249 = vst [vmem:[%s189 + $0x74] sm:%s181] %v248
          %v250 = vld [vmem:[%s188 + $0x3c] sm:%s181]
          %251 = vst [vmem:[%s189 + $0x78] sm:%s181] %v250
          %v252 = vld [vmem:[%s188 + $0x7c] sm:%s181]
          %253 = vst [vmem:[%s189 + $0x7c] sm:%s181] %v252
          %v254 = vld [vmem:[%s188 + $0x80] sm:%s181]
          %255 = vst [vmem:[%s189 + $0x80] sm:%s181] %v254
          %v256 = vld [vmem:[%s188 + $0xc0] sm:%s181]
          %257 = vst [vmem:[%s189 + $0x84] sm:%s181] %v256
          %v258 = vld [vmem:[%s188 + $0x84] sm:%s181]
          %259 = vst [vmem:[%s189 + $0x88] sm:%s181] %v258
          %v260 = vld [vmem:[%s188 + $0xc4] sm:%s181]
          %261 = vst [vmem:[%s189 + $0x8c] sm:%s181] %v260
          %v262 = vld [vmem:[%s188 + $0x88] sm:%s181]
          %263 = vst [vmem:[%s189 + $0x90] sm:%s181] %v262
          %v264 = vld [vmem:[%s188 + $0xc8] sm:%s181]
          %265 = vst [vmem:[%s189 + $0x94] sm:%s181] %v264
          %v266 = vld [vmem:[%s188 + $0x8c] sm:%s181]
          %267 = vst [vmem:[%s189 + $0x98] sm:%s181] %v266
          %v268 = vld [vmem:[%s188 + $0xcc] sm:%s181]
          %269 = vst [vmem:[%s189 + $0x9c] sm:%s181] %v268
          %v270 = vld [vmem:[%s188 + $0x90] sm:%s181]
          %271 = vst [vmem:[%s189 + $0xa0] sm:%s181] %v270
          %v272 = vld [vmem:[%s188 + $0xd0] sm:%s181]
          %273 = vst [vmem:[%s189 + $0xa4] sm:%s181] %v272
          %v274 = vld [vmem:[%s188 + $0x94] sm:%s181]
          %275 = vst [vmem:[%s189 + $0xa8] sm:%s181] %v274
          %v276 = vld [vmem:[%s188 + $0xd4] sm:%s181]
          %277 = vst [vmem:[%s189 + $0xac] sm:%s181] %v276
          %v278 = vld [vmem:[%s188 + $0x98] sm:%s181]
          %279 = vst [vmem:[%s189 + $0xb0] sm:%s181] %v278
          %v280 = vld [vmem:[%s188 + $0xd8] sm:%s181]
          %281 = vst [vmem:[%s189 + $0xb4] sm:%s181] %v280
          %v282 = vld [vmem:[%s188 + $0x9c] sm:%s181]
          %283 = vst [vmem:[%s189 + $0xb8] sm:%s181] %v282
          %v284 = vld [vmem:[%s188 + $0xdc] sm:%s181]
          %285 = vst [vmem:[%s189 + $0xbc] sm:%s181] %v284
          %v286 = vld [vmem:[%s188 + $0xa0] sm:%s181]
          %287 = vst [vmem:[%s189 + $0xc0] sm:%s181] %v286
          %v288 = vld [vmem:[%s188 + $0xe0] sm:%s181]
          %289 = vst [vmem:[%s189 + $0xc4] sm:%s181] %v288
          %v290 = vld [vmem:[%s188 + $0xa4] sm:%s181]
          %291 = vst [vmem:[%s189 + $0xc8] sm:%s181] %v290
          %v292 = vld [vmem:[%s188 + $0xe4] sm:%s181]
          %293 = vst [vmem:[%s189 + $0xcc] sm:%s181] %v292
          %v294 = vld [vmem:[%s188 + $0xa8] sm:%s181]
          %295 = vst [vmem:[%s189 + $0xd0] sm:%s181] %v294
          %v296 = vld [vmem:[%s188 + $0xe8] sm:%s181]
          %297 = vst [vmem:[%s189 + $0xd4] sm:%s181] %v296
          %v298 = vld [vmem:[%s188 + $0xac] sm:%s181]
          %299 = vst [vmem:[%s189 + $0xd8] sm:%s181] %v298
          %v300 = vld [vmem:[%s188 + $0xec] sm:%s181]
          %301 = vst [vmem:[%s189 + $0xdc] sm:%s181] %v300
          %v302 = vld [vmem:[%s188 + $0xb0] sm:%s181]
          %303 = vst [vmem:[%s189 + $0xe0] sm:%s181] %v302
          %v304 = vld [vmem:[%s188 + $0xf0] sm:%s181]
          %305 = vst [vmem:[%s189 + $0xe4] sm:%s181] %v304
          %v306 = vld [vmem:[%s188 + $0xb4] sm:%s181]
          %307 = vst [vmem:[%s189 + $0xe8] sm:%s181] %v306
          %v308 = vld [vmem:[%s188 + $0xf4] sm:%s181]
          %309 = vst [vmem:[%s189 + $0xec] sm:%s181] %v308
          %v310 = vld [vmem:[%s188 + $0xb8] sm:%s181]
          %311 = vst [vmem:[%s189 + $0xf0] sm:%s181] %v310
          %v312 = vld [vmem:[%s188 + $0xf8] sm:%s181]
          %313 = vst [vmem:[%s189 + $0xf4] sm:%s181] %v312
          %v314 = vld [vmem:[%s188 + $0xbc] sm:%s181]
          %315 = vst [vmem:[%s189 + $0xf8] sm:%s181] %v314
          %v316 = vld [vmem:[%s188 + $0xfc] sm:%s181]
          %317 = vst [vmem:[%s189 + $0xfc] sm:%s181] %v316
        $region44: #{encoder_layer.1} parent=31 // loop_footer
          %s187 = sadd.s32 1, %s183
        $region45: #{encoder_layer.1} parent=31 // loop_footer_branch
          %182 = sbr.rel target = $region41
        $region46: #{encoder_layer.1} parent=31 // loop_exit
          _
      $region32: #{encoder_layer.1} parent=16 // pred_fallthru
        _
    $region17: #{encoder_layer.1} parent=1 // pred_fallthru
      _
    // Predicated region
    $region18: #{encoder_layer.1} parent=1 // pred_check
      %p23 = pneg %p19
    $region19: #{encoder_layer.1} parent=1 // pred_check_branch
      %25 = sbr.rel (%p23) target = $region21
    $region20: #{encoder_layer.1} parent=1 // pred_region
      %s26 = sshllo.u32 0, 4
      loop: start=0, step=1, limit=1
      $region22: #{encoder_layer.1} parent=20 // loop_pre_header
        _
      $region23: #{encoder_layer.1} parent=20 // loop_header
        %s28 = sphi 0, %s32
        %p29 = scmp.ge.s32.totalorder %s28, 1
        %s33 = sphi %s3, %s3
        %s34 = sphi [#allocation2], [#allocation2]
      $region24: #{encoder_layer.1} parent=20 // loop_header_branch
        %31 = sbr.rel (%p29) target = $region28
      $region25: #{encoder_layer.1} parent=20 // loop_body
        %v35 = vld [vmem:[%s33] sm:%s26]
        %36 = vst [vmem:[%s34] sm:%s26] %v35
        %v37 = vld [vmem:[%s33 + $0x40] sm:%s26]
        %38 = vst [vmem:[%s34 + $0x4] sm:%s26] %v37
        %v39 = vld [vmem:[%s33 + $0x4] sm:%s26]
        %40 = vst [vmem:[%s34 + $0x8] sm:%s26] %v39
        %v41 = vld [vmem:[%s33 + $0x44] sm:%s26]
        %42 = vst [vmem:[%s34 + $0xc] sm:%s26] %v41
        %v43 = vld [vmem:[%s33 + $0x8] sm:%s26]
        %44 = vst [vmem:[%s34 + $0x10] sm:%s26] %v43
        %v45 = vld [vmem:[%s33 + $0x48] sm:%s26]
        %46 = vst [vmem:[%s34 + $0x14] sm:%s26] %v45
        %v47 = vld [vmem:[%s33 + $0xc] sm:%s26]
        %48 = vst [vmem:[%s34 + $0x18] sm:%s26] %v47
        %v49 = vld [vmem:[%s33 + $0x4c] sm:%s26]
        %50 = vst [vmem:[%s34 + $0x1c] sm:%s26] %v49
        %v51 = vld [vmem:[%s33 + $0x10] sm:%s26]
        %52 = vst [vmem:[%s34 + $0x20] sm:%s26] %v51
        %v53 = vld [vmem:[%s33 + $0x50] sm:%s26]
        %54 = vst [vmem:[%s34 + $0x24] sm:%s26] %v53
        %v55 = vld [vmem:[%s33 + $0x14] sm:%s26]
        %56 = vst [vmem:[%s34 + $0x28] sm:%s26] %v55
        %v57 = vld [vmem:[%s33 + $0x54] sm:%s26]
        %58 = vst [vmem:[%s34 + $0x2c] sm:%s26] %v57
        %v59 = vld [vmem:[%s33 + $0x18] sm:%s26]
        %60 = vst [vmem:[%s34 + $0x30] sm:%s26] %v59
        %v61 = vld [vmem:[%s33 + $0x58] sm:%s26]
        %62 = vst [vmem:[%s34 + $0x34] sm:%s26] %v61
        %v63 = vld [vmem:[%s33 + $0x1c] sm:%s26]
        %64 = vst [vmem:[%s34 + $0x38] sm:%s26] %v63
        %v65 = vld [vmem:[%s33 + $0x5c] sm:%s26]
        %66 = vst [vmem:[%s34 + $0x3c] sm:%s26] %v65
        %v67 = vld [vmem:[%s33 + $0x20] sm:%s26]
        %68 = vst [vmem:[%s34 + $0x40] sm:%s26] %v67
        %v69 = vld [vmem:[%s33 + $0x60] sm:%s26]
        %70 = vst [vmem:[%s34 + $0x44] sm:%s26] %v69
        %v71 = vld [vmem:[%s33 + $0x24] sm:%s26]
        %72 = vst [vmem:[%s34 + $0x48] sm:%s26] %v71
        %v73 = vld [vmem:[%s33 + $0x64] sm:%s26]
        %74 = vst [vmem:[%s34 + $0x4c] sm:%s26] %v73
        %v75 = vld [vmem:[%s33 + $0x28] sm:%s26]
        %76 = vst [vmem:[%s34 + $0x50] sm:%s26] %v75
        %v77 = vld [vmem:[%s33 + $0x68] sm:%s26]
        %78 = vst [vmem:[%s34 + $0x54] sm:%s26] %v77
        %v79 = vld [vmem:[%s33 + $0x2c] sm:%s26]
        %80 = vst [vmem:[%s34 + $0x58] sm:%s26] %v79
        %v81 = vld [vmem:[%s33 + $0x6c] sm:%s26]
        %82 = vst [vmem:[%s34 + $0x5c] sm:%s26] %v81
        %v83 = vld [vmem:[%s33 + $0x30] sm:%s26]
        %84 = vst [vmem:[%s34 + $0x60] sm:%s26] %v83
        %v85 = vld [vmem:[%s33 + $0x70] sm:%s26]
        %86 = vst [vmem:[%s34 + $0x64] sm:%s26] %v85
        %v87 = vld [vmem:[%s33 + $0x34] sm:%s26]
        %88 = vst [vmem:[%s34 + $0x68] sm:%s26] %v87
        %v89 = vld [vmem:[%s33 + $0x74] sm:%s26]
        %90 = vst [vmem:[%s34 + $0x6c] sm:%s26] %v89
        %v91 = vld [vmem:[%s33 + $0x38] sm:%s26]
        %92 = vst [vmem:[%s34 + $0x70] sm:%s26] %v91
        %v93 = vld [vmem:[%s33 + $0x78] sm:%s26]
        %94 = vst [vmem:[%s34 + $0x74] sm:%s26] %v93
        %v95 = vld [vmem:[%s33 + $0x3c] sm:%s26]
        %96 = vst [vmem:[%s34 + $0x78] sm:%s26] %v95
        %v97 = vld [vmem:[%s33 + $0x7c] sm:%s26]
        %98 = vst [vmem:[%s34 + $0x7c] sm:%s26] %v97
        %v99 = vld [vmem:[%s33 + $0x80] sm:%s26]
        %100 = vst [vmem:[%s34 + $0x80] sm:%s26] %v99
        %v101 = vld [vmem:[%s33 + $0xc0] sm:%s26]
        %102 = vst [vmem:[%s34 + $0x84] sm:%s26] %v101
        %v103 = vld [vmem:[%s33 + $0x84] sm:%s26]
        %104 = vst [vmem:[%s34 + $0x88] sm:%s26] %v103
        %v105 = vld [vmem:[%s33 + $0xc4] sm:%s26]
        %106 = vst [vmem:[%s34 + $0x8c] sm:%s26] %v105
        %v107 = vld [vmem:[%s33 + $0x88] sm:%s26]
        %108 = vst [vmem:[%s34 + $0x90] sm:%s26] %v107
        %v109 = vld [vmem:[%s33 + $0xc8] sm:%s26]
        %110 = vst [vmem:[%s34 + $0x94] sm:%s26] %v109
        %v111 = vld [vmem:[%s33 + $0x8c] sm:%s26]
        %112 = vst [vmem:[%s34 + $0x98] sm:%s26] %v111
        %v113 = vld [vmem:[%s33 + $0xcc] sm:%s26]
        %114 = vst [vmem:[%s34 + $0x9c] sm:%s26] %v113
        %v115 = vld [vmem:[%s33 + $0x90] sm:%s26]
        %116 = vst [vmem:[%s34 + $0xa0] sm:%s26] %v115
        %v117 = vld [vmem:[%s33 + $0xd0] sm:%s26]
        %118 = vst [vmem:[%s34 + $0xa4] sm:%s26] %v117
        %v119 = vld [vmem:[%s33 + $0x94] sm:%s26]
        %120 = vst [vmem:[%s34 + $0xa8] sm:%s26] %v119
        %v121 = vld [vmem:[%s33 + $0xd4] sm:%s26]
        %122 = vst [vmem:[%s34 + $0xac] sm:%s26] %v121
        %v123 = vld [vmem:[%s33 + $0x98] sm:%s26]
        %124 = vst [vmem:[%s34 + $0xb0] sm:%s26] %v123
        %v125 = vld [vmem:[%s33 + $0xd8] sm:%s26]
        %126 = vst [vmem:[%s34 + $0xb4] sm:%s26] %v125
        %v127 = vld [vmem:[%s33 + $0x9c] sm:%s26]
        %128 = vst [vmem:[%s34 + $0xb8] sm:%s26] %v127
        %v129 = vld [vmem:[%s33 + $0xdc] sm:%s26]
        %130 = vst [vmem:[%s34 + $0xbc] sm:%s26] %v129
        %v131 = vld [vmem:[%s33 + $0xa0] sm:%s26]
        %132 = vst [vmem:[%s34 + $0xc0] sm:%s26] %v131
        %v133 = vld [vmem:[%s33 + $0xe0] sm:%s26]
        %134 = vst [vmem:[%s34 + $0xc4] sm:%s26] %v133
        %v135 = vld [vmem:[%s33 + $0xa4] sm:%s26]
        %136 = vst [vmem:[%s34 + $0xc8] sm:%s26] %v135
        %v137 = vld [vmem:[%s33 + $0xe4] sm:%s26]
        %138 = vst [vmem:[%s34 + $0xcc] sm:%s26] %v137
        %v139 = vld [vmem:[%s33 + $0xa8] sm:%s26]
        %140 = vst [vmem:[%s34 + $0xd0] sm:%s26] %v139
        %v141 = vld [vmem:[%s33 + $0xe8] sm:%s26]
        %142 = vst [vmem:[%s34 + $0xd4] sm:%s26] %v141
        %v143 = vld [vmem:[%s33 + $0xac] sm:%s26]
        %144 = vst [vmem:[%s34 + $0xd8] sm:%s26] %v143
        %v145 = vld [vmem:[%s33 + $0xec] sm:%s26]
        %146 = vst [vmem:[%s34 + $0xdc] sm:%s26] %v145
        %v147 = vld [vmem:[%s33 + $0xb0] sm:%s26]
        %148 = vst [vmem:[%s34 + $0xe0] sm:%s26] %v147
        %v149 = vld [vmem:[%s33 + $0xf0] sm:%s26]
        %150 = vst [vmem:[%s34 + $0xe4] sm:%s26] %v149
        %v151 = vld [vmem:[%s33 + $0xb4] sm:%s26]
        %152 = vst [vmem:[%s34 + $0xe8] sm:%s26] %v151
        %v153 = vld [vmem:[%s33 + $0xf4] sm:%s26]
        %154 = vst [vmem:[%s34 + $0xec] sm:%s26] %v153
        %v155 = vld [vmem:[%s33 + $0xb8] sm:%s26]
        %156 = vst [vmem:[%s34 + $0xf0] sm:%s26] %v155
        %v157 = vld [vmem:[%s33 + $0xf8] sm:%s26]
        %158 = vst [vmem:[%s34 + $0xf4] sm:%s26] %v157
        %v159 = vld [vmem:[%s33 + $0xbc] sm:%s26]
        %160 = vst [vmem:[%s34 + $0xf8] sm:%s26] %v159
        %v161 = vld [vmem:[%s33 + $0xfc] sm:%s26]
        %162 = vst [vmem:[%s34 + $0xfc] sm:%s26] %v161
      $region26: #{encoder_layer.1} parent=20 // loop_footer
        %s32 = sadd.s32 1, %s28
      $region27: #{encoder_layer.1} parent=20 // loop_footer_branch
        %27 = sbr.rel target = $region23
      $region28: #{encoder_layer.1} parent=20 // loop_exit
        _
    $region21: #{encoder_layer.1} parent=1 // pred_fallthru
      _
    // Predicated region
    $region47: #{encoder_layer.1} parent=1 // pred_check
      _
    $region48: #{encoder_layer.1} parent=1 // pred_check_branch
      %320 = sbr.rel (0) target = $region50
    $region49: #{encoder_layer.1} parent=1 // pred_region
      %321 = vsyncadd [#allocation4], 4096
    $region50: #{encoder_layer.1} parent=1 // pred_fallthru
      _
    %s322 = scalar_lea.sflag [#allocation4], 1
    %p324 = scmp.lt.u32.totalorder 1024, 8
    %p325 = pneg %p324
    // Predicated region
    $region51: #{encoder_layer.1} parent=1 // pred_check
      _
    $region52: #{encoder_layer.1} parent=1 // pred_check_branch
      %327 = sbr.rel (%p324) target = $region54
    $region53: #{encoder_layer.1} parent=1 // pred_region
      %s342 = sand.u32 1024, 7
      %p343 = scmp.eq.s32.totalorder %s342, 0
      // Predicated region
      $region66: #{encoder_layer.1} parent=53 // pred_check
        %p344 = pneg %p343
      $region67: #{encoder_layer.1} parent=53 // pred_check_branch
        %346 = sbr.rel (%p344) target = $region69
      $region68: #{encoder_layer.1} parent=53 // pred_region
        loop: start=0, step=1, limit=1
        $region70: #{encoder_layer.1} parent=68 // loop_pre_header
          _
        $region71: #{encoder_layer.1} parent=68 // loop_header
          %s348 = sphi 0, %s352
          %p349 = scmp.ge.s32.totalorder %s348, 1
          %s353 = sphi %s4, %s4
          %s354 = sphi [#allocation3], [#allocation3]
        $region72: #{encoder_layer.1} parent=68 // loop_header_branch
          %351 = sbr.rel (%p349) target = $region76
        $region73: #{encoder_layer.1} parent=68 // loop_body
          %v355 = vld [vmem:[%s353] sm:$0xff]
          %356 = vst [vmem:[%s354] sm:$0xff] %v355
          %v357 = vld [vmem:[%s353 + $0x8] sm:$0xff]
          %358 = vst [vmem:[%s354 + $0x8] sm:$0xff] %v357
          %v359 = vld [vmem:[%s353 + $0x10] sm:$0xff]
          %360 = vst [vmem:[%s354 + $0x10] sm:$0xff] %v359
          %v361 = vld [vmem:[%s353 + $0x18] sm:$0xff]
          %362 = vst [vmem:[%s354 + $0x18] sm:$0xff] %v361
          %v363 = vld [vmem:[%s353 + $0x20] sm:$0xff]
          %364 = vst [vmem:[%s354 + $0x20] sm:$0xff] %v363
          %v365 = vld [vmem:[%s353 + $0x28] sm:$0xff]
          %366 = vst [vmem:[%s354 + $0x28] sm:$0xff] %v365
          %v367 = vld [vmem:[%s353 + $0x30] sm:$0xff]
          %368 = vst [vmem:[%s354 + $0x30] sm:$0xff] %v367
          %v369 = vld [vmem:[%s353 + $0x38] sm:$0xff]
          %370 = vst [vmem:[%s354 + $0x38] sm:$0xff] %v369
          %v371 = vld [vmem:[%s353 + $0x40] sm:$0xff]
          %372 = vst [vmem:[%s354 + $0x40] sm:$0xff] %v371
          %v373 = vld [vmem:[%s353 + $0x48] sm:$0xff]
          %374 = vst [vmem:[%s354 + $0x48] sm:$0xff] %v373
          %v375 = vld [vmem:[%s353 + $0x50] sm:$0xff]
          %376 = vst [vmem:[%s354 + $0x50] sm:$0xff] %v375
          %v377 = vld [vmem:[%s353 + $0x58] sm:$0xff]
          %378 = vst [vmem:[%s354 + $0x58] sm:$0xff] %v377
          %v379 = vld [vmem:[%s353 + $0x60] sm:$0xff]
          %380 = vst [vmem:[%s354 + $0x60] sm:$0xff] %v379
          %v381 = vld [vmem:[%s353 + $0x68] sm:$0xff]
          %382 = vst [vmem:[%s354 + $0x68] sm:$0xff] %v381
          %v383 = vld [vmem:[%s353 + $0x70] sm:$0xff]
          %384 = vst [vmem:[%s354 + $0x70] sm:$0xff] %v383
          %v385 = vld [vmem:[%s353 + $0x78] sm:$0xff]
          %386 = vst [vmem:[%s354 + $0x78] sm:$0xff] %v385
          %v387 = vld [vmem:[%s353 + $0x80] sm:$0xff]
          %388 = vst [vmem:[%s354 + $0x80] sm:$0xff] %v387
          %v389 = vld [vmem:[%s353 + $0x88] sm:$0xff]
          %390 = vst [vmem:[%s354 + $0x88] sm:$0xff] %v389
          %v391 = vld [vmem:[%s353 + $0x90] sm:$0xff]
          %392 = vst [vmem:[%s354 + $0x90] sm:$0xff] %v391
          %v393 = vld [vmem:[%s353 + $0x98] sm:$0xff]
          %394 = vst [vmem:[%s354 + $0x98] sm:$0xff] %v393
          %v395 = vld [vmem:[%s353 + $0xa0] sm:$0xff]
          %396 = vst [vmem:[%s354 + $0xa0] sm:$0xff] %v395
          %v397 = vld [vmem:[%s353 + $0xa8] sm:$0xff]
          %398 = vst [vmem:[%s354 + $0xa8] sm:$0xff] %v397
          %v399 = vld [vmem:[%s353 + $0xb0] sm:$0xff]
          %400 = vst [vmem:[%s354 + $0xb0] sm:$0xff] %v399
          %v401 = vld [vmem:[%s353 + $0xb8] sm:$0xff]
          %402 = vst [vmem:[%s354 + $0xb8] sm:$0xff] %v401
          %v403 = vld [vmem:[%s353 + $0xc0] sm:$0xff]
          %404 = vst [vmem:[%s354 + $0xc0] sm:$0xff] %v403
          %v405 = vld [vmem:[%s353 + $0xc8] sm:$0xff]
          %406 = vst [vmem:[%s354 + $0xc8] sm:$0xff] %v405
          %v407 = vld [vmem:[%s353 + $0xd0] sm:$0xff]
          %408 = vst [vmem:[%s354 + $0xd0] sm:$0xff] %v407
          %v409 = vld [vmem:[%s353 + $0xd8] sm:$0xff]
          %410 = vst [vmem:[%s354 + $0xd8] sm:$0xff] %v409
          %v411 = vld [vmem:[%s353 + $0xe0] sm:$0xff]
          %412 = vst [vmem:[%s354 + $0xe0] sm:$0xff] %v411
          %v413 = vld [vmem:[%s353 + $0xe8] sm:$0xff]
          %414 = vst [vmem:[%s354 + $0xe8] sm:$0xff] %v413
          %v415 = vld [vmem:[%s353 + $0xf0] sm:$0xff]
          %416 = vst [vmem:[%s354 + $0xf0] sm:$0xff] %v415
          %v417 = vld [vmem:[%s353 + $0xf8] sm:$0xff]
          %418 = vst [vmem:[%s354 + $0xf8] sm:$0xff] %v417
          %v419 = vld [vmem:[%s353 + $0x100] sm:$0xff]
          %420 = vst [vmem:[%s354 + $0x100] sm:$0xff] %v419
          %v421 = vld [vmem:[%s353 + $0x108] sm:$0xff]
          %422 = vst [vmem:[%s354 + $0x108] sm:$0xff] %v421
          %v423 = vld [vmem:[%s353 + $0x110] sm:$0xff]
          %424 = vst [vmem:[%s354 + $0x110] sm:$0xff] %v423
          %v425 = vld [vmem:[%s353 + $0x118] sm:$0xff]
          %426 = vst [vmem:[%s354 + $0x118] sm:$0xff] %v425
          %v427 = vld [vmem:[%s353 + $0x120] sm:$0xff]
          %428 = vst [vmem:[%s354 + $0x120] sm:$0xff] %v427
          %v429 = vld [vmem:[%s353 + $0x128] sm:$0xff]
          %430 = vst [vmem:[%s354 + $0x128] sm:$0xff] %v429
          %v431 = vld [vmem:[%s353 + $0x130] sm:$0xff]
          %432 = vst [vmem:[%s354 + $0x130] sm:$0xff] %v431
          %v433 = vld [vmem:[%s353 + $0x138] sm:$0xff]
          %434 = vst [vmem:[%s354 + $0x138] sm:$0xff] %v433
          %v435 = vld [vmem:[%s353 + $0x140] sm:$0xff]
          %436 = vst [vmem:[%s354 + $0x140] sm:$0xff] %v435
          %v437 = vld [vmem:[%s353 + $0x148] sm:$0xff]
          %438 = vst [vmem:[%s354 + $0x148] sm:$0xff] %v437
          %v439 = vld [vmem:[%s353 + $0x150] sm:$0xff]
          %440 = vst [vmem:[%s354 + $0x150] sm:$0xff] %v439
          %v441 = vld [vmem:[%s353 + $0x158] sm:$0xff]
          %442 = vst [vmem:[%s354 + $0x158] sm:$0xff] %v441
          %v443 = vld [vmem:[%s353 + $0x160] sm:$0xff]
          %444 = vst [vmem:[%s354 + $0x160] sm:$0xff] %v443
          %v445 = vld [vmem:[%s353 + $0x168] sm:$0xff]
          %446 = vst [vmem:[%s354 + $0x168] sm:$0xff] %v445
          %v447 = vld [vmem:[%s353 + $0x170] sm:$0xff]
          %448 = vst [vmem:[%s354 + $0x170] sm:$0xff] %v447
          %v449 = vld [vmem:[%s353 + $0x178] sm:$0xff]
          %450 = vst [vmem:[%s354 + $0x178] sm:$0xff] %v449
          %v451 = vld [vmem:[%s353 + $0x180] sm:$0xff]
          %452 = vst [vmem:[%s354 + $0x180] sm:$0xff] %v451
          %v453 = vld [vmem:[%s353 + $0x188] sm:$0xff]
          %454 = vst [vmem:[%s354 + $0x188] sm:$0xff] %v453
          %v455 = vld [vmem:[%s353 + $0x190] sm:$0xff]
          %456 = vst [vmem:[%s354 + $0x190] sm:$0xff] %v455
          %v457 = vld [vmem:[%s353 + $0x198] sm:$0xff]
          %458 = vst [vmem:[%s354 + $0x198] sm:$0xff] %v457
          %v459 = vld [vmem:[%s353 + $0x1a0] sm:$0xff]
          %460 = vst [vmem:[%s354 + $0x1a0] sm:$0xff] %v459
          %v461 = vld [vmem:[%s353 + $0x1a8] sm:$0xff]
          %462 = vst [vmem:[%s354 + $0x1a8] sm:$0xff] %v461
          %v463 = vld [vmem:[%s353 + $0x1b0] sm:$0xff]
          %464 = vst [vmem:[%s354 + $0x1b0] sm:$0xff] %v463
          %v465 = vld [vmem:[%s353 + $0x1b8] sm:$0xff]
          %466 = vst [vmem:[%s354 + $0x1b8] sm:$0xff] %v465
          %v467 = vld [vmem:[%s353 + $0x1c0] sm:$0xff]
          %468 = vst [vmem:[%s354 + $0x1c0] sm:$0xff] %v467
          %v469 = vld [vmem:[%s353 + $0x1c8] sm:$0xff]
          %470 = vst [vmem:[%s354 + $0x1c8] sm:$0xff] %v469
          %v471 = vld [vmem:[%s353 + $0x1d0] sm:$0xff]
          %472 = vst [vmem:[%s354 + $0x1d0] sm:$0xff] %v471
          %v473 = vld [vmem:[%s353 + $0x1d8] sm:$0xff]
          %474 = vst [vmem:[%s354 + $0x1d8] sm:$0xff] %v473
          %v475 = vld [vmem:[%s353 + $0x1e0] sm:$0xff]
          %476 = vst [vmem:[%s354 + $0x1e0] sm:$0xff] %v475
          %v477 = vld [vmem:[%s353 + $0x1e8] sm:$0xff]
          %478 = vst [vmem:[%s354 + $0x1e8] sm:$0xff] %v477
          %v479 = vld [vmem:[%s353 + $0x1f0] sm:$0xff]
          %480 = vst [vmem:[%s354 + $0x1f0] sm:$0xff] %v479
          %v481 = vld [vmem:[%s353 + $0x1f8] sm:$0xff]
          %482 = vst [vmem:[%s354 + $0x1f8] sm:$0xff] %v481
          %v483 = vld [vmem:[%s353 + $0x200] sm:$0xff]
          %484 = vst [vmem:[%s354 + $0x200] sm:$0xff] %v483
          %v485 = vld [vmem:[%s353 + $0x208] sm:$0xff]
          %486 = vst [vmem:[%s354 + $0x208] sm:$0xff] %v485
          %v487 = vld [vmem:[%s353 + $0x210] sm:$0xff]
          %488 = vst [vmem:[%s354 + $0x210] sm:$0xff] %v487
          %v489 = vld [vmem:[%s353 + $0x218] sm:$0xff]
          %490 = vst [vmem:[%s354 + $0x218] sm:$0xff] %v489
          %v491 = vld [vmem:[%s353 + $0x220] sm:$0xff]
          %492 = vst [vmem:[%s354 + $0x220] sm:$0xff] %v491
          %v493 = vld [vmem:[%s353 + $0x228] sm:$0xff]
          %494 = vst [vmem:[%s354 + $0x228] sm:$0xff] %v493
          %v495 = vld [vmem:[%s353 + $0x230] sm:$0xff]
          %496 = vst [vmem:[%s354 + $0x230] sm:$0xff] %v495
          %v497 = vld [vmem:[%s353 + $0x238] sm:$0xff]
          %498 = vst [vmem:[%s354 + $0x238] sm:$0xff] %v497
          %v499 = vld [vmem:[%s353 + $0x240] sm:$0xff]
          %500 = vst [vmem:[%s354 + $0x240] sm:$0xff] %v499
          %v501 = vld [vmem:[%s353 + $0x248] sm:$0xff]
          %502 = vst [vmem:[%s354 + $0x248] sm:$0xff] %v501
          %v503 = vld [vmem:[%s353 + $0x250] sm:$0xff]
          %504 = vst [vmem:[%s354 + $0x250] sm:$0xff] %v503
          %v505 = vld [vmem:[%s353 + $0x258] sm:$0xff]
          %506 = vst [vmem:[%s354 + $0x258] sm:$0xff] %v505
          %v507 = vld [vmem:[%s353 + $0x260] sm:$0xff]
          %508 = vst [vmem:[%s354 + $0x260] sm:$0xff] %v507
          %v509 = vld [vmem:[%s353 + $0x268] sm:$0xff]
          %510 = vst [vmem:[%s354 + $0x268] sm:$0xff] %v509
          %v511 = vld [vmem:[%s353 + $0x270] sm:$0xff]
          %512 = vst [vmem:[%s354 + $0x270] sm:$0xff] %v511
          %v513 = vld [vmem:[%s353 + $0x278] sm:$0xff]
          %514 = vst [vmem:[%s354 + $0x278] sm:$0xff] %v513
          %v515 = vld [vmem:[%s353 + $0x280] sm:$0xff]
          %516 = vst [vmem:[%s354 + $0x280] sm:$0xff] %v515
          %v517 = vld [vmem:[%s353 + $0x288] sm:$0xff]
          %518 = vst [vmem:[%s354 + $0x288] sm:$0xff] %v517
          %v519 = vld [vmem:[%s353 + $0x290] sm:$0xff]
          %520 = vst [vmem:[%s354 + $0x290] sm:$0xff] %v519
          %v521 = vld [vmem:[%s353 + $0x298] sm:$0xff]
          %522 = vst [vmem:[%s354 + $0x298] sm:$0xff] %v521
          %v523 = vld [vmem:[%s353 + $0x2a0] sm:$0xff]
          %524 = vst [vmem:[%s354 + $0x2a0] sm:$0xff] %v523
          %v525 = vld [vmem:[%s353 + $0x2a8] sm:$0xff]
          %526 = vst [vmem:[%s354 + $0x2a8] sm:$0xff] %v525
          %v527 = vld [vmem:[%s353 + $0x2b0] sm:$0xff]
          %528 = vst [vmem:[%s354 + $0x2b0] sm:$0xff] %v527
          %v529 = vld [vmem:[%s353 + $0x2b8] sm:$0xff]
          %530 = vst [vmem:[%s354 + $0x2b8] sm:$0xff] %v529
          %v531 = vld [vmem:[%s353 + $0x2c0] sm:$0xff]
          %532 = vst [vmem:[%s354 + $0x2c0] sm:$0xff] %v531
          %v533 = vld [vmem:[%s353 + $0x2c8] sm:$0xff]
          %534 = vst [vmem:[%s354 + $0x2c8] sm:$0xff] %v533
          %v535 = vld [vmem:[%s353 + $0x2d0] sm:$0xff]
          %536 = vst [vmem:[%s354 + $0x2d0] sm:$0xff] %v535
          %v537 = vld [vmem:[%s353 + $0x2d8] sm:$0xff]
          %538 = vst [vmem:[%s354 + $0x2d8] sm:$0xff] %v537
          %v539 = vld [vmem:[%s353 + $0x2e0] sm:$0xff]
          %540 = vst [vmem:[%s354 + $0x2e0] sm:$0xff] %v539
          %v541 = vld [vmem:[%s353 + $0x2e8] sm:$0xff]
          %542 = vst [vmem:[%s354 + $0x2e8] sm:$0xff] %v541
          %v543 = vld [vmem:[%s353 + $0x2f0] sm:$0xff]
          %544 = vst [vmem:[%s354 + $0x2f0] sm:$0xff] %v543
          %v545 = vld [vmem:[%s353 + $0x2f8] sm:$0xff]
          %546 = vst [vmem:[%s354 + $0x2f8] sm:$0xff] %v545
          %v547 = vld [vmem:[%s353 + $0x300] sm:$0xff]
          %548 = vst [vmem:[%s354 + $0x300] sm:$0xff] %v547
          %v549 = vld [vmem:[%s353 + $0x308] sm:$0xff]
          %550 = vst [vmem:[%s354 + $0x308] sm:$0xff] %v549
          %v551 = vld [vmem:[%s353 + $0x310] sm:$0xff]
          %552 = vst [vmem:[%s354 + $0x310] sm:$0xff] %v551
          %v553 = vld [vmem:[%s353 + $0x318] sm:$0xff]
          %554 = vst [vmem:[%s354 + $0x318] sm:$0xff] %v553
          %v555 = vld [vmem:[%s353 + $0x320] sm:$0xff]
          %556 = vst [vmem:[%s354 + $0x320] sm:$0xff] %v555
          %v557 = vld [vmem:[%s353 + $0x328] sm:$0xff]
          %558 = vst [vmem:[%s354 + $0x328] sm:$0xff] %v557
          %v559 = vld [vmem:[%s353 + $0x330] sm:$0xff]
          %560 = vst [vmem:[%s354 + $0x330] sm:$0xff] %v559
          %v561 = vld [vmem:[%s353 + $0x338] sm:$0xff]
          %562 = vst [vmem:[%s354 + $0x338] sm:$0xff] %v561
          %v563 = vld [vmem:[%s353 + $0x340] sm:$0xff]
          %564 = vst [vmem:[%s354 + $0x340] sm:$0xff] %v563
          %v565 = vld [vmem:[%s353 + $0x348] sm:$0xff]
          %566 = vst [vmem:[%s354 + $0x348] sm:$0xff] %v565
          %v567 = vld [vmem:[%s353 + $0x350] sm:$0xff]
          %568 = vst [vmem:[%s354 + $0x350] sm:$0xff] %v567
          %v569 = vld [vmem:[%s353 + $0x358] sm:$0xff]
          %570 = vst [vmem:[%s354 + $0x358] sm:$0xff] %v569
          %v571 = vld [vmem:[%s353 + $0x360] sm:$0xff]
          %572 = vst [vmem:[%s354 + $0x360] sm:$0xff] %v571
          %v573 = vld [vmem:[%s353 + $0x368] sm:$0xff]
          %574 = vst [vmem:[%s354 + $0x368] sm:$0xff] %v573
          %v575 = vld [vmem:[%s353 + $0x370] sm:$0xff]
          %576 = vst [vmem:[%s354 + $0x370] sm:$0xff] %v575
          %v577 = vld [vmem:[%s353 + $0x378] sm:$0xff]
          %578 = vst [vmem:[%s354 + $0x378] sm:$0xff] %v577
          %v579 = vld [vmem:[%s353 + $0x380] sm:$0xff]
          %580 = vst [vmem:[%s354 + $0x380] sm:$0xff] %v579
          %v581 = vld [vmem:[%s353 + $0x388] sm:$0xff]
          %582 = vst [vmem:[%s354 + $0x388] sm:$0xff] %v581
          %v583 = vld [vmem:[%s353 + $0x390] sm:$0xff]
          %584 = vst [vmem:[%s354 + $0x390] sm:$0xff] %v583
          %v585 = vld [vmem:[%s353 + $0x398] sm:$0xff]
          %586 = vst [vmem:[%s354 + $0x398] sm:$0xff] %v585
          %v587 = vld [vmem:[%s353 + $0x3a0] sm:$0xff]
          %588 = vst [vmem:[%s354 + $0x3a0] sm:$0xff] %v587
          %v589 = vld [vmem:[%s353 + $0x3a8] sm:$0xff]
          %590 = vst [vmem:[%s354 + $0x3a8] sm:$0xff] %v589
          %v591 = vld [vmem:[%s353 + $0x3b0] sm:$0xff]
          %592 = vst [vmem:[%s354 + $0x3b0] sm:$0xff] %v591
          %v593 = vld [vmem:[%s353 + $0x3b8] sm:$0xff]
          %594 = vst [vmem:[%s354 + $0x3b8] sm:$0xff] %v593
          %v595 = vld [vmem:[%s353 + $0x3c0] sm:$0xff]
          %596 = vst [vmem:[%s354 + $0x3c0] sm:$0xff] %v595
          %v597 = vld [vmem:[%s353 + $0x3c8] sm:$0xff]
          %598 = vst [vmem:[%s354 + $0x3c8] sm:$0xff] %v597
          %v599 = vld [vmem:[%s353 + $0x3d0] sm:$0xff]
          %600 = vst [vmem:[%s354 + $0x3d0] sm:$0xff] %v599
          %v601 = vld [vmem:[%s353 + $0x3d8] sm:$0xff]
          %602 = vst [vmem:[%s354 + $0x3d8] sm:$0xff] %v601
          %v603 = vld [vmem:[%s353 + $0x3e0] sm:$0xff]
          %604 = vst [vmem:[%s354 + $0x3e0] sm:$0xff] %v603
          %v605 = vld [vmem:[%s353 + $0x3e8] sm:$0xff]
          %606 = vst [vmem:[%s354 + $0x3e8] sm:$0xff] %v605
          %v607 = vld [vmem:[%s353 + $0x3f0] sm:$0xff]
          %608 = vst [vmem:[%s354 + $0x3f0] sm:$0xff] %v607
          %v609 = vld [vmem:[%s353 + $0x3f8] sm:$0xff]
          %610 = vst [vmem:[%s354 + $0x3f8] sm:$0xff] %v609
        $region74: #{encoder_layer.1} parent=68 // loop_footer
          %s352 = sadd.s32 1, %s348
        $region75: #{encoder_layer.1} parent=68 // loop_footer_branch
          %347 = sbr.rel target = $region71
        $region76: #{encoder_layer.1} parent=68 // loop_exit
          _
      $region69: #{encoder_layer.1} parent=53 // pred_fallthru
        _
      %p611 = pneg %p343
      // Predicated region
      $region77: #{encoder_layer.1} parent=53 // pred_check
        _
      $region78: #{encoder_layer.1} parent=53 // pred_check_branch
        %613 = sbr.rel (%p343) target = $region80
      $region79: #{encoder_layer.1} parent=53 // pred_region
        %s614 = sand.u32 1024, 7
      $region80: #{encoder_layer.1} parent=53 // pred_fallthru
        _
    $region54: #{encoder_layer.1} parent=1 // pred_fallthru
      _
    // Predicated region
    $region55: #{encoder_layer.1} parent=1 // pred_check
      %p328 = pneg %p324
    $region56: #{encoder_layer.1} parent=1 // pred_check_branch
      %330 = sbr.rel (%p328) target = $region58
    $region57: #{encoder_layer.1} parent=1 // pred_region
      %s331 = sshllo.u32 0, 1024
      loop: start=0, step=1, limit=1
      $region59: #{encoder_layer.1} parent=57 // loop_pre_header
        _
      $region60: #{encoder_layer.1} parent=57 // loop_header
        %s333 = sphi 0, %s337
        %p334 = scmp.ge.s32.totalorder %s333, 1
        %s338 = sphi %s4, %s4
        %s339 = sphi [#allocation3], [#allocation3]
      $region61: #{encoder_layer.1} parent=57 // loop_header_branch
        %336 = sbr.rel (%p334) target = $region65
      $region62: #{encoder_layer.1} parent=57 // loop_body
        %v340 = vld [vmem:[%s338] sm:%s331]
        %341 = vst [vmem:[%s339] sm:%s331] %v340
      $region63: #{encoder_layer.1} parent=57 // loop_footer
        %s337 = sadd.s32 1, %s333
      $region64: #{encoder_layer.1} parent=57 // loop_footer_branch
        %332 = sbr.rel target = $region60
      $region65: #{encoder_layer.1} parent=57 // loop_exit
        _
    $region58: #{encoder_layer.1} parent=1 // pred_fallthru
      _
    // Predicated region
    $region81: #{encoder_layer.1} parent=1 // pred_check
      _
    $region82: #{encoder_layer.1} parent=1 // pred_check_branch
      %617 = sbr.rel (0) target = $region84
    $region83: #{encoder_layer.1} parent=1 // pred_region
      %618 = vsyncadd %s322, 16384
    $region84: #{encoder_layer.1} parent=1 // pred_fallthru
      _
    %v619 = vld [vmem:[%s0] sm:$0xff]
    %v620 = vld [vmem:[%s0 + $0x8] sm:$0xff]
    %v621 = vld [vmem:[%s1] sm:$0xff]
    %v622 = vld [vmem:[%s1 + $0x8] sm:$0xff]
    %v623 = vld [vmem:[%s1 + $0x10] sm:$0xff]
    %v624 = vld [vmem:[%s1 + $0x18] sm:$0xff]
    %v625 = vld [vmem:[%s1 + $0x20] sm:$0xff]
    %v626 = vld [vmem:[%s1 + $0x28] sm:$0xff]
    %v627 = vld [vmem:[%s1 + $0x30] sm:$0xff]
    %v628 = vld [vmem:[%s1 + $0x38] sm:$0xff]
    %v629 = vld [vmem:[%s1 + $0x40] sm:$0xff]
    %v630 = vld [vmem:[%s1 + $0x48] sm:$0xff]
    %v631 = vld [vmem:[%s1 + $0x50] sm:$0xff]
    %v632 = vld [vmem:[%s1 + $0x58] sm:$0xff]
    %v633 = vld [vmem:[%s1 + $0x60] sm:$0xff]
    %vm634 = vcmask 261120
    %v635 = vsel %vm634, %v619, 0.0
    %636 = vadd.xlane.f32.xlu0 %v635
    %v637 = vpop.xlane.xlu0 %636
    %v638 = vsel %vm634, %v620, 0.0
    %639 = vadd.xlane.f32.xlu0 %v638
    %v640 = vpop.xlane.xlu0 %639
    %v641 = vrcp.pop 32.0
    %v642 = vmul.f32 %v637, %v641
    %v643 = vmul.f32 %v640, %v641
    %v644 = vsub.f32 %v619, %v642
    %v645 = vsub.f32 %v620, %v643
    %v646 = vmul.f32 %v644, %v644
    %v647 = vmul.f32 %v645, %v645
    %v648 = vsel %vm634, %v646, 0.0
    %649 = vadd.xlane.f32.xlu0 %v648
    %v650 = vpop.xlane.xlu0 %649
    %v651 = vsel %vm634, %v647, 0.0
    %652 = vadd.xlane.f32.xlu0 %v651
    %v653 = vpop.xlane.xlu0 %652
    %v654 = vmul.f32 %v650, 0.032258064
    %v655 = vmul.f32 %v653, 0.032258064
    %v656 = vrsqrt.pop %v654
    %v657 = vrsqrt.pop %v655
    %v658 = vmul.f32 %v644, %v656
    %v659 = vmul.f32 %v645, %v657
    %v660 = vadd.f32 %v658, 1e-06
    %v661 = vadd.f32 %v659, 1e-06
    %v662 = vlaneseq
    %v663 = vshrl.u32 %v662, 7
    %v664 = vsub.s32 0, %v663
    %v665 = vrot.slane %v621, %v664
    %v666 = vmul.f32 %v665, %v660
    %v667 = vmul.f32 %v665, %v661
    %v668 = vlaneseq
    %v669 = vshrl.u32 %v668, 7
    %v670 = vsub.s32 1, %v669
    %v671 = vrot.slane %v621, %v670
    %v672 = vadd.f32 %v666, %v671
    %v673 = vadd.f32 %v667, %v671
    %v674 = vlaneseq
    %v675 = vshrl.u32 %v674, 7
    %v676 = vsub.s32 4, %v675
    %v677 = vrot.slane %v621, %v676
    %v679 = vsel %vm634, %v672, 0
    %v682 = vsel %vm634, %v673, 0
    %684 = vmatprep.subr.mxu0 0.0
    %685 = vmatpush1.msra.mxu0 %v622
    %686 = vmatprep.subr.mxu0 0.0
    %687 = vmatpush1.msra.mxu0 %v623
    %688 = vmatprep.subr.mxu0 0.0
    %689 = vmatpush1.msra.mxu0 %v624
    %690 = vmatprep.subr.mxu0 0.0
    %691 = vmatpush1.msra.mxu0 %v625
    %692 = vmatprep.subr.mxu0 0.0
    %693 = vmatpush1.msra.mxu0 0.0
    %694 = vmatprep.subr.mxu0 0.0
    %695 = vmatpush1.msra.mxu0 0.0
    %696 = vmatprep.subr.mxu0 0.0
    %697 = vmatpush1.msra.mxu0 0.0
    %698 = vmatprep.subr.mxu0 0.0
    %699 = vmatpush1.msra.mxu0 0.0
    %700 = vmatprep.subr.mxu0 0.0
    %701 = vmatpush1.msra.mxu0 0.0
    %702 = vmatprep.subr.mxu0 0.0
    %703 = vmatpush1.msra.mxu0 0.0
    %704 = vmatprep.subr.mxu0 0.0
    %705 = vmatpush1.msra.mxu0 0.0
    %706 = vmatprep.subr.mxu0 0.0
    %707 = vmatpush1.msra.mxu0 0.0
    %708 = vmatprep.subr.mxu0 0.0
    %709 = vmatpush1.msra.mxu0 0.0
    %710 = vmatprep.subr.mxu0 0.0
    %711 = vmatpush1.msra.mxu0 0.0
    %712 = vmatprep.subr.mxu0 0.0
    %713 = vmatpush1.msra.mxu0 0.0
    %714 = vmatprep.subr.mxu0 0.0
    %715 = vmatpush1.msra.mxu0 0.0
    %716 = vmatprep.subr.mxu0 0.0
    %717 = vmatpush1.msra.mxu0 0.0
    %718 = vmatprep.subr.mxu0 0.0
    %719 = vmatpush1.msra.mxu0 0.0
    %720 = vmatprep.subr.mxu0 0.0
    %721 = vmatpush1.msra.mxu0 0.0
    %722 = vmatprep.subr.mxu0 0.0
    %723 = vmatpush1.msra.mxu0 0.0
    %724 = vmatprep.subr.mxu0 0.0
    %725 = vmatpush1.msra.mxu0 0.0
    %726 = vmatprep.subr.mxu0 0.0
    %727 = vmatpush1.msra.mxu0 0.0
    %728 = vmatprep.subr.mxu0 0.0
    %729 = vmatpush1.msra.mxu0 0.0
    %730 = vmatprep.subr.mxu0 0.0
    %731 = vmatpush1.msra.mxu0 0.0
    %732 = vmatprep.subr.mxu0 0.0
    %733 = vmatpush1.msra.mxu0 0.0
    %734 = vmatprep.subr.mxu0 0.0
    %735 = vmatpush1.msra.mxu0 0.0
    %736 = vmatprep.subr.mxu0 0.0
    %737 = vmatpush1.msra.mxu0 0.0
    %738 = vmatprep.subr.mxu0 0.0
    %739 = vmatpush1.msra.mxu0 0.0
    %740 = vmatprep.subr.mxu0 0.0
    %741 = vmatpush1.msra.mxu0 0.0
    %742 = vmatprep.subr.mxu0 0.0
    %743 = vmatpush1.msra.mxu0 0.0
    %744 = vmatprep.subr.mxu0 0.0
    %745 = vmatpush1.msra.mxu0 0.0
    %746 = vmatprep.subr.mxu0 0.0
    %747 = vmatpush1.msra.mxu0 0.0
    %748 = vmatprep.mubr.f32.mxu0 0.0
    %749 = vmatmul.mubr.f32.gmra.mrb[0].mxu0 %v679
    %v750 = vpop.f32.mrb[0].mxu0
    %v751 = vadd.f32 %v677, %v750
    %v752 = vpop.f32.mrb[0].mxu0
    %753 = vmatprep.mubr.f32.mxu0 0.0
    %754 = vmatmul.mubr.f32.gmra.mrb[0].mxu0 %v682
    %v755 = vpop.f32.mrb[0].mxu0
    %v756 = vadd.f32 %v677, %v755
    %v757 = vpop.f32.mrb[0].mxu0
    %758 = vdwg.mxu0
    %v759 = vlaneseq
    %v760 = vshrl.u32 %v759, 7
    %v761 = vsub.s32 5, %v760
    %v762 = vrot.slane %v621, %v761
    %763 = vmatprep.subr.mxu0 0.0
    %764 = vmatpush1.msra.mxu0 %v626
    %765 = vmatprep.subr.mxu0 0.0
    %766 = vmatpush1.msra.mxu0 %v627
    %767 = vmatprep.subr.mxu0 0.0
    %768 = vmatpush1.msra.mxu0 %v628
    %769 = vmatprep.subr.mxu0 0.0
    %770 = vmatpush1.msra.mxu0 %v629
    %771 = vmatprep.subr.mxu0 0.0
    %772 = vmatpush1.msra.mxu0 0.0
    %773 = vmatprep.subr.mxu0 0.0
    %774 = vmatpush1.msra.mxu0 0.0
    %775 = vmatprep.subr.mxu0 0.0
    %776 = vmatpush1.msra.mxu0 0.0
    %777 = vmatprep.subr.mxu0 0.0
    %778 = vmatpush1.msra.mxu0 0.0
    %779 = vmatprep.subr.mxu0 0.0
    %780 = vmatpush1.msra.mxu0 0.0
    %781 = vmatprep.subr.mxu0 0.0
    %782 = vmatpush1.msra.mxu0 0.0
    %783 = vmatprep.subr.mxu0 0.0
    %784 = vmatpush1.msra.mxu0 0.0
    %785 = vmatprep.subr.mxu0 0.0
    %786 = vmatpush1.msra.mxu0 0.0
    %787 = vmatprep.subr.mxu0 0.0
    %788 = vmatpush1.msra.mxu0 0.0
    %789 = vmatprep.subr.mxu0 0.0
    %790 = vmatpush1.msra.mxu0 0.0
    %791 = vmatprep.subr.mxu0 0.0
    %792 = vmatpush1.msra.mxu0 0.0
    %793 = vmatprep.subr.mxu0 0.0
    %794 = vmatpush1.msra.mxu0 0.0
    %795 = vmatprep.subr.mxu0 0.0
    %796 = vmatpush1.msra.mxu0 0.0
    %797 = vmatprep.subr.mxu0 0.0
    %798 = vmatpush1.msra.mxu0 0.0
    %799 = vmatprep.subr.mxu0 0.0
    %800 = vmatpush1.msra.mxu0 0.0
    %801 = vmatprep.subr.mxu0 0.0
    %802 = vmatpush1.msra.mxu0 0.0
    %803 = vmatprep.subr.mxu0 0.0
    %804 = vmatpush1.msra.mxu0 0.0
    %805 = vmatprep.subr.mxu0 0.0
    %806 = vmatpush1.msra.mxu0 0.0
    %807 = vmatprep.subr.mxu0 0.0
    %808 = vmatpush1.msra.mxu0 0.0
    %809 = vmatprep.subr.mxu0 0.0
    %810 = vmatpush1.msra.mxu0 0.0
    %811 = vmatprep.subr.mxu0 0.0
    %812 = vmatpush1.msra.mxu0 0.0
    %813 = vmatprep.subr.mxu0 0.0
    %814 = vmatpush1.msra.mxu0 0.0
    %815 = vmatprep.subr.mxu0 0.0
    %816 = vmatpush1.msra.mxu0 0.0
    %817 = vmatprep.subr.mxu0 0.0
    %818 = vmatpush1.msra.mxu0 0.0
    %819 = vmatprep.subr.mxu0 0.0
    %820 = vmatpush1.msra.mxu0 0.0
    %821 = vmatprep.subr.mxu0 0.0
    %822 = vmatpush1.msra.mxu0 0.0
    %823 = vmatprep.subr.mxu0 0.0
    %824 = vmatpush1.msra.mxu0 0.0
    %825 = vmatprep.subr.mxu0 0.0
    %826 = vmatpush1.msra.mxu0 0.0
    %827 = vmatprep.mubr.f32.mxu0 0.0
    %828 = vmatmul.mubr.f32.gmra.mrb[0].mxu0 %v679
    %v829 = vpop.f32.mrb[0].mxu0
    %v830 = vadd.f32 %v762, %v829
    %v831 = vpop.f32.mrb[0].mxu0
    %832 = vmatprep.mubr.f32.mxu0 0.0
    %833 = vmatmul.mubr.f32.gmra.mrb[0].mxu0 %v682
    %v834 = vpop.f32.mrb[0].mxu0
    %v835 = vadd.f32 %v762, %v834
    %v836 = vpop.f32.mrb[0].mxu0
    %837 = vdwg.mxu0
    %vm838 = vcmask 64512
    %v840 = vsel %vm838, %v751, 0
    %v843 = vsel %vm838, %v830, 0
    %845 = vmatprep.subr.mxu0 0.0
    %846 = vmatpush1.xpose.msra.mxu0 %v843
    %847 = vmatprep.subr.mxu0 0.0
    %848 = vmatpush1.xpose.msra.mxu0 0.0
    %849 = vmatprep.subr.mxu0 0.0
    %850 = vmatpush1.xpose.msra.mxu0 0.0
    %851 = vmatprep.subr.mxu0 0.0
    %852 = vmatpush1.xpose.msra.mxu0 0.0
    %853 = vmatprep.subr.mxu0 0.0
    %854 = vmatpush1.xpose.msra.mxu0 0.0
    %855 = vmatprep.subr.mxu0 0.0
    %856 = vmatpush1.xpose.msra.mxu0 0.0
    %857 = vmatprep.subr.mxu0 0.0
    %858 = vmatpush1.xpose.msra.mxu0 0.0
    %859 = vmatprep.subr.mxu0 0.0
    %860 = vmatpush1.xpose.msra.mxu0 0.0
    %861 = vmatprep.subr.mxu0 0.0
    %862 = vmatpush1.xpose.msra.mxu0 0.0
    %863 = vmatprep.subr.mxu0 0.0
    %864 = vmatpush1.xpose.msra.mxu0 0.0
    %865 = vmatprep.subr.mxu0 0.0
    %866 = vmatpush1.xpose.msra.mxu0 0.0
    %867 = vmatprep.subr.mxu0 0.0
    %868 = vmatpush1.xpose.msra.mxu0 0.0
    %869 = vmatprep.subr.mxu0 0.0
    %870 = vmatpush1.xpose.msra.mxu0 0.0
    %871 = vmatprep.subr.mxu0 0.0
    %872 = vmatpush1.xpose.msra.mxu0 0.0
    %873 = vmatprep.subr.mxu0 0.0
    %874 = vmatpush1.xpose.msra.mxu0 0.0
    %875 = vmatprep.subr.mxu0 0.0
    %876 = vmatpush1.xpose.msra.mxu0 0.0
    %877 = vmatprep.subr.mxu0 0.0
    %878 = vmatpush1.xpose.msra.mxu0 0.0
    %879 = vmatprep.subr.mxu0 0.0
    %880 = vmatpush1.xpose.msra.mxu0 0.0
    %881 = vmatprep.subr.mxu0 0.0
    %882 = vmatpush1.xpose.msra.mxu0 0.0
    %883 = vmatprep.subr.mxu0 0.0
    %884 = vmatpush1.xpose.msra.mxu0 0.0
    %885 = vmatprep.subr.mxu0 0.0
    %886 = vmatpush1.xpose.msra.mxu0 0.0
    %887 = vmatprep.subr.mxu0 0.0
    %888 = vmatpush1.xpose.msra.mxu0 0.0
    %889 = vmatprep.subr.mxu0 0.0
    %890 = vmatpush1.xpose.msra.mxu0 0.0
    %891 = vmatprep.subr.mxu0 0.0
    %892 = vmatpush1.xpose.msra.mxu0 0.0
    %893 = vmatprep.subr.mxu0 0.0
    %894 = vmatpush1.xpose.msra.mxu0 0.0
    %895 = vmatprep.subr.mxu0 0.0
    %896 = vmatpush1.xpose.msra.mxu0 0.0
    %897 = vmatprep.subr.mxu0 0.0
    %898 = vmatpush1.xpose.msra.mxu0 0.0
    %899 = vmatprep.subr.mxu0 0.0
    %900 = vmatpush1.xpose.msra.mxu0 0.0
    %901 = vmatprep.subr.mxu0 0.0
    %902 = vmatpush1.xpose.msra.mxu0 0.0
    %903 = vmatprep.subr.mxu0 0.0
    %904 = vmatpush1.xpose.msra.mxu0 0.0
    %905 = vmatprep.subr.mxu0 0.0
    %906 = vmatpush1.xpose.msra.mxu0 0.0
    %907 = vmatprep.subr.mxu0 0.0
    %908 = vmatpush1.xpose.msra.mxu0 0.0
    %909 = vmatprep.mubr.f32.mxu0 0.0
    %910 = vmatmul.mubr.f32.gmra.mrb[0].mxu0 %v840
    %v911 = vpop.f32.mrb[0].mxu0
    %v912 = vadd.f32 0.0, %v911
    %v913 = vpop.f32.mrb[0].mxu0
    %914 = vdwg.mxu0
    %v916 = vsel %vm838, %v756, 0
    %v919 = vsel %vm838, %v835, 0
    %921 = vmatprep.subr.mxu0 0.0
    %922 = vmatpush1.xpose.msra.mxu0 %v919
    %923 = vmatprep.subr.mxu0 0.0
    %924 = vmatpush1.xpose.msra.mxu0 0.0
    %925 = vmatprep.subr.mxu0 0.0
    %926 = vmatpush1.xpose.msra.mxu0 0.0
    %927 = vmatprep.subr.mxu0 0.0
    %928 = vmatpush1.xpose.msra.mxu0 0.0
    %929 = vmatprep.subr.mxu0 0.0
    %930 = vmatpush1.xpose.msra.mxu0 0.0
    %931 = vmatprep.subr.mxu0 0.0
    %932 = vmatpush1.xpose.msra.mxu0 0.0
    %933 = vmatprep.subr.mxu0 0.0
    %934 = vmatpush1.xpose.msra.mxu0 0.0
    %935 = vmatprep.subr.mxu0 0.0
    %936 = vmatpush1.xpose.msra.mxu0 0.0
    %937 = vmatprep.subr.mxu0 0.0
    %938 = vmatpush1.xpose.msra.mxu0 0.0
    %939 = vmatprep.subr.mxu0 0.0
    %940 = vmatpush1.xpose.msra.mxu0 0.0
    %941 = vmatprep.subr.mxu0 0.0
    %942 = vmatpush1.xpose.msra.mxu0 0.0
    %943 = vmatprep.subr.mxu0 0.0
    %944 = vmatpush1.xpose.msra.mxu0 0.0
    %945 = vmatprep.subr.mxu0 0.0
    %946 = vmatpush1.xpose.msra.mxu0 0.0
    %947 = vmatprep.subr.mxu0 0.0
    %948 = vmatpush1.xpose.msra.mxu0 0.0
    %949 = vmatprep.subr.mxu0 0.0
    %950 = vmatpush1.xpose.msra.mxu0 0.0
    %951 = vmatprep.subr.mxu0 0.0
    %952 = vmatpush1.xpose.msra.mxu0 0.0
    %953 = vmatprep.subr.mxu0 0.0
    %954 = vmatpush1.xpose.msra.mxu0 0.0
    %955 = vmatprep.subr.mxu0 0.0
    %956 = vmatpush1.xpose.msra.mxu0 0.0
    %957 = vmatprep.subr.mxu0 0.0
    %958 = vmatpush1.xpose.msra.mxu0 0.0
    %959 = vmatprep.subr.mxu0 0.0
    %960 = vmatpush1.xpose.msra.mxu0 0.0
    %961 = vmatprep.subr.mxu0 0.0
    %962 = vmatpush1.xpose.msra.mxu0 0.0
    %963 = vmatprep.subr.mxu0 0.0
    %964 = vmatpush1.xpose.msra.mxu0 0.0
    %965 = vmatprep.subr.mxu0 0.0
    %966 = vmatpush1.xpose.msra.mxu0 0.0
    %967 = vmatprep.subr.mxu0 0.0
    %968 = vmatpush1.xpose.msra.mxu0 0.0
    %969 = vmatprep.subr.mxu0 0.0
    %970 = vmatpush1.xpose.msra.mxu0 0.0
    %971 = vmatprep.subr.mxu0 0.0
    %972 = vmatpush1.xpose.msra.mxu0 0.0
    %973 = vmatprep.subr.mxu0 0.0
    %974 = vmatpush1.xpose.msra.mxu0 0.0
    %975 = vmatprep.subr.mxu0 0.0
    %976 = vmatpush1.xpose.msra.mxu0 0.0
    %977 = vmatprep.subr.mxu0 0.0
    %978 = vmatpush1.xpose.msra.mxu0 0.0
    %979 = vmatprep.subr.mxu0 0.0
    %980 = vmatpush1.xpose.msra.mxu0 0.0
    %981 = vmatprep.subr.mxu0 0.0
    %982 = vmatpush1.xpose.msra.mxu0 0.0
    %983 = vmatprep.subr.mxu0 0.0
    %984 = vmatpush1.xpose.msra.mxu0 0.0
    %985 = vmatprep.mubr.f32.mxu0 0.0
    %986 = vmatmul.mubr.f32.gmra.mrb[0].mxu0 %v916
    %v987 = vpop.f32.mrb[0].mxu0
    %v988 = vadd.f32 0.0, %v987
    %v989 = vpop.f32.mrb[0].mxu0
    %990 = vdwg.mxu0
    %v991 = vsel %vm838, %v912, -inf
    %992 = vmax.xlane.f32.xlu0 %v991
    %v993 = vpop.xlane.xlu0 %992
    %v994 = vsel %vm838, %v988, -inf
    %995 = vmax.xlane.f32.xlu0 %v994
    %v996 = vpop.xlane.xlu0 %995
    %v997 = vsub.f32 %v912, %v993
    %v998 = vsub.f32 %v988, %v996
    %v999 = vmul.f32 %v997, 1.442695
    %v1000 = vpow.pop %v999
    %v1001 = vmul.f32 %v998, 1.442695
    %v1002 = vpow.pop %v1001
    %v1003 = vsel %vm838, %v1000, 0.0
    %1004 = vadd.xlane.f32.xlu0 %v1003
    %v1005 = vpop.xlane.xlu0 %1004
    %v1006 = vsel %vm838, %v1002, 0.0
    %1007 = vadd.xlane.f32.xlu0 %v1006
    %v1008 = vpop.xlane.xlu0 %1007
    %v1009 = vrcp.pop %v1005
    %v1010 = vmul.f32 %v1000, %v1009
    %v1011 = vrcp.pop %v1008
    %v1012 = vmul.f32 %v1002, %v1011
    %v1014 = vsel %vm838, %v1010, 0
    %1016 = vmatprep.subr.mxu0 0.0
    %1017 = vmatpush1.msra.mxu0 %v830
    %1018 = vmatprep.subr.mxu0 0.0
    %1019 = vmatpush1.msra.mxu0 0.0
    %1020 = vmatprep.subr.mxu0 0.0
    %1021 = vmatpush1.msra.mxu0 0.0
    %1022 = vmatprep.subr.mxu0 0.0
    %1023 = vmatpush1.msra.mxu0 0.0
    %1024 = vmatprep.subr.mxu0 0.0
    %1025 = vmatpush1.msra.mxu0 0.0
    %1026 = vmatprep.subr.mxu0 0.0
    %1027 = vmatpush1.msra.mxu0 0.0
    %1028 = vmatprep.subr.mxu0 0.0
    %1029 = vmatpush1.msra.mxu0 0.0
    %1030 = vmatprep.subr.mxu0 0.0
    %1031 = vmatpush1.msra.mxu0 0.0
    %1032 = vmatprep.subr.mxu0 0.0
    %1033 = vmatpush1.msra.mxu0 0.0
    %1034 = vmatprep.subr.mxu0 0.0
    %1035 = vmatpush1.msra.mxu0 0.0
    %1036 = vmatprep.subr.mxu0 0.0
    %1037 = vmatpush1.msra.mxu0 0.0
    %1038 = vmatprep.subr.mxu0 0.0
    %1039 = vmatpush1.msra.mxu0 0.0
    %1040 = vmatprep.subr.mxu0 0.0
    %1041 = vmatpush1.msra.mxu0 0.0
    %1042 = vmatprep.subr.mxu0 0.0
    %1043 = vmatpush1.msra.mxu0 0.0
    %1044 = vmatprep.subr.mxu0 0.0
    %1045 = vmatpush1.msra.mxu0 0.0
    %1046 = vmatprep.subr.mxu0 0.0
    %1047 = vmatpush1.msra.mxu0 0.0
    %1048 = vmatprep.subr.mxu0 0.0
    %1049 = vmatpush1.msra.mxu0 0.0
    %1050 = vmatprep.subr.mxu0 0.0
    %1051 = vmatpush1.msra.mxu0 0.0
    %1052 = vmatprep.subr.mxu0 0.0
    %1053 = vmatpush1.msra.mxu0 0.0
    %1054 = vmatprep.subr.mxu0 0.0
    %1055 = vmatpush1.msra.mxu0 0.0
    %1056 = vmatprep.subr.mxu0 0.0
    %1057 = vmatpush1.msra.mxu0 0.0
    %1058 = vmatprep.subr.mxu0 0.0
    %1059 = vmatpush1.msra.mxu0 0.0
    %1060 = vmatprep.subr.mxu0 0.0
    %1061 = vmatpush1.msra.mxu0 0.0
    %1062 = vmatprep.subr.mxu0 0.0
    %1063 = vmatpush1.msra.mxu0 0.0
    %1064 = vmatprep.subr.mxu0 0.0
    %1065 = vmatpush1.msra.mxu0 0.0
    %1066 = vmatprep.subr.mxu0 0.0
    %1067 = vmatpush1.msra.mxu0 0.0
    %1068 = vmatprep.subr.mxu0 0.0
    %1069 = vmatpush1.msra.mxu0 0.0
    %1070 = vmatprep.subr.mxu0 0.0
    %1071 = vmatpush1.msra.mxu0 0.0
    %1072 = vmatprep.subr.mxu0 0.0
    %1073 = vmatpush1.msra.mxu0 0.0
    %1074 = vmatprep.subr.mxu0 0.0
    %1075 = vmatpush1.msra.mxu0 0.0
    %1076 = vmatprep.subr.mxu0 0.0
    %1077 = vmatpush1.msra.mxu0 0.0
    %1078 = vmatprep.subr.mxu0 0.0
    %1079 = vmatpush1.msra.mxu0 0.0
    %1080 = vmatprep.mubr.f32.mxu0 0.0
    %1081 = vmatmul.mubr.f32.gmra.mrb[0].mxu0 %v1014
    %v1082 = vpop.f32.mrb[0].mxu0
    %v1083 = vadd.f32 0.0, %v1082
    %v1084 = vpop.f32.mrb[0].mxu0
    %1085 = vdwg.mxu0
    %v1087 = vsel %vm838, %v1012, 0
    %1089 = vmatprep.subr.mxu0 0.0
    %1090 = vmatpush1.msra.mxu0 %v835
    %1091 = vmatprep.subr.mxu0 0.0
    %1092 = vmatpush1.msra.mxu0 0.0
    %1093 = vmatprep.subr.mxu0 0.0
    %1094 = vmatpush1.msra.mxu0 0.0
    %1095 = vmatprep.subr.mxu0 0.0
    %1096 = vmatpush1.msra.mxu0 0.0
    %1097 = vmatprep.subr.mxu0 0.0
    %1098 = vmatpush1.msra.mxu0 0.0
    %1099 = vmatprep.subr.mxu0 0.0
    %1100 = vmatpush1.msra.mxu0 0.0
    %1101 = vmatprep.subr.mxu0 0.0
    %1102 = vmatpush1.msra.mxu0 0.0
    %1103 = vmatprep.subr.mxu0 0.0
    %1104 = vmatpush1.msra.mxu0 0.0
    %1105 = vmatprep.subr.mxu0 0.0
    %1106 = vmatpush1.msra.mxu0 0.0
    %1107 = vmatprep.subr.mxu0 0.0
    %1108 = vmatpush1.msra.mxu0 0.0
    %1109 = vmatprep.subr.mxu0 0.0
    %1110 = vmatpush1.msra.mxu0 0.0
    %1111 = vmatprep.subr.mxu0 0.0
    %1112 = vmatpush1.msra.mxu0 0.0
    %1113 = vmatprep.subr.mxu0 0.0
    %1114 = vmatpush1.msra.mxu0 0.0
    %1115 = vmatprep.subr.mxu0 0.0
    %1116 = vmatpush1.msra.mxu0 0.0
    %1117 = vmatprep.subr.mxu0 0.0
    %1118 = vmatpush1.msra.mxu0 0.0
    %1119 = vmatprep.subr.mxu0 0.0
    %1120 = vmatpush1.msra.mxu0 0.0
    %1121 = vmatprep.subr.mxu0 0.0
    %1122 = vmatpush1.msra.mxu0 0.0
    %1123 = vmatprep.subr.mxu0 0.0
    %1124 = vmatpush1.msra.mxu0 0.0
    %1125 = vmatprep.subr.mxu0 0.0
    %1126 = vmatpush1.msra.mxu0 0.0
    %1127 = vmatprep.subr.mxu0 0.0
    %1128 = vmatpush1.msra.mxu0 0.0
    %1129 = vmatprep.subr.mxu0 0.0
    %1130 = vmatpush1.msra.mxu0 0.0
    %1131 = vmatprep.subr.mxu0 0.0
    %1132 = vmatpush1.msra.mxu0 0.0
    %1133 = vmatprep.subr.mxu0 0.0
    %1134 = vmatpush1.msra.mxu0 0.0
    %1135 = vmatprep.subr.mxu0 0.0
    %1136 = vmatpush1.msra.mxu0 0.0
    %1137 = vmatprep.subr.mxu0 0.0
    %1138 = vmatpush1.msra.mxu0 0.0
    %1139 = vmatprep.subr.mxu0 0.0
    %1140 = vmatpush1.msra.mxu0 0.0
    %1141 = vmatprep.subr.mxu0 0.0
    %1142 = vmatpush1.msra.mxu0 0.0
    %1143 = vmatprep.subr.mxu0 0.0
    %1144 = vmatpush1.msra.mxu0 0.0
    %1145 = vmatprep.subr.mxu0 0.0
    %1146 = vmatpush1.msra.mxu0 0.0
    %1147 = vmatprep.subr.mxu0 0.0
    %1148 = vmatpush1.msra.mxu0 0.0
    %1149 = vmatprep.subr.mxu0 0.0
    %1150 = vmatpush1.msra.mxu0 0.0
    %1151 = vmatprep.subr.mxu0 0.0
    %1152 = vmatpush1.msra.mxu0 0.0
    %1153 = vmatprep.mubr.f32.mxu0 0.0
    %1154 = vmatmul.mubr.f32.gmra.mrb[0].mxu0 %v1087
    %v1155 = vpop.f32.mrb[0].mxu0
    %v1156 = vadd.f32 0.0, %v1155
    %v1157 = vpop.f32.mrb[0].mxu0
    %1158 = vdwg.mxu0
    %1159 = vrot.lane.b32.xlu0 %v751, 120
    %v1160 = vpop.permute.xlu0 %1159
    %1161 = vrot.lane.b32.xlu0 %v830, 120
    %v1162 = vpop.permute.xlu0 %1161
    %v1163 = vsel %vm838, %v1160, 0
    %v1165 = vsel %vm838, %v1162, 0
    %1167 = vmatprep.subr.mxu0 0.0
    %1168 = vmatpush1.xpose.msra.mxu0 %v1165
    %1169 = vmatprep.subr.mxu0 0.0
    %1170 = vmatpush1.xpose.msra.mxu0 0.0
    %1171 = vmatprep.subr.mxu0 0.0
    %1172 = vmatpush1.xpose.msra.mxu0 0.0
    %1173 = vmatprep.subr.mxu0 0.0
    %1174 = vmatpush1.xpose.msra.mxu0 0.0
    %1175 = vmatprep.subr.mxu0 0.0
    %1176 = vmatpush1.xpose.msra.mxu0 0.0
    %1177 = vmatprep.subr.mxu0 0.0
    %1178 = vmatpush1.xpose.msra.mxu0 0.0
    %1179 = vmatprep.subr.mxu0 0.0
    %1180 = vmatpush1.xpose.msra.mxu0 0.0
    %1181 = vmatprep.subr.mxu0 0.0
    %1182 = vmatpush1.xpose.msra.mxu0 0.0
    %1183 = vmatprep.subr.mxu0 0.0
    %1184 = vmatpush1.xpose.msra.mxu0 0.0
    %1185 = vmatprep.subr.mxu0 0.0
    %1186 = vmatpush1.xpose.msra.mxu0 0.0
    %1187 = vmatprep.subr.mxu0 0.0
    %1188 = vmatpush1.xpose.msra.mxu0 0.0
    %1189 = vmatprep.subr.mxu0 0.0
    %1190 = vmatpush1.xpose.msra.mxu0 0.0
    %1191 = vmatprep.subr.mxu0 0.0
    %1192 = vmatpush1.xpose.msra.mxu0 0.0
    %1193 = vmatprep.subr.mxu0 0.0
    %1194 = vmatpush1.xpose.msra.mxu0 0.0
    %1195 = vmatprep.subr.mxu0 0.0
    %1196 = vmatpush1.xpose.msra.mxu0 0.0
    %1197 = vmatprep.subr.mxu0 0.0
    %1198 = vmatpush1.xpose.msra.mxu0 0.0
    %1199 = vmatprep.subr.mxu0 0.0
    %1200 = vmatpush1.xpose.msra.mxu0 0.0
    %1201 = vmatprep.subr.mxu0 0.0
    %1202 = vmatpush1.xpose.msra.mxu0 0.0
    %1203 = vmatprep.subr.mxu0 0.0
    %1204 = vmatpush1.xpose.msra.mxu0 0.0
    %1205 = vmatprep.subr.mxu0 0.0
    %1206 = vmatpush1.xpose.msra.mxu0 0.0
    %1207 = vmatprep.subr.mxu0 0.0
    %1208 = vmatpush1.xpose.msra.mxu0 0.0
    %1209 = vmatprep.subr.mxu0 0.0
    %1210 = vmatpush1.xpose.msra.mxu0 0.0
    %1211 = vmatprep.subr.mxu0 0.0
    %1212 = vmatpush1.xpose.msra.mxu0 0.0
    %1213 = vmatprep.subr.mxu0 0.0
    %1214 = vmatpush1.xpose.msra.mxu0 0.0
    %1215 = vmatprep.subr.mxu0 0.0
    %1216 = vmatpush1.xpose.msra.mxu0 0.0
    %1217 = vmatprep.subr.mxu0 0.0
    %1218 = vmatpush1.xpose.msra.mxu0 0.0
    %1219 = vmatprep.subr.mxu0 0.0
    %1220 = vmatpush1.xpose.msra.mxu0 0.0
    %1221 = vmatprep.subr.mxu0 0.0
    %1222 = vmatpush1.xpose.msra.mxu0 0.0
    %1223 = vmatprep.subr.mxu0 0.0
    %1224 = vmatpush1.xpose.msra.mxu0 0.0
    %1225 = vmatprep.subr.mxu0 0.0
    %1226 = vmatpush1.xpose.msra.mxu0 0.0
    %1227 = vmatprep.subr.mxu0 0.0
    %1228 = vmatpush1.xpose.msra.mxu0 0.0
    %1229 = vmatprep.subr.mxu0 0.0
    %1230 = vmatpush1.xpose.msra.mxu0 0.0
    %1231 = vmatprep.mubr.f32.mxu0 0.0
    %1232 = vmatmul.mubr.f32.gmra.mrb[0].mxu0 %v1163
    %v1233 = vpop.f32.mrb[0].mxu0
    %v1234 = vadd.f32 0.0, %v1233
    %v1235 = vpop.f32.mrb[0].mxu0
    %1236 = vdwg.mxu0
    %1237 = vrot.lane.b32.xlu0 %v756, 120
    %v1238 = vpop.permute.xlu0 %1237
    %1239 = vrot.lane.b32.xlu0 %v835, 120
    %v1240 = vpop.permute.xlu0 %1239
    %v1241 = vsel %vm838, %v1238, 0
    %v1243 = vsel %vm838, %v1240, 0
    %1245 = vmatprep.subr.mxu0 0.0
    %1246 = vmatpush1.xpose.msra.mxu0 %v1243
    %1247 = vmatprep.subr.mxu0 0.0
    %1248 = vmatpush1.xpose.msra.mxu0 0.0
    %1249 = vmatprep.subr.mxu0 0.0
    %1250 = vmatpush1.xpose.msra.mxu0 0.0
    %1251 = vmatprep.subr.mxu0 0.0
    %1252 = vmatpush1.xpose.msra.mxu0 0.0
    %1253 = vmatprep.subr.mxu0 0.0
    %1254 = vmatpush1.xpose.msra.mxu0 0.0
    %1255 = vmatprep.subr.mxu0 0.0
    %1256 = vmatpush1.xpose.msra.mxu0 0.0
    %1257 = vmatprep.subr.mxu0 0.0
    %1258 = vmatpush1.xpose.msra.mxu0 0.0
    %1259 = vmatprep.subr.mxu0 0.0
    %1260 = vmatpush1.xpose.msra.mxu0 0.0
    %1261 = vmatprep.subr.mxu0 0.0
    %1262 = vmatpush1.xpose.msra.mxu0 0.0
    %1263 = vmatprep.subr.mxu0 0.0
    %1264 = vmatpush1.xpose.msra.mxu0 0.0
    %1265 = vmatprep.subr.mxu0 0.0
    %1266 = vmatpush1.xpose.msra.mxu0 0.0
    %1267 = vmatprep.subr.mxu0 0.0
    %1268 = vmatpush1.xpose.msra.mxu0 0.0
    %1269 = vmatprep.subr.mxu0 0.0
    %1270 = vmatpush1.xpose.msra.mxu0 0.0
    %1271 = vmatprep.subr.mxu0 0.0
    %1272 = vmatpush1.xpose.msra.mxu0 0.0
    %1273 = vmatprep.subr.mxu0 0.0
    %1274 = vmatpush1.xpose.msra.mxu0 0.0
    %1275 = vmatprep.subr.mxu0 0.0
    %1276 = vmatpush1.xpose.msra.mxu0 0.0
    %1277 = vmatprep.subr.mxu0 0.0
    %1278 = vmatpush1.xpose.msra.mxu0 0.0
    %1279 = vmatprep.subr.mxu0 0.0
    %1280 = vmatpush1.xpose.msra.mxu0 0.0
    %1281 = vmatprep.subr.mxu0 0.0
    %1282 = vmatpush1.xpose.msra.mxu0 0.0
    %1283 = vmatprep.subr.mxu0 0.0
    %1284 = vmatpush1.xpose.msra.mxu0 0.0
    %1285 = vmatprep.subr.mxu0 0.0
    %1286 = vmatpush1.xpose.msra.mxu0 0.0
    %1287 = vmatprep.subr.mxu0 0.0
    %1288 = vmatpush1.xpose.msra.mxu0 0.0
    %1289 = vmatprep.subr.mxu0 0.0
    %1290 = vmatpush1.xpose.msra.mxu0 0.0
    %1291 = vmatprep.subr.mxu0 0.0
    %1292 = vmatpush1.xpose.msra.mxu0 0.0
    %1293 = vmatprep.subr.mxu0 0.0
    %1294 = vmatpush1.xpose.msra.mxu0 0.0
    %1295 = vmatprep.subr.mxu0 0.0
    %1296 = vmatpush1.xpose.msra.mxu0 0.0
    %1297 = vmatprep.subr.mxu0 0.0
    %1298 = vmatpush1.xpose.msra.mxu0 0.0
    %1299 = vmatprep.subr.mxu0 0.0
    %1300 = vmatpush1.xpose.msra.mxu0 0.0
    %1301 = vmatprep.subr.mxu0 0.0
    %1302 = vmatpush1.xpose.msra.mxu0 0.0
    %1303 = vmatprep.subr.mxu0 0.0
    %1304 = vmatpush1.xpose.msra.mxu0 0.0
    %1305 = vmatprep.subr.mxu0 0.0
    %1306 = vmatpush1.xpose.msra.mxu0 0.0
    %1307 = vmatprep.subr.mxu0 0.0
    %1308 = vmatpush1.xpose.msra.mxu0 0.0
    %1309 = vmatprep.mubr.f32.mxu0 0.0
    %1310 = vmatmul.mubr.f32.gmra.mrb[0].mxu0 %v1241
    %v1311 = vpop.f32.mrb[0].mxu0
    %v1312 = vadd.f32 0.0, %v1311
    %v1313 = vpop.f32.mrb[0].mxu0
    %1314 = vdwg.mxu0
    %v1315 = vsel %vm838, %v1234, -inf
    %1316 = vmax.xlane.f32.xlu0 %v1315
    %v1317 = vpop.xlane.xlu0 %1316
    %v1318 = vsel %vm838, %v1312, -inf
    %1319 = vmax.xlane.f32.xlu0 %v1318
    %v1320 = vpop.xlane.xlu0 %1319
    %v1321 = vsub.f32 %v1234, %v1317
    %v1322 = vsub.f32 %v1312, %v1320
    %v1323 = vmul.f32 %v1321, 1.442695
    %v1324 = vpow.pop %v1323
    %v1325 = vmul.f32 %v1322, 1.442695
    %v1326 = vpow.pop %v1325
    %v1327 = vsel %vm838, %v1324, 0.0
    %1328 = vadd.xlane.f32.xlu0 %v1327
    %v1329 = vpop.xlane.xlu0 %1328
    %v1330 = vsel %vm838, %v1326, 0.0
    %1331 = vadd.xlane.f32.xlu0 %v1330
    %v1332 = vpop.xlane.xlu0 %1331
    %v1333 = vrcp.pop %v1329
    %v1334 = vmul.f32 %v1324, %v1333
    %v1335 = vrcp.pop %v1332
    %v1336 = vmul.f32 %v1326, %v1335
    %v1339 = vsel %vm838, %v1334, 0
    %1341 = vmatprep.subr.mxu0 0.0
    %1342 = vmatpush1.msra.mxu0 %v1162
    %1343 = vmatprep.subr.mxu0 0.0
    %1344 = vmatpush1.msra.mxu0 0.0
    %1345 = vmatprep.subr.mxu0 0.0
    %1346 = vmatpush1.msra.mxu0 0.0
    %1347 = vmatprep.subr.mxu0 0.0
    %1348 = vmatpush1.msra.mxu0 0.0
    %1349 = vmatprep.subr.mxu0 0.0
    %1350 = vmatpush1.msra.mxu0 0.0
    %1351 = vmatprep.subr.mxu0 0.0
    %1352 = vmatpush1.msra.mxu0 0.0
    %1353 = vmatprep.subr.mxu0 0.0
    %1354 = vmatpush1.msra.mxu0 0.0
    %1355 = vmatprep.subr.mxu0 0.0
    %1356 = vmatpush1.msra.mxu0 0.0
    %1357 = vmatprep.subr.mxu0 0.0
    %1358 = vmatpush1.msra.mxu0 0.0
    %1359 = vmatprep.subr.mxu0 0.0
    %1360 = vmatpush1.msra.mxu0 0.0
    %1361 = vmatprep.subr.mxu0 0.0
    %1362 = vmatpush1.msra.mxu0 0.0
    %1363 = vmatprep.subr.mxu0 0.0
    %1364 = vmatpush1.msra.mxu0 0.0
    %1365 = vmatprep.subr.mxu0 0.0
    %1366 = vmatpush1.msra.mxu0 0.0
    %1367 = vmatprep.subr.mxu0 0.0
    %1368 = vmatpush1.msra.mxu0 0.0
    %1369 = vmatprep.subr.mxu0 0.0
    %1370 = vmatpush1.msra.mxu0 0.0
    %1371 = vmatprep.subr.mxu0 0.0
    %1372 = vmatpush1.msra.mxu0 0.0
    %1373 = vmatprep.subr.mxu0 0.0
    %1374 = vmatpush1.msra.mxu0 0.0
    %1375 = vmatprep.subr.mxu0 0.0
    %1376 = vmatpush1.msra.mxu0 0.0
    %1377 = vmatprep.subr.mxu0 0.0
    %1378 = vmatpush1.msra.mxu0 0.0
    %1379 = vmatprep.subr.mxu0 0.0
    %1380 = vmatpush1.msra.mxu0 0.0
    %1381 = vmatprep.subr.mxu0 0.0
    %1382 = vmatpush1.msra.mxu0 0.0
    %1383 = vmatprep.subr.mxu0 0.0
    %1384 = vmatpush1.msra.mxu0 0.0
    %1385 = vmatprep.subr.mxu0 0.0
    %1386 = vmatpush1.msra.mxu0 0.0
    %1387 = vmatprep.subr.mxu0 0.0
    %1388 = vmatpush1.msra.mxu0 0.0
    %1389 = vmatprep.subr.mxu0 0.0
    %1390 = vmatpush1.msra.mxu0 0.0
    %1391 = vmatprep.subr.mxu0 0.0
    %1392 = vmatpush1.msra.mxu0 0.0
    %1393 = vmatprep.subr.mxu0 0.0
    %1394 = vmatpush1.msra.mxu0 0.0
    %1395 = vmatprep.subr.mxu0 0.0
    %1396 = vmatpush1.msra.mxu0 0.0
    %1397 = vmatprep.subr.mxu0 0.0
    %1398 = vmatpush1.msra.mxu0 0.0
    %1399 = vmatprep.subr.mxu0 0.0
    %1400 = vmatpush1.msra.mxu0 0.0
    %1401 = vmatprep.subr.mxu0 0.0
    %1402 = vmatpush1.msra.mxu0 0.0
    %1403 = vmatprep.subr.mxu0 0.0
    %1404 = vmatpush1.msra.mxu0 0.0
    %1405 = vmatprep.mubr.f32.mxu0 0.0
    %1406 = vmatmul.mubr.f32.gmra.mrb[0].mxu0 %v1339
    %v1407 = vpop.f32.mrb[0].mxu0
    %v1408 = vadd.f32 0.0, %v1407
    %v1409 = vpop.f32.mrb[0].mxu0
    %1410 = vdwg.mxu0
    %v1413 = vsel %vm838, %v1336, 0
    %1415 = vmatprep.subr.mxu0 0.0
    %1416 = vmatpush1.msra.mxu0 %v1240
    %1417 = vmatprep.subr.mxu0 0.0
    %1418 = vmatpush1.msra.mxu0 0.0
    %1419 = vmatprep.subr.mxu0 0.0
    %1420 = vmatpush1.msra.mxu0 0.0
    %1421 = vmatprep.subr.mxu0 0.0
    %1422 = vmatpush1.msra.mxu0 0.0
    %1423 = vmatprep.subr.mxu0 0.0
    %1424 = vmatpush1.msra.mxu0 0.0
    %1425 = vmatprep.subr.mxu0 0.0
    %1426 = vmatpush1.msra.mxu0 0.0
    %1427 = vmatprep.subr.mxu0 0.0
    %1428 = vmatpush1.msra.mxu0 0.0
    %1429 = vmatprep.subr.mxu0 0.0
    %1430 = vmatpush1.msra.mxu0 0.0
    %1431 = vmatprep.subr.mxu0 0.0
    %1432 = vmatpush1.msra.mxu0 0.0
    %1433 = vmatprep.subr.mxu0 0.0
    %1434 = vmatpush1.msra.mxu0 0.0
    %1435 = vmatprep.subr.mxu0 0.0
    %1436 = vmatpush1.msra.mxu0 0.0
    %1437 = vmatprep.subr.mxu0 0.0
    %1438 = vmatpush1.msra.mxu0 0.0
    %1439 = vmatprep.subr.mxu0 0.0
    %1440 = vmatpush1.msra.mxu0 0.0
    %1441 = vmatprep.subr.mxu0 0.0
    %1442 = vmatpush1.msra.mxu0 0.0
    %1443 = vmatprep.subr.mxu0 0.0
    %1444 = vmatpush1.msra.mxu0 0.0
    %1445 = vmatprep.subr.mxu0 0.0
    %1446 = vmatpush1.msra.mxu0 0.0
    %1447 = vmatprep.subr.mxu0 0.0
    %1448 = vmatpush1.msra.mxu0 0.0
    %1449 = vmatprep.subr.mxu0 0.0
    %1450 = vmatpush1.msra.mxu0 0.0
    %1451 = vmatprep.subr.mxu0 0.0
    %1452 = vmatpush1.msra.mxu0 0.0
    %1453 = vmatprep.subr.mxu0 0.0
    %1454 = vmatpush1.msra.mxu0 0.0
    %1455 = vmatprep.subr.mxu0 0.0
    %1456 = vmatpush1.msra.mxu0 0.0
    %1457 = vmatprep.subr.mxu0 0.0
    %1458 = vmatpush1.msra.mxu0 0.0
    %1459 = vmatprep.subr.mxu0 0.0
    %1460 = vmatpush1.msra.mxu0 0.0
    %1461 = vmatprep.subr.mxu0 0.0
    %1462 = vmatpush1.msra.mxu0 0.0
    %1463 = vmatprep.subr.mxu0 0.0
    %1464 = vmatpush1.msra.mxu0 0.0
    %1465 = vmatprep.subr.mxu0 0.0
    %1466 = vmatpush1.msra.mxu0 0.0
    %1467 = vmatprep.subr.mxu0 0.0
    %1468 = vmatpush1.msra.mxu0 0.0
    %1469 = vmatprep.subr.mxu0 0.0
    %1470 = vmatpush1.msra.mxu0 0.0
    %1471 = vmatprep.subr.mxu0 0.0
    %1472 = vmatpush1.msra.mxu0 0.0
    %1473 = vmatprep.subr.mxu0 0.0
    %1474 = vmatpush1.msra.mxu0 0.0
    %1475 = vmatprep.subr.mxu0 0.0
    %1476 = vmatpush1.msra.mxu0 0.0
    %1477 = vmatprep.subr.mxu0 0.0
    %1478 = vmatpush1.msra.mxu0 0.0
    %1479 = vmatprep.mubr.f32.mxu0 0.0
    %1480 = vmatmul.mubr.f32.gmra.mrb[0].mxu0 %v1413
    %v1481 = vpop.f32.mrb[0].mxu0
    %v1482 = vadd.f32 0.0, %v1481
    %v1483 = vpop.f32.mrb[0].mxu0
    %1484 = vdwg.mxu0
    %1485 = vrot.lane.b32.xlu0 %v751, 112
    %v1486 = vpop.permute.xlu0 %1485
    %1487 = vrot.lane.b32.xlu0 %v830, 112
    %v1488 = vpop.permute.xlu0 %1487
    %v1489 = vsel %vm838, %v1486, 0
    %v1491 = vsel %vm838, %v1488, 0
    %1493 = vmatprep.subr.mxu0 0.0
    %1494 = vmatpush1.xpose.msra.mxu0 %v1491
    %1495 = vmatprep.subr.mxu0 0.0
    %1496 = vmatpush1.xpose.msra.mxu0 0.0
    %1497 = vmatprep.subr.mxu0 0.0
    %1498 = vmatpush1.xpose.msra.mxu0 0.0
    %1499 = vmatprep.subr.mxu0 0.0
    %1500 = vmatpush1.xpose.msra.mxu0 0.0
    %1501 = vmatprep.subr.mxu0 0.0
    %1502 = vmatpush1.xpose.msra.mxu0 0.0
    %1503 = vmatprep.subr.mxu0 0.0
    %1504 = vmatpush1.xpose.msra.mxu0 0.0
    %1505 = vmatprep.subr.mxu0 0.0
    %1506 = vmatpush1.xpose.msra.mxu0 0.0
    %1507 = vmatprep.subr.mxu0 0.0
    %1508 = vmatpush1.xpose.msra.mxu0 0.0
    %1509 = vmatprep.subr.mxu0 0.0
    %1510 = vmatpush1.xpose.msra.mxu0 0.0
    %1511 = vmatprep.subr.mxu0 0.0
    %1512 = vmatpush1.xpose.msra.mxu0 0.0
    %1513 = vmatprep.subr.mxu0 0.0
    %1514 = vmatpush1.xpose.msra.mxu0 0.0
    %1515 = vmatprep.subr.mxu0 0.0
    %1516 = vmatpush1.xpose.msra.mxu0 0.0
    %1517 = vmatprep.subr.mxu0 0.0
    %1518 = vmatpush1.xpose.msra.mxu0 0.0
    %1519 = vmatprep.subr.mxu0 0.0
    %1520 = vmatpush1.xpose.msra.mxu0 0.0
    %1521 = vmatprep.subr.mxu0 0.0
    %1522 = vmatpush1.xpose.msra.mxu0 0.0
    %1523 = vmatprep.subr.mxu0 0.0
    %1524 = vmatpush1.xpose.msra.mxu0 0.0
    %1525 = vmatprep.subr.mxu0 0.0
    %1526 = vmatpush1.xpose.msra.mxu0 0.0
    %1527 = vmatprep.subr.mxu0 0.0
    %1528 = vmatpush1.xpose.msra.mxu0 0.0
    %1529 = vmatprep.subr.mxu0 0.0
    %1530 = vmatpush1.xpose.msra.mxu0 0.0
    %1531 = vmatprep.subr.mxu0 0.0
    %1532 = vmatpush1.xpose.msra.mxu0 0.0
    %1533 = vmatprep.subr.mxu0 0.0
    %1534 = vmatpush1.xpose.msra.mxu0 0.0
    %1535 = vmatprep.subr.mxu0 0.0
    %1536 = vmatpush1.xpose.msra.mxu0 0.0
    %1537 = vmatprep.subr.mxu0 0.0
    %1538 = vmatpush1.xpose.msra.mxu0 0.0
    %1539 = vmatprep.subr.mxu0 0.0
    %1540 = vmatpush1.xpose.msra.mxu0 0.0
    %1541 = vmatprep.subr.mxu0 0.0
    %1542 = vmatpush1.xpose.msra.mxu0 0.0
    %1543 = vmatprep.subr.mxu0 0.0
    %1544 = vmatpush1.xpose.msra.mxu0 0.0
    %1545 = vmatprep.subr.mxu0 0.0
    %1546 = vmatpush1.xpose.msra.mxu0 0.0
    %1547 = vmatprep.subr.mxu0 0.0
    %1548 = vmatpush1.xpose.msra.mxu0 0.0
    %1549 = vmatprep.subr.mxu0 0.0
    %1550 = vmatpush1.xpose.msra.mxu0 0.0
    %1551 = vmatprep.subr.mxu0 0.0
    %1552 = vmatpush1.xpose.msra.mxu0 0.0
    %1553 = vmatprep.subr.mxu0 0.0
    %1554 = vmatpush1.xpose.msra.mxu0 0.0
    %1555 = vmatprep.subr.mxu0 0.0
    %1556 = vmatpush1.xpose.msra.mxu0 0.0
    %1557 = vmatprep.mubr.f32.mxu0 0.0
    %1558 = vmatmul.mubr.f32.gmra.mrb[0].mxu0 %v1489
    %v1559 = vpop.f32.mrb[0].mxu0
    %v1560 = vadd.f32 0.0, %v1559
    %v1561 = vpop.f32.mrb[0].mxu0
    %1562 = vdwg.mxu0
    %1563 = vrot.lane.b32.xlu0 %v756, 112
    %v1564 = vpop.permute.xlu0 %1563
    %1565 = vrot.lane.b32.xlu0 %v835, 112
    %v1566 = vpop.permute.xlu0 %1565
    %v1567 = vsel %vm838, %v1564, 0
    %v1569 = vsel %vm838, %v1566, 0
    %1571 = vmatprep.subr.mxu0 0.0
    %1572 = vmatpush1.xpose.msra.mxu0 %v1569
    %1573 = vmatprep.subr.mxu0 0.0
    %1574 = vmatpush1.xpose.msra.mxu0 0.0
    %1575 = vmatprep.subr.mxu0 0.0
    %1576 = vmatpush1.xpose.msra.mxu0 0.0
    %1577 = vmatprep.subr.mxu0 0.0
    %1578 = vmatpush1.xpose.msra.mxu0 0.0
    %1579 = vmatprep.subr.mxu0 0.0
    %1580 = vmatpush1.xpose.msra.mxu0 0.0
    %1581 = vmatprep.subr.mxu0 0.0
    %1582 = vmatpush1.xpose.msra.mxu0 0.0
    %1583 = vmatprep.subr.mxu0 0.0
    %1584 = vmatpush1.xpose.msra.mxu0 0.0
    %1585 = vmatprep.subr.mxu0 0.0
    %1586 = vmatpush1.xpose.msra.mxu0 0.0
    %1587 = vmatprep.subr.mxu0 0.0
    %1588 = vmatpush1.xpose.msra.mxu0 0.0
    %1589 = vmatprep.subr.mxu0 0.0
    %1590 = vmatpush1.xpose.msra.mxu0 0.0
    %1591 = vmatprep.subr.mxu0 0.0
    %1592 = vmatpush1.xpose.msra.mxu0 0.0
    %1593 = vmatprep.subr.mxu0 0.0
    %1594 = vmatpush1.xpose.msra.mxu0 0.0
    %1595 = vmatprep.subr.mxu0 0.0
    %1596 = vmatpush1.xpose.msra.mxu0 0.0
    %1597 = vmatprep.subr.mxu0 0.0
    %1598 = vmatpush1.xpose.msra.mxu0 0.0
    %1599 = vmatprep.subr.mxu0 0.0
    %1600 = vmatpush1.xpose.msra.mxu0 0.0
    %1601 = vmatprep.subr.mxu0 0.0
    %1602 = vmatpush1.xpose.msra.mxu0 0.0
    %1603 = vmatprep.subr.mxu0 0.0
    %1604 = vmatpush1.xpose.msra.mxu0 0.0
    %1605 = vmatprep.subr.mxu0 0.0
    %1606 = vmatpush1.xpose.msra.mxu0 0.0
    %1607 = vmatprep.subr.mxu0 0.0
    %1608 = vmatpush1.xpose.msra.mxu0 0.0
    %1609 = vmatprep.subr.mxu0 0.0
    %1610 = vmatpush1.xpose.msra.mxu0 0.0
    %1611 = vmatprep.subr.mxu0 0.0
    %1612 = vmatpush1.xpose.msra.mxu0 0.0
    %1613 = vmatprep.subr.mxu0 0.0
    %1614 = vmatpush1.xpose.msra.mxu0 0.0
    %1615 = vmatprep.subr.mxu0 0.0
    %1616 = vmatpush1.xpose.msra.mxu0 0.0
    %1617 = vmatprep.subr.mxu0 0.0
    %1618 = vmatpush1.xpose.msra.mxu0 0.0
    %1619 = vmatprep.subr.mxu0 0.0
    %1620 = vmatpush1.xpose.msra.mxu0 0.0
    %1621 = vmatprep.subr.mxu0 0.0
    %1622 = vmatpush1.xpose.msra.mxu0 0.0
    %1623 = vmatprep.subr.mxu0 0.0
    %1624 = vmatpush1.xpose.msra.mxu0 0.0
    %1625 = vmatprep.subr.mxu0 0.0
    %1626 = vmatpush1.xpose.msra.mxu0 0.0
    %1627 = vmatprep.subr.mxu0 0.0
    %1628 = vmatpush1.xpose.msra.mxu0 0.0
    %1629 = vmatprep.subr.mxu0 0.0
    %1630 = vmatpush1.xpose.msra.mxu0 0.0
    %1631 = vmatprep.subr.mxu0 0.0
    %1632 = vmatpush1.xpose.msra.mxu0 0.0
    %1633 = vmatprep.subr.mxu0 0.0
    %1634 = vmatpush1.xpose.msra.mxu0 0.0
    %1635 = vmatprep.mubr.f32.mxu0 0.0
    %1636 = vmatmul.mubr.f32.gmra.mrb[0].mxu0 %v1567
    %v1637 = vpop.f32.mrb[0].mxu0
    %v1638 = vadd.f32 0.0, %v1637
    %v1639 = vpop.f32.mrb[0].mxu0
    %1640 = vdwg.mxu0
    %v1641 = vsel %vm838, %v1560, -inf
    %1642 = vmax.xlane.f32.xlu0 %v1641
    %v1643 = vpop.xlane.xlu0 %1642
    %v1644 = vsel %vm838, %v1638, -inf
    %1645 = vmax.xlane.f32.xlu0 %v1644
    %v1646 = vpop.xlane.xlu0 %1645
    %v1647 = vsub.f32 %v1560, %v1643
    %v1648 = vsub.f32 %v1638, %v1646
    %v1649 = vmul.f32 %v1647, 1.442695
    %v1650 = vpow.pop %v1649
    %v1651 = vmul.f32 %v1648, 1.442695
    %v1652 = vpow.pop %v1651
    %v1653 = vsel %vm838, %v1650, 0.0
    %1654 = vadd.xlane.f32.xlu0 %v1653
    %v1655 = vpop.xlane.xlu0 %1654
    %v1656 = vsel %vm838, %v1652, 0.0
    %1657 = vadd.xlane.f32.xlu0 %v1656
    %v1658 = vpop.xlane.xlu0 %1657
    %v1659 = vrcp.pop %v1655
    %v1660 = vmul.f32 %v1650, %v1659
    %v1661 = vrcp.pop %v1658
    %v1662 = vmul.f32 %v1652, %v1661
    %v1665 = vsel %vm838, %v1660, 0
    %1667 = vmatprep.subr.mxu0 0.0
    %1668 = vmatpush1.msra.mxu0 %v1488
    %1669 = vmatprep.subr.mxu0 0.0
    %1670 = vmatpush1.msra.mxu0 0.0
    %1671 = vmatprep.subr.mxu0 0.0
    %1672 = vmatpush1.msra.mxu0 0.0
    %1673 = vmatprep.subr.mxu0 0.0
    %1674 = vmatpush1.msra.mxu0 0.0
    %1675 = vmatprep.subr.mxu0 0.0
    %1676 = vmatpush1.msra.mxu0 0.0
    %1677 = vmatprep.subr.mxu0 0.0
    %1678 = vmatpush1.msra.mxu0 0.0
    %1679 = vmatprep.subr.mxu0 0.0
    %1680 = vmatpush1.msra.mxu0 0.0
    %1681 = vmatprep.subr.mxu0 0.0
    %1682 = vmatpush1.msra.mxu0 0.0
    %1683 = vmatprep.subr.mxu0 0.0
    %1684 = vmatpush1.msra.mxu0 0.0
    %1685 = vmatprep.subr.mxu0 0.0
    %1686 = vmatpush1.msra.mxu0 0.0
    %1687 = vmatprep.subr.mxu0 0.0
    %1688 = vmatpush1.msra.mxu0 0.0
    %1689 = vmatprep.subr.mxu0 0.0
    %1690 = vmatpush1.msra.mxu0 0.0
    %1691 = vmatprep.subr.mxu0 0.0
    %1692 = vmatpush1.msra.mxu0 0.0
    %1693 = vmatprep.subr.mxu0 0.0
    %1694 = vmatpush1.msra.mxu0 0.0
    %1695 = vmatprep.subr.mxu0 0.0
    %1696 = vmatpush1.msra.mxu0 0.0
    %1697 = vmatprep.subr.mxu0 0.0
    %1698 = vmatpush1.msra.mxu0 0.0
    %1699 = vmatprep.subr.mxu0 0.0
    %1700 = vmatpush1.msra.mxu0 0.0
    %1701 = vmatprep.subr.mxu0 0.0
    %1702 = vmatpush1.msra.mxu0 0.0
    %1703 = vmatprep.subr.mxu0 0.0
    %1704 = vmatpush1.msra.mxu0 0.0
    %1705 = vmatprep.subr.mxu0 0.0
    %1706 = vmatpush1.msra.mxu0 0.0
    %1707 = vmatprep.subr.mxu0 0.0
    %1708 = vmatpush1.msra.mxu0 0.0
    %1709 = vmatprep.subr.mxu0 0.0
    %1710 = vmatpush1.msra.mxu0 0.0
    %1711 = vmatprep.subr.mxu0 0.0
    %1712 = vmatpush1.msra.mxu0 0.0
    %1713 = vmatprep.subr.mxu0 0.0
    %1714 = vmatpush1.msra.mxu0 0.0
    %1715 = vmatprep.subr.mxu0 0.0
    %1716 = vmatpush1.msra.mxu0 0.0
    %1717 = vmatprep.subr.mxu0 0.0
    %1718 = vmatpush1.msra.mxu0 0.0
    %1719 = vmatprep.subr.mxu0 0.0
    %1720 = vmatpush1.msra.mxu0 0.0
    %1721 = vmatprep.subr.mxu0 0.0
    %1722 = vmatpush1.msra.mxu0 0.0
    %1723 = vmatprep.subr.mxu0 0.0
    %1724 = vmatpush1.msra.mxu0 0.0
    %1725 = vmatprep.subr.mxu0 0.0
    %1726 = vmatpush1.msra.mxu0 0.0
    %1727 = vmatprep.subr.mxu0 0.0
    %1728 = vmatpush1.msra.mxu0 0.0
    %1729 = vmatprep.subr.mxu0 0.0
    %1730 = vmatpush1.msra.mxu0 0.0
    %1731 = vmatprep.mubr.f32.mxu0 0.0
    %1732 = vmatmul.mubr.f32.gmra.mrb[0].mxu0 %v1665
    %v1733 = vpop.f32.mrb[0].mxu0
    %v1734 = vadd.f32 0.0, %v1733
    %v1735 = vpop.f32.mrb[0].mxu0
    %1736 = vdwg.mxu0
    %v1739 = vsel %vm838, %v1662, 0
    %1741 = vmatprep.subr.mxu0 0.0
    %1742 = vmatpush1.msra.mxu0 %v1566
    %1743 = vmatprep.subr.mxu0 0.0
    %1744 = vmatpush1.msra.mxu0 0.0
    %1745 = vmatprep.subr.mxu0 0.0
    %1746 = vmatpush1.msra.mxu0 0.0
    %1747 = vmatprep.subr.mxu0 0.0
    %1748 = vmatpush1.msra.mxu0 0.0
    %1749 = vmatprep.subr.mxu0 0.0
    %1750 = vmatpush1.msra.mxu0 0.0
    %1751 = vmatprep.subr.mxu0 0.0
    %1752 = vmatpush1.msra.mxu0 0.0
    %1753 = vmatprep.subr.mxu0 0.0
    %1754 = vmatpush1.msra.mxu0 0.0
    %1755 = vmatprep.subr.mxu0 0.0
    %1756 = vmatpush1.msra.mxu0 0.0
    %1757 = vmatprep.subr.mxu0 0.0
    %1758 = vmatpush1.msra.mxu0 0.0
    %1759 = vmatprep.subr.mxu0 0.0
    %1760 = vmatpush1.msra.mxu0 0.0
    %1761 = vmatprep.subr.mxu0 0.0
    %1762 = vmatpush1.msra.mxu0 0.0
    %1763 = vmatprep.subr.mxu0 0.0
    %1764 = vmatpush1.msra.mxu0 0.0
    %1765 = vmatprep.subr.mxu0 0.0
    %1766 = vmatpush1.msra.mxu0 0.0
    %1767 = vmatprep.subr.mxu0 0.0
    %1768 = vmatpush1.msra.mxu0 0.0
    %1769 = vmatprep.subr.mxu0 0.0
    %1770 = vmatpush1.msra.mxu0 0.0
    %1771 = vmatprep.subr.mxu0 0.0
    %1772 = vmatpush1.msra.mxu0 0.0
    %1773 = vmatprep.subr.mxu0 0.0
    %1774 = vmatpush1.msra.mxu0 0.0
    %1775 = vmatprep.subr.mxu0 0.0
    %1776 = vmatpush1.msra.mxu0 0.0
    %1777 = vmatprep.subr.mxu0 0.0
    %1778 = vmatpush1.msra.mxu0 0.0
    %1779 = vmatprep.subr.mxu0 0.0
    %1780 = vmatpush1.msra.mxu0 0.0
    %1781 = vmatprep.subr.mxu0 0.0
    %1782 = vmatpush1.msra.mxu0 0.0
    %1783 = vmatprep.subr.mxu0 0.0
    %1784 = vmatpush1.msra.mxu0 0.0
    %1785 = vmatprep.subr.mxu0 0.0
    %1786 = vmatpush1.msra.mxu0 0.0
    %1787 = vmatprep.subr.mxu0 0.0
    %1788 = vmatpush1.msra.mxu0 0.0
    %1789 = vmatprep.subr.mxu0 0.0
    %1790 = vmatpush1.msra.mxu0 0.0
    %1791 = vmatprep.subr.mxu0 0.0
    %1792 = vmatpush1.msra.mxu0 0.0
    %1793 = vmatprep.subr.mxu0 0.0
    %1794 = vmatpush1.msra.mxu0 0.0
    %1795 = vmatprep.subr.mxu0 0.0
    %1796 = vmatpush1.msra.mxu0 0.0
    %1797 = vmatprep.subr.mxu0 0.0
    %1798 = vmatpush1.msra.mxu0 0.0
    %1799 = vmatprep.subr.mxu0 0.0
    %1800 = vmatpush1.msra.mxu0 0.0
    %1801 = vmatprep.subr.mxu0 0.0
    %1802 = vmatpush1.msra.mxu0 0.0
    %1803 = vmatprep.subr.mxu0 0.0
    %1804 = vmatpush1.msra.mxu0 0.0
    %1805 = vmatprep.mubr.f32.mxu0 0.0
    %1806 = vmatmul.mubr.f32.gmra.mrb[0].mxu0 %v1739
    %v1807 = vpop.f32.mrb[0].mxu0
    %v1808 = vadd.f32 0.0, %v1807
    %v1809 = vpop.f32.mrb[0].mxu0
    %1810 = vdwg.mxu0
    %1811 = vrot.lane.b32.xlu0 %v751, 104
    %v1812 = vpop.permute.xlu0 %1811
    %1813 = vrot.lane.b32.xlu0 %v830, 104
    %v1814 = vpop.permute.xlu0 %1813
    %v1815 = vsel %vm838, %v1812, 0
    %v1817 = vsel %vm838, %v1814, 0
    %1819 = vmatprep.subr.mxu0 0.0
    %1820 = vmatpush1.xpose.msra.mxu0 %v1817
    %1821 = vmatprep.subr.mxu0 0.0
    %1822 = vmatpush1.xpose.msra.mxu0 0.0
    %1823 = vmatprep.subr.mxu0 0.0
    %1824 = vmatpush1.xpose.msra.mxu0 0.0
    %1825 = vmatprep.subr.mxu0 0.0
    %1826 = vmatpush1.xpose.msra.mxu0 0.0
    %1827 = vmatprep.subr.mxu0 0.0
    %1828 = vmatpush1.xpose.msra.mxu0 0.0
    %1829 = vmatprep.subr.mxu0 0.0
    %1830 = vmatpush1.xpose.msra.mxu0 0.0
    %1831 = vmatprep.subr.mxu0 0.0
    %1832 = vmatpush1.xpose.msra.mxu0 0.0
    %1833 = vmatprep.subr.mxu0 0.0
    %1834 = vmatpush1.xpose.msra.mxu0 0.0
    %1835 = vmatprep.subr.mxu0 0.0
    %1836 = vmatpush1.xpose.msra.mxu0 0.0
    %1837 = vmatprep.subr.mxu0 0.0
    %1838 = vmatpush1.xpose.msra.mxu0 0.0
    %1839 = vmatprep.subr.mxu0 0.0
    %1840 = vmatpush1.xpose.msra.mxu0 0.0
    %1841 = vmatprep.subr.mxu0 0.0
    %1842 = vmatpush1.xpose.msra.mxu0 0.0
    %1843 = vmatprep.subr.mxu0 0.0
    %1844 = vmatpush1.xpose.msra.mxu0 0.0
    %1845 = vmatprep.subr.mxu0 0.0
    %1846 = vmatpush1.xpose.msra.mxu0 0.0
    %1847 = vmatprep.subr.mxu0 0.0
    %1848 = vmatpush1.xpose.msra.mxu0 0.0
    %1849 = vmatprep.subr.mxu0 0.0
    %1850 = vmatpush1.xpose.msra.mxu0 0.0
    %1851 = vmatprep.subr.mxu0 0.0
    %1852 = vmatpush1.xpose.msra.mxu0 0.0
    %1853 = vmatprep.subr.mxu0 0.0
    %1854 = vmatpush1.xpose.msra.mxu0 0.0
    %1855 = vmatprep.subr.mxu0 0.0
    %1856 = vmatpush1.xpose.msra.mxu0 0.0
    %1857 = vmatprep.subr.mxu0 0.0
    %1858 = vmatpush1.xpose.msra.mxu0 0.0
    %1859 = vmatprep.subr.mxu0 0.0
    %1860 = vmatpush1.xpose.msra.mxu0 0.0
    %1861 = vmatprep.subr.mxu0 0.0
    %1862 = vmatpush1.xpose.msra.mxu0 0.0
    %1863 = vmatprep.subr.mxu0 0.0
    %1864 = vmatpush1.xpose.msra.mxu0 0.0
    %1865 = vmatprep.subr.mxu0 0.0
    %1866 = vmatpush1.xpose.msra.mxu0 0.0
    %1867 = vmatprep.subr.mxu0 0.0
    %1868 = vmatpush1.xpose.msra.mxu0 0.0
    %1869 = vmatprep.subr.mxu0 0.0
    %1870 = vmatpush1.xpose.msra.mxu0 0.0
    %1871 = vmatprep.subr.mxu0 0.0
    %1872 = vmatpush1.xpose.msra.mxu0 0.0
    %1873 = vmatprep.subr.mxu0 0.0
    %1874 = vmatpush1.xpose.msra.mxu0 0.0
    %1875 = vmatprep.subr.mxu0 0.0
    %1876 = vmatpush1.xpose.msra.mxu0 0.0
    %1877 = vmatprep.subr.mxu0 0.0
    %1878 = vmatpush1.xpose.msra.mxu0 0.0
    %1879 = vmatprep.subr.mxu0 0.0
    %1880 = vmatpush1.xpose.msra.mxu0 0.0
    %1881 = vmatprep.subr.mxu0 0.0
    %1882 = vmatpush1.xpose.msra.mxu0 0.0
    %1883 = vmatprep.mubr.f32.mxu0 0.0
    %1884 = vmatmul.mubr.f32.gmra.mrb[0].mxu0 %v1815
    %v1885 = vpop.f32.mrb[0].mxu0
    %v1886 = vadd.f32 0.0, %v1885
    %v1887 = vpop.f32.mrb[0].mxu0
    %1888 = vdwg.mxu0
    %1889 = vrot.lane.b32.xlu0 %v756, 104
    %v1890 = vpop.permute.xlu0 %1889
    %1891 = vrot.lane.b32.xlu0 %v835, 104
    %v1892 = vpop.permute.xlu0 %1891
    %v1893 = vsel %vm838, %v1890, 0
    %v1895 = vsel %vm838, %v1892, 0
    %1897 = vmatprep.subr.mxu0 0.0
    %1898 = vmatpush1.xpose.msra.mxu0 %v1895
    %1899 = vmatprep.subr.mxu0 0.0
    %1900 = vmatpush1.xpose.msra.mxu0 0.0
    %1901 = vmatprep.subr.mxu0 0.0
    %1902 = vmatpush1.xpose.msra.mxu0 0.0
    %1903 = vmatprep.subr.mxu0 0.0
    %1904 = vmatpush1.xpose.msra.mxu0 0.0
    %1905 = vmatprep.subr.mxu0 0.0
    %1906 = vmatpush1.xpose.msra.mxu0 0.0
    %1907 = vmatprep.subr.mxu0 0.0
    %1908 = vmatpush1.xpose.msra.mxu0 0.0
    %1909 = vmatprep.subr.mxu0 0.0
    %1910 = vmatpush1.xpose.msra.mxu0 0.0
    %1911 = vmatprep.subr.mxu0 0.0
    %1912 = vmatpush1.xpose.msra.mxu0 0.0
    %1913 = vmatprep.subr.mxu0 0.0
    %1914 = vmatpush1.xpose.msra.mxu0 0.0
    %1915 = vmatprep.subr.mxu0 0.0
    %1916 = vmatpush1.xpose.msra.mxu0 0.0
    %1917 = vmatprep.subr.mxu0 0.0
    %1918 = vmatpush1.xpose.msra.mxu0 0.0
    %1919 = vmatprep.subr.mxu0 0.0
    %1920 = vmatpush1.xpose.msra.mxu0 0.0
    %1921 = vmatprep.subr.mxu0 0.0
    %1922 = vmatpush1.xpose.msra.mxu0 0.0
    %1923 = vmatprep.subr.mxu0 0.0
    %1924 = vmatpush1.xpose.msra.mxu0 0.0
    %1925 = vmatprep.subr.mxu0 0.0
    %1926 = vmatpush1.xpose.msra.mxu0 0.0
    %1927 = vmatprep.subr.mxu0 0.0
    %1928 = vmatpush1.xpose.msra.mxu0 0.0
    %1929 = vmatprep.subr.mxu0 0.0
    %1930 = vmatpush1.xpose.msra.mxu0 0.0
    %1931 = vmatprep.subr.mxu0 0.0
    %1932 = vmatpush1.xpose.msra.mxu0 0.0
    %1933 = vmatprep.subr.mxu0 0.0
    %1934 = vmatpush1.xpose.msra.mxu0 0.0
    %1935 = vmatprep.subr.mxu0 0.0
    %1936 = vmatpush1.xpose.msra.mxu0 0.0
    %1937 = vmatprep.subr.mxu0 0.0
    %1938 = vmatpush1.xpose.msra.mxu0 0.0
    %1939 = vmatprep.subr.mxu0 0.0
    %1940 = vmatpush1.xpose.msra.mxu0 0.0
    %1941 = vmatprep.subr.mxu0 0.0
    %1942 = vmatpush1.xpose.msra.mxu0 0.0
    %1943 = vmatprep.subr.mxu0 0.0
    %1944 = vmatpush1.xpose.msra.mxu0 0.0
    %1945 = vmatprep.subr.mxu0 0.0
    %1946 = vmatpush1.xpose.msra.mxu0 0.0
    %1947 = vmatprep.subr.mxu0 0.0
    %1948 = vmatpush1.xpose.msra.mxu0 0.0
    %1949 = vmatprep.subr.mxu0 0.0
    %1950 = vmatpush1.xpose.msra.mxu0 0.0
    %1951 = vmatprep.subr.mxu0 0.0
    %1952 = vmatpush1.xpose.msra.mxu0 0.0
    %1953 = vmatprep.subr.mxu0 0.0
    %1954 = vmatpush1.xpose.msra.mxu0 0.0
    %1955 = vmatprep.subr.mxu0 0.0
    %1956 = vmatpush1.xpose.msra.mxu0 0.0
    %1957 = vmatprep.subr.mxu0 0.0
    %1958 = vmatpush1.xpose.msra.mxu0 0.0
    %1959 = vmatprep.subr.mxu0 0.0
    %1960 = vmatpush1.xpose.msra.mxu0 0.0
    %1961 = vmatprep.mubr.f32.mxu0 0.0
    %1962 = vmatmul.mubr.f32.gmra.mrb[0].mxu0 %v1893
    %v1963 = vpop.f32.mrb[0].mxu0
    %v1964 = vadd.f32 0.0, %v1963
    %v1965 = vpop.f32.mrb[0].mxu0
    %1966 = vdwg.mxu0
    %v1967 = vsel %vm838, %v1886, -inf
    %1968 = vmax.xlane.f32.xlu0 %v1967
    %v1969 = vpop.xlane.xlu0 %1968
    %v1970 = vsel %vm838, %v1964, -inf
    %1971 = vmax.xlane.f32.xlu0 %v1970
    %v1972 = vpop.xlane.xlu0 %1971
    %v1973 = vsub.f32 %v1886, %v1969
    %v1974 = vsub.f32 %v1964, %v1972
    %v1975 = vmul.f32 %v1973, 1.442695
    %v1976 = vpow.pop %v1975
    %v1977 = vmul.f32 %v1974, 1.442695
    %v1978 = vpow.pop %v1977
    %v1979 = vsel %vm838, %v1976, 0.0
    %1980 = vadd.xlane.f32.xlu0 %v1979
    %v1981 = vpop.xlane.xlu0 %1980
    %v1982 = vsel %vm838, %v1978, 0.0
    %1983 = vadd.xlane.f32.xlu0 %v1982
    %v1984 = vpop.xlane.xlu0 %1983
    %v1985 = vrcp.pop %v1981
    %v1986 = vmul.f32 %v1976, %v1985
    %v1987 = vrcp.pop %v1984
    %v1988 = vmul.f32 %v1978, %v1987
    %v1991 = vsel %vm838, %v1986, 0
    %1993 = vmatprep.subr.mxu0 0.0
    %1994 = vmatpush1.msra.mxu0 %v1814
    %1995 = vmatprep.subr.mxu0 0.0
    %1996 = vmatpush1.msra.mxu0 0.0
    %1997 = vmatprep.subr.mxu0 0.0
    %1998 = vmatpush1.msra.mxu0 0.0
    %1999 = vmatprep.subr.mxu0 0.0
    %2000 = vmatpush1.msra.mxu0 0.0
    %2001 = vmatprep.subr.mxu0 0.0
    %2002 = vmatpush1.msra.mxu0 0.0
    %2003 = vmatprep.subr.mxu0 0.0
    %2004 = vmatpush1.msra.mxu0 0.0
    %2005 = vmatprep.subr.mxu0 0.0
    %2006 = vmatpush1.msra.mxu0 0.0
    %2007 = vmatprep.subr.mxu0 0.0
    %2008 = vmatpush1.msra.mxu0 0.0
    %2009 = vmatprep.subr.mxu0 0.0
    %2010 = vmatpush1.msra.mxu0 0.0
    %2011 = vmatprep.subr.mxu0 0.0
    %2012 = vmatpush1.msra.mxu0 0.0
    %2013 = vmatprep.subr.mxu0 0.0
    %2014 = vmatpush1.msra.mxu0 0.0
    %2015 = vmatprep.subr.mxu0 0.0
    %2016 = vmatpush1.msra.mxu0 0.0
    %2017 = vmatprep.subr.mxu0 0.0
    %2018 = vmatpush1.msra.mxu0 0.0
    %2019 = vmatprep.subr.mxu0 0.0
    %2020 = vmatpush1.msra.mxu0 0.0
    %2021 = vmatprep.subr.mxu0 0.0
    %2022 = vmatpush1.msra.mxu0 0.0
    %2023 = vmatprep.subr.mxu0 0.0
    %2024 = vmatpush1.msra.mxu0 0.0
    %2025 = vmatprep.subr.mxu0 0.0
    %2026 = vmatpush1.msra.mxu0 0.0
    %2027 = vmatprep.subr.mxu0 0.0
    %2028 = vmatpush1.msra.mxu0 0.0
    %2029 = vmatprep.subr.mxu0 0.0
    %2030 = vmatpush1.msra.mxu0 0.0
    %2031 = vmatprep.subr.mxu0 0.0
    %2032 = vmatpush1.msra.mxu0 0.0
    %2033 = vmatprep.subr.mxu0 0.0
    %2034 = vmatpush1.msra.mxu0 0.0
    %2035 = vmatprep.subr.mxu0 0.0
    %2036 = vmatpush1.msra.mxu0 0.0
    %2037 = vmatprep.subr.mxu0 0.0
    %2038 = vmatpush1.msra.mxu0 0.0
    %2039 = vmatprep.subr.mxu0 0.0
    %2040 = vmatpush1.msra.mxu0 0.0
    %2041 = vmatprep.subr.mxu0 0.0
    %2042 = vmatpush1.msra.mxu0 0.0
    %2043 = vmatprep.subr.mxu0 0.0
    %2044 = vmatpush1.msra.mxu0 0.0
    %2045 = vmatprep.subr.mxu0 0.0
    %2046 = vmatpush1.msra.mxu0 0.0
    %2047 = vmatprep.subr.mxu0 0.0
    %2048 = vmatpush1.msra.mxu0 0.0
    %2049 = vmatprep.subr.mxu0 0.0
    %2050 = vmatpush1.msra.mxu0 0.0
    %2051 = vmatprep.subr.mxu0 0.0
    %2052 = vmatpush1.msra.mxu0 0.0
    %2053 = vmatprep.subr.mxu0 0.0
    %2054 = vmatpush1.msra.mxu0 0.0
    %2055 = vmatprep.subr.mxu0 0.0
    %2056 = vmatpush1.msra.mxu0 0.0
    %2057 = vmatprep.mubr.f32.mxu0 0.0
    %2058 = vmatmul.mubr.f32.gmra.mrb[0].mxu0 %v1991
    %v2059 = vpop.f32.mrb[0].mxu0
    %v2060 = vadd.f32 0.0, %v2059
    %v2061 = vpop.f32.mrb[0].mxu0
    %2062 = vdwg.mxu0
    %v2065 = vsel %vm838, %v1988, 0
    %2067 = vmatprep.subr.mxu0 0.0
    %2068 = vmatpush1.msra.mxu0 %v1892
    %2069 = vmatprep.subr.mxu0 0.0
    %2070 = vmatpush1.msra.mxu0 0.0
    %2071 = vmatprep.subr.mxu0 0.0
    %2072 = vmatpush1.msra.mxu0 0.0
    %2073 = vmatprep.subr.mxu0 0.0
    %2074 = vmatpush1.msra.mxu0 0.0
    %2075 = vmatprep.subr.mxu0 0.0
    %2076 = vmatpush1.msra.mxu0 0.0
    %2077 = vmatprep.subr.mxu0 0.0
    %2078 = vmatpush1.msra.mxu0 0.0
    %2079 = vmatprep.subr.mxu0 0.0
    %2080 = vmatpush1.msra.mxu0 0.0
    %2081 = vmatprep.subr.mxu0 0.0
    %2082 = vmatpush1.msra.mxu0 0.0
    %2083 = vmatprep.subr.mxu0 0.0
    %2084 = vmatpush1.msra.mxu0 0.0
    %2085 = vmatprep.subr.mxu0 0.0
    %2086 = vmatpush1.msra.mxu0 0.0
    %2087 = vmatprep.subr.mxu0 0.0
    %2088 = vmatpush1.msra.mxu0 0.0
    %2089 = vmatprep.subr.mxu0 0.0
    %2090 = vmatpush1.msra.mxu0 0.0
    %2091 = vmatprep.subr.mxu0 0.0
    %2092 = vmatpush1.msra.mxu0 0.0
    %2093 = vmatprep.subr.mxu0 0.0
    %2094 = vmatpush1.msra.mxu0 0.0
    %2095 = vmatprep.subr.mxu0 0.0
    %2096 = vmatpush1.msra.mxu0 0.0
    %2097 = vmatprep.subr.mxu0 0.0
    %2098 = vmatpush1.msra.mxu0 0.0
    %2099 = vmatprep.subr.mxu0 0.0
    %2100 = vmatpush1.msra.mxu0 0.0
    %2101 = vmatprep.subr.mxu0 0.0
    %2102 = vmatpush1.msra.mxu0 0.0
    %2103 = vmatprep.subr.mxu0 0.0
    %2104 = vmatpush1.msra.mxu0 0.0
    %2105 = vmatprep.subr.mxu0 0.0
    %2106 = vmatpush1.msra.mxu0 0.0
    %2107 = vmatprep.subr.mxu0 0.0
    %2108 = vmatpush1.msra.mxu0 0.0
    %2109 = vmatprep.subr.mxu0 0.0
    %2110 = vmatpush1.msra.mxu0 0.0
    %2111 = vmatprep.subr.mxu0 0.0
    %2112 = vmatpush1.msra.mxu0 0.0
    %2113 = vmatprep.subr.mxu0 0.0
    %2114 = vmatpush1.msra.mxu0 0.0
    %2115 = vmatprep.subr.mxu0 0.0
    %2116 = vmatpush1.msra.mxu0 0.0
    %2117 = vmatprep.subr.mxu0 0.0
    %2118 = vmatpush1.msra.mxu0 0.0
    %2119 = vmatprep.subr.mxu0 0.0
    %2120 = vmatpush1.msra.mxu0 0.0
    %2121 = vmatprep.subr.mxu0 0.0
    %2122 = vmatpush1.msra.mxu0 0.0
    %2123 = vmatprep.subr.mxu0 0.0
    %2124 = vmatpush1.msra.mxu0 0.0
    %2125 = vmatprep.subr.mxu0 0.0
    %2126 = vmatpush1.msra.mxu0 0.0
    %2127 = vmatprep.subr.mxu0 0.0
    %2128 = vmatpush1.msra.mxu0 0.0
    %2129 = vmatprep.subr.mxu0 0.0
    %2130 = vmatpush1.msra.mxu0 0.0
    %2131 = vmatprep.mubr.f32.mxu0 0.0
    %2132 = vmatmul.mubr.f32.gmra.mrb[0].mxu0 %v2065
    %v2133 = vpop.f32.mrb[0].mxu0
    %v2134 = vadd.f32 0.0, %v2133
    %v2135 = vpop.f32.mrb[0].mxu0
    %2136 = vdwg.mxu0
    %2139 = vrot.lane.b32.xlu0 %v1408, 8
    %v2140 = vpop.permute.xlu0 %2139
    %2141 = vrot.lane.b32.xlu0 %v1482, 8
    %v2142 = vpop.permute.xlu0 %2141
    %2147 = vrot.lane.b32.xlu0 %v1734, 16
    %v2148 = vpop.permute.xlu0 %2147
    %2149 = vrot.lane.b32.xlu0 %v1808, 16
    %v2150 = vpop.permute.xlu0 %2149
    %2155 = vrot.lane.b32.xlu0 %v2060, 24
    %v2156 = vpop.permute.xlu0 %2155
    %2157 = vrot.lane.b32.xlu0 %v2134, 24
    %v2158 = vpop.permute.xlu0 %2157
    %v2161 = vsel %vm838, %v1083, %v2140
    %v2162 = vsel %vm838, %v1156, %v2142
    %vm2163 = vcmask 130048
    %v2164 = vsel %vm2163, %v2161, %v2148
    %v2165 = vsel %vm2163, %v2162, %v2150
    %vm2166 = vcmask 195584
    %v2167 = vsel %vm2166, %v2164, %v2156
    %v2168 = vsel %vm2166, %v2165, %v2158
    %v2169 = vlaneseq
    %v2170 = vshrl.u32 %v2169, 7
    %v2171 = vsub.s32 6, %v2170
    %v2172 = vrot.slane %v621, %v2171
    %v2174 = vsel %vm634, %v2167, 0
    %v2177 = vsel %vm634, %v2168, 0
    %2179 = vmatprep.subr.mxu0 0.0
    %2180 = vmatpush1.msra.mxu0 %v630
    %2181 = vmatprep.subr.mxu0 0.0
    %2182 = vmatpush1.msra.mxu0 %v631
    %2183 = vmatprep.subr.mxu0 0.0
    %2184 = vmatpush1.msra.mxu0 %v632
    %2185 = vmatprep.subr.mxu0 0.0
    %2186 = vmatpush1.msra.mxu0 %v633
    %2187 = vmatprep.subr.mxu0 0.0
    %2188 = vmatpush1.msra.mxu0 0.0
    %2189 = vmatprep.subr.mxu0 0.0
    %2190 = vmatpush1.msra.mxu0 0.0
    %2191 = vmatprep.subr.mxu0 0.0
    %2192 = vmatpush1.msra.mxu0 0.0
    %2193 = vmatprep.subr.mxu0 0.0
    %2194 = vmatpush1.msra.mxu0 0.0
    %2195 = vmatprep.subr.mxu0 0.0
    %2196 = vmatpush1.msra.mxu0 0.0
    %2197 = vmatprep.subr.mxu0 0.0
    %2198 = vmatpush1.msra.mxu0 0.0
    %2199 = vmatprep.subr.mxu0 0.0
    %2200 = vmatpush1.msra.mxu0 0.0
    %2201 = vmatprep.subr.mxu0 0.0
    %2202 = vmatpush1.msra.mxu0 0.0
    %2203 = vmatprep.subr.mxu0 0.0
    %2204 = vmatpush1.msra.mxu0 0.0
    %2205 = vmatprep.subr.mxu0 0.0
    %2206 = vmatpush1.msra.mxu0 0.0
    %2207 = vmatprep.subr.mxu0 0.0
    %2208 = vmatpush1.msra.mxu0 0.0
    %2209 = vmatprep.subr.mxu0 0.0
    %2210 = vmatpush1.msra.mxu0 0.0
    %2211 = vmatprep.subr.mxu0 0.0
    %2212 = vmatpush1.msra.mxu0 0.0
    %2213 = vmatprep.subr.mxu0 0.0
    %2214 = vmatpush1.msra.mxu0 0.0
    %2215 = vmatprep.subr.mxu0 0.0
    %2216 = vmatpush1.msra.mxu0 0.0
    %2217 = vmatprep.subr.mxu0 0.0
    %2218 = vmatpush1.msra.mxu0 0.0
    %2219 = vmatprep.subr.mxu0 0.0
    %2220 = vmatpush1.msra.mxu0 0.0
    %2221 = vmatprep.subr.mxu0 0.0
    %2222 = vmatpush1.msra.mxu0 0.0
    %2223 = vmatprep.subr.mxu0 0.0
    %2224 = vmatpush1.msra.mxu0 0.0
    %2225 = vmatprep.subr.mxu0 0.0
    %2226 = vmatpush1.msra.mxu0 0.0
    %2227 = vmatprep.subr.mxu0 0.0
    %2228 = vmatpush1.msra.mxu0 0.0
    %2229 = vmatprep.subr.mxu0 0.0
    %2230 = vmatpush1.msra.mxu0 0.0
    %2231 = vmatprep.subr.mxu0 0.0
    %2232 = vmatpush1.msra.mxu0 0.0
    %2233 = vmatprep.subr.mxu0 0.0
    %2234 = vmatpush1.msra.mxu0 0.0
    %2235 = vmatprep.subr.mxu0 0.0
    %2236 = vmatpush1.msra.mxu0 0.0
    %2237 = vmatprep.subr.mxu0 0.0
    %2238 = vmatpush1.msra.mxu0 0.0
    %2239 = vmatprep.subr.mxu0 0.0
    %2240 = vmatpush1.msra.mxu0 0.0
    %2241 = vmatprep.subr.mxu0 0.0
    %2242 = vmatpush1.msra.mxu0 0.0
    %2243 = vmatprep.mubr.f32.mxu0 0.0
    %2244 = vmatmul.mubr.f32.gmra.mrb[0].mxu0 %v2174
    %v2245 = vpop.f32.mrb[0].mxu0
    %v2246 = vadd.f32 %v2172, %v2245
    %v2247 = vpop.f32.mrb[0].mxu0
    %2248 = vmatprep.mubr.f32.mxu0 0.0
    %2249 = vmatmul.mubr.f32.gmra.mrb[0].mxu0 %v2177
    %v2250 = vpop.f32.mrb[0].mxu0
    %v2251 = vadd.f32 %v2172, %v2250
    %v2252 = vpop.f32.mrb[0].mxu0
    %2253 = vdwg.mxu0
    %v2254 = vsel %vm634, %v2246, 0.0
    %2255 = vadd.xlane.f32.xlu0 %v2254
    %v2256 = vpop.xlane.xlu0 %2255
    %v2257 = vsel %vm634, %v2251, 0.0
    %2258 = vadd.xlane.f32.xlu0 %v2257
    %v2259 = vpop.xlane.xlu0 %2258
    %v2260 = vmul.f32 %v2256, %v641
    %v2261 = vmul.f32 %v2259, %v641
    %v2262 = vsub.f32 %v2246, %v2260
    %v2263 = vsub.f32 %v2251, %v2261
    %v2264 = vmul.f32 %v2262, %v2262
    %v2265 = vmul.f32 %v2263, %v2263
    %v2266 = vsel %vm634, %v2264, 0.0
    %2267 = vadd.xlane.f32.xlu0 %v2266
    %v2268 = vpop.xlane.xlu0 %2267
    %v2269 = vsel %vm634, %v2265, 0.0
    %2270 = vadd.xlane.f32.xlu0 %v2269
    %v2271 = vpop.xlane.xlu0 %2270
    %v2272 = vmul.f32 %v2268, 0.032258064
    %v2273 = vmul.f32 %v2271, 0.032258064
    %v2274 = vrsqrt.pop %v2272
    %v2275 = vrsqrt.pop %v2273
    %v2276 = vmul.f32 %v2262, %v2274
    %v2277 = vmul.f32 %v2263, %v2275
    %v2278 = vadd.f32 %v2276, 1e-06
    %v2279 = vadd.f32 %v2277, 1e-06
    %v2280 = vlaneseq
    %v2281 = vshrl.u32 %v2280, 7
    %v2282 = vsub.s32 2, %v2281
    %v2283 = vrot.slane %v621, %v2282
    %v2284 = vmul.f32 %v2283, %v2278
    %v2285 = vmul.f32 %v2283, %v2279
    %v2286 = vlaneseq
    %v2287 = vshrl.u32 %v2286, 7
    %v2288 = vsub.s32 3, %v2287
    %v2289 = vrot.slane %v621, %v2288
    %v2290 = vadd.f32 %v2284, %v2289
    %v2291 = vadd.f32 %v2285, %v2289
    %s2292 = smul.u32 4, 4
    %s2293 = smul.u32 %s2292, 16
    %s2294 = sshll.u32 %s2293, 4
    %2295 = dma.done [#allocation4], %s2294
    %s2296 = smul.u32 4, 256
    %s2297 = smul.u32 %s2296, 1
    %s2298 = sshll.u32 %s2297, 4
    %2299 = dma.done %s322, %s2298
    %v2300 = vpack.c.bf16 %v2291, %v2290
    %v2301 = vld [vmem:[#allocation2] sm:$0xff]
    %v2302 = vld [vmem:[#allocation2 + $0x8] sm:$0xff]
    %v2303 = vld [vmem:[#allocation2 + $0x10] sm:$0xff]
    %v2304 = vld [vmem:[#allocation2 + $0x18] sm:$0xff]
    %v2305 = vld [vmem:[#allocation2 + $0x20] sm:$0xff]
    %v2306 = vld [vmem:[#allocation2 + $0x28] sm:$0xff]
    %v2307 = vld [vmem:[#allocation2 + $0x30] sm:$0xff]
    %v2308 = vld [vmem:[#allocation2 + $0x38] sm:$0xff]
    %v2309 = vld [vmem:[#allocation2 + $0x40] sm:$0xff]
    %v2310 = vld [vmem:[#allocation2 + $0x48] sm:$0xff]
    %v2311 = vld [vmem:[#allocation2 + $0x50] sm:$0xff]
    %v2312 = vld [vmem:[#allocation2 + $0x58] sm:$0xff]
    %v2313 = vld [vmem:[#allocation2 + $0x60] sm:$0xff]
    %v2314 = vld [vmem:[#allocation2 + $0x68] sm:$0xff]
    %v2315 = vld [vmem:[#allocation2 + $0x70] sm:$0xff]
    %v2316 = vld [vmem:[#allocation2 + $0x78] sm:$0xff]
    %v2317 = vld [vmem:[#allocation2 + $0x80] sm:$0xff]
    %v2318 = vld [vmem:[#allocation2 + $0x88] sm:$0xff]
    %v2319 = vld [vmem:[#allocation2 + $0x90] sm:$0xff]
    %v2320 = vld [vmem:[#allocation2 + $0x98] sm:$0xff]
    %v2321 = vld [vmem:[#allocation2 + $0xa0] sm:$0xff]
    %v2322 = vld [vmem:[#allocation2 + $0xa8] sm:$0xff]
    %v2323 = vld [vmem:[#allocation2 + $0xb0] sm:$0xff]
    %v2324 = vld [vmem:[#allocation2 + $0xb8] sm:$0xff]
    %v2325 = vld [vmem:[#allocation2 + $0xc0] sm:$0xff]
    %v2326 = vld [vmem:[#allocation2 + $0xc8] sm:$0xff]
    %v2327 = vld [vmem:[#allocation2 + $0xd0] sm:$0xff]
    %v2328 = vld [vmem:[#allocation2 + $0xd8] sm:$0xff]
    %v2329 = vld [vmem:[#allocation2 + $0xe0] sm:$0xff]
    %v2330 = vld [vmem:[#allocation2 + $0xe8] sm:$0xff]
    %v2331 = vld [vmem:[#allocation2 + $0xf0] sm:$0xff]
    %v2332 = vld [vmem:[#allocation2 + $0xf8] sm:$0xff]
    %v2333 = vld [vmem:[%s2] sm:$0xff]
    %v2334 = vld [vmem:[%s2 + $0x8] sm:$0xff]
    %v2337 = vlaneseq
    %v2338 = vshrl.u32 %v2337, 7
    %v2339 = vsub.s32 0, %v2338
    %v2340 = vrot.slane %v2333, %v2339
    %v2341 = vlaneseq
    %v2342 = vshrl.u32 %v2341, 7
    %v2343 = vsub.s32 1, %v2342
    %v2344 = vrot.slane %v2333, %v2343
    %v2345 = vlaneseq
    %v2346 = vshrl.u32 %v2345, 7
    %v2347 = vsub.s32 2, %v2346
    %v2348 = vrot.slane %v2333, %v2347
    %v2349 = vlaneseq
    %v2350 = vshrl.u32 %v2349, 7
    %v2351 = vsub.s32 3, %v2350
    %v2352 = vrot.slane %v2333, %v2351
    %v2353 = vlaneseq
    %v2354 = vshrl.u32 %v2353, 7
    %v2355 = vsub.s32 4, %v2354
    %v2356 = vrot.slane %v2333, %v2355
    %v2357 = vlaneseq
    %v2358 = vshrl.u32 %v2357, 7
    %v2359 = vsub.s32 5, %v2358
    %v2360 = vrot.slane %v2333, %v2359
    %v2361 = vlaneseq
    %v2362 = vshrl.u32 %v2361, 7
    %v2363 = vsub.s32 6, %v2362
    %v2364 = vrot.slane %v2333, %v2363
    %v2365 = vlaneseq
    %v2366 = vshrl.u32 %v2365, 7
    %v2367 = vsub.s32 7, %v2366
    %v2368 = vrot.slane %v2333, %v2367
    %v2369 = vlaneseq
    %v2370 = vshrl.u32 %v2369, 7
    %v2371 = vsub.s32 0, %v2370
    %v2372 = vrot.slane %v2334, %v2371
    %v2373 = vlaneseq
    %v2374 = vshrl.u32 %v2373, 7
    %v2375 = vsub.s32 1, %v2374
    %v2376 = vrot.slane %v2334, %v2375
    %v2377 = vlaneseq
    %v2378 = vshrl.u32 %v2377, 7
    %v2379 = vsub.s32 2, %v2378
    %v2380 = vrot.slane %v2334, %v2379
    %v2381 = vlaneseq
    %v2382 = vshrl.u32 %v2381, 7
    %v2383 = vsub.s32 3, %v2382
    %v2384 = vrot.slane %v2334, %v2383
    %v2385 = vlaneseq
    %v2386 = vshrl.u32 %v2385, 7
    %v2387 = vsub.s32 4, %v2386
    %v2388 = vrot.slane %v2334, %v2387
    %v2389 = vlaneseq
    %v2390 = vshrl.u32 %v2389, 7
    %v2391 = vsub.s32 5, %v2390
    %v2392 = vrot.slane %v2334, %v2391
    %v2393 = vlaneseq
    %v2394 = vshrl.u32 %v2393, 7
    %v2395 = vsub.s32 6, %v2394
    %v2396 = vrot.slane %v2334, %v2395
    %v2397 = vlaneseq
    %v2398 = vshrl.u32 %v2397, 7
    %v2399 = vsub.s32 7, %v2398
    %v2400 = vrot.slane %v2334, %v2399
    %v2418 = vsel %vm634, %v2300, 0
    %2420 = vmatprep.subr.bf16.mxu0 %v2302
    %2421 = vmatpush1.bf16.msra.mxu0 %v2301
    %2422 = vmatprep.subr.bf16.mxu0 %v2318
    %2423 = vmatpush1.bf16.msra.mxu0 %v2317
    %2424 = vmatprep.subr.bf16.mxu0 0
    %2425 = vmatpush1.bf16.msra.mxu0 0
    %2426 = vmatprep.subr.bf16.mxu0 0
    %2427 = vmatpush1.bf16.msra.mxu0 0
    %2428 = vmatprep.subr.bf16.mxu0 0
    %2429 = vmatpush1.bf16.msra.mxu0 0
    %2430 = vmatprep.subr.bf16.mxu0 0
    %2431 = vmatpush1.bf16.msra.mxu0 0
    %2432 = vmatprep.subr.bf16.mxu0 0
    %2433 = vmatpush1.bf16.msra.mxu0 0
    %2434 = vmatprep.subr.bf16.mxu0 0
    %2435 = vmatpush1.bf16.msra.mxu0 0
    %2436 = vmatprep.subr.bf16.mxu0 0
    %2437 = vmatpush1.bf16.msra.mxu0 0
    %2438 = vmatprep.subr.bf16.mxu0 0
    %2439 = vmatpush1.bf16.msra.mxu0 0
    %2440 = vmatprep.subr.bf16.mxu0 0
    %2441 = vmatpush1.bf16.msra.mxu0 0
    %2442 = vmatprep.subr.bf16.mxu0 0
    %2443 = vmatpush1.bf16.msra.mxu0 0
    %2444 = vmatprep.subr.bf16.mxu0 0
    %2445 = vmatpush1.bf16.msra.mxu0 0
    %2446 = vmatprep.subr.bf16.mxu0 0
    %2447 = vmatpush1.bf16.msra.mxu0 0
    %2448 = vmatprep.subr.bf16.mxu0 0
    %2449 = vmatpush1.bf16.msra.mxu0 0
    %2450 = vmatprep.subr.bf16.mxu0 0
    %2451 = vmatpush1.bf16.msra.mxu0 0
    %2452 = vmatprep.mubr.bf16.mxu0 0
    %2453 = vmatmul.mubr.bf16.gmra.mrb[0].mxu0 %v2418
    %v2454 = vpop.f32.mrb[0].mxu0
    %v2455 = vadd.f32 %v2340, %v2454
    %v2456 = vpop.f32.mrb[0].mxu0
    %v2457 = vadd.f32 %v2344, %v2456
    %v2458 = vpop.f32.mrb[0].mxu0
    %v2459 = vadd.f32 %v2340, %v2458
    %v2460 = vpop.f32.mrb[0].mxu0
    %v2461 = vadd.f32 %v2344, %v2460
    %2462 = vdwg.mxu0
    %2463 = vmatprep.subr.bf16.mxu0 %v2304
    %2464 = vmatpush1.bf16.msra.mxu0 %v2303
    %2465 = vmatprep.subr.bf16.mxu0 %v2320
    %2466 = vmatpush1.bf16.msra.mxu0 %v2319
    %2467 = vmatprep.subr.bf16.mxu0 0
    %2468 = vmatpush1.bf16.msra.mxu0 0
    %2469 = vmatprep.subr.bf16.mxu0 0
    %2470 = vmatpush1.bf16.msra.mxu0 0
    %2471 = vmatprep.subr.bf16.mxu0 0
    %2472 = vmatpush1.bf16.msra.mxu0 0
    %2473 = vmatprep.subr.bf16.mxu0 0
    %2474 = vmatpush1.bf16.msra.mxu0 0
    %2475 = vmatprep.subr.bf16.mxu0 0
    %2476 = vmatpush1.bf16.msra.mxu0 0
    %2477 = vmatprep.subr.bf16.mxu0 0
    %2478 = vmatpush1.bf16.msra.mxu0 0
    %2479 = vmatprep.subr.bf16.mxu0 0
    %2480 = vmatpush1.bf16.msra.mxu0 0
    %2481 = vmatprep.subr.bf16.mxu0 0
    %2482 = vmatpush1.bf16.msra.mxu0 0
    %2483 = vmatprep.subr.bf16.mxu0 0
    %2484 = vmatpush1.bf16.msra.mxu0 0
    %2485 = vmatprep.subr.bf16.mxu0 0
    %2486 = vmatpush1.bf16.msra.mxu0 0
    %2487 = vmatprep.subr.bf16.mxu0 0
    %2488 = vmatpush1.bf16.msra.mxu0 0
    %2489 = vmatprep.subr.bf16.mxu0 0
    %2490 = vmatpush1.bf16.msra.mxu0 0
    %2491 = vmatprep.subr.bf16.mxu0 0
    %2492 = vmatpush1.bf16.msra.mxu0 0
    %2493 = vmatprep.subr.bf16.mxu0 0
    %2494 = vmatpush1.bf16.msra.mxu0 0
    %2495 = vmatprep.mubr.bf16.mxu0 0
    %2496 = vmatmul.mubr.bf16.gmra.mrb[0].mxu0 %v2418
    %v2497 = vpop.f32.mrb[0].mxu0
    %v2498 = vadd.f32 %v2348, %v2497
    %v2499 = vpop.f32.mrb[0].mxu0
    %v2500 = vadd.f32 %v2352, %v2499
    %v2501 = vpop.f32.mrb[0].mxu0
    %v2502 = vadd.f32 %v2348, %v2501
    %v2503 = vpop.f32.mrb[0].mxu0
    %v2504 = vadd.f32 %v2352, %v2503
    %2505 = vdwg.mxu0
    %2506 = vmatprep.subr.bf16.mxu0 %v2306
    %2507 = vmatpush1.bf16.msra.mxu0 %v2305
    %2508 = vmatprep.subr.bf16.mxu0 %v2322
    %2509 = vmatpush1.bf16.msra.mxu0 %v2321
    %2510 = vmatprep.subr.bf16.mxu0 0
    %2511 = vmatpush1.bf16.msra.mxu0 0
    %2512 = vmatprep.subr.bf16.mxu0 0
    %2513 = vmatpush1.bf16.msra.mxu0 0
    %2514 = vmatprep.subr.bf16.mxu0 0
    %2515 = vmatpush1.bf16.msra.mxu0 0
    %2516 = vmatprep.subr.bf16.mxu0 0
    %2517 = vmatpush1.bf16.msra.mxu0 0
    %2518 = vmatprep.subr.bf16.mxu0 0
    %2519 = vmatpush1.bf16.msra.mxu0 0
    %2520 = vmatprep.subr.bf16.mxu0 0
    %2521 = vmatpush1.bf16.msra.mxu0 0
    %2522 = vmatprep.subr.bf16.mxu0 0
    %2523 = vmatpush1.bf16.msra.mxu0 0
    %2524 = vmatprep.subr.bf16.mxu0 0
    %2525 = vmatpush1.bf16.msra.mxu0 0
    %2526 = vmatprep.subr.bf16.mxu0 0
    %2527 = vmatpush1.bf16.msra.mxu0 0
    %2528 = vmatprep.subr.bf16.mxu0 0
    %2529 = vmatpush1.bf16.msra.mxu0 0
    %2530 = vmatprep.subr.bf16.mxu0 0
    %2531 = vmatpush1.bf16.msra.mxu0 0
    %2532 = vmatprep.subr.bf16.mxu0 0
    %2533 = vmatpush1.bf16.msra.mxu0 0
    %2534 = vmatprep.subr.bf16.mxu0 0
    %2535 = vmatpush1.bf16.msra.mxu0 0
    %2536 = vmatprep.subr.bf16.mxu0 0
    %2537 = vmatpush1.bf16.msra.mxu0 0
    %2538 = vmatprep.mubr.bf16.mxu0 0
    %2539 = vmatmul.mubr.bf16.gmra.mrb[0].mxu0 %v2418
    %v2540 = vpop.f32.mrb[0].mxu0
    %v2541 = vadd.f32 %v2356, %v2540
    %v2542 = vpop.f32.mrb[0].mxu0
    %v2543 = vadd.f32 %v2360, %v2542
    %v2544 = vpop.f32.mrb[0].mxu0
    %v2545 = vadd.f32 %v2356, %v2544
    %v2546 = vpop.f32.mrb[0].mxu0
    %v2547 = vadd.f32 %v2360, %v2546
    %2548 = vdwg.mxu0
    %2549 = vmatprep.subr.bf16.mxu0 %v2308
    %2550 = vmatpush1.bf16.msra.mxu0 %v2307
    %2551 = vmatprep.subr.bf16.mxu0 %v2324
    %2552 = vmatpush1.bf16.msra.mxu0 %v2323
    %2553 = vmatprep.subr.bf16.mxu0 0
    %2554 = vmatpush1.bf16.msra.mxu0 0
    %2555 = vmatprep.subr.bf16.mxu0 0
    %2556 = vmatpush1.bf16.msra.mxu0 0
    %2557 = vmatprep.subr.bf16.mxu0 0
    %2558 = vmatpush1.bf16.msra.mxu0 0
    %2559 = vmatprep.subr.bf16.mxu0 0
    %2560 = vmatpush1.bf16.msra.mxu0 0
    %2561 = vmatprep.subr.bf16.mxu0 0
    %2562 = vmatpush1.bf16.msra.mxu0 0
    %2563 = vmatprep.subr.bf16.mxu0 0
    %2564 = vmatpush1.bf16.msra.mxu0 0
    %2565 = vmatprep.subr.bf16.mxu0 0
    %2566 = vmatpush1.bf16.msra.mxu0 0
    %2567 = vmatprep.subr.bf16.mxu0 0
    %2568 = vmatpush1.bf16.msra.mxu0 0
    %2569 = vmatprep.subr.bf16.mxu0 0
    %2570 = vmatpush1.bf16.msra.mxu0 0
    %2571 = vmatprep.subr.bf16.mxu0 0
    %2572 = vmatpush1.bf16.msra.mxu0 0
    %2573 = vmatprep.subr.bf16.mxu0 0
    %2574 = vmatpush1.bf16.msra.mxu0 0
    %2575 = vmatprep.subr.bf16.mxu0 0
    %2576 = vmatpush1.bf16.msra.mxu0 0
    %2577 = vmatprep.subr.bf16.mxu0 0
    %2578 = vmatpush1.bf16.msra.mxu0 0
    %2579 = vmatprep.subr.bf16.mxu0 0
    %2580 = vmatpush1.bf16.msra.mxu0 0
    %2581 = vmatprep.mubr.bf16.mxu0 0
    %2582 = vmatmul.mubr.bf16.gmra.mrb[0].mxu0 %v2418
    %v2583 = vpop.f32.mrb[0].mxu0
    %v2584 = vadd.f32 %v2364, %v2583
    %v2585 = vpop.f32.mrb[0].mxu0
    %v2586 = vadd.f32 %v2368, %v2585
    %v2587 = vpop.f32.mrb[0].mxu0
    %v2588 = vadd.f32 %v2364, %v2587
    %v2589 = vpop.f32.mrb[0].mxu0
    %v2590 = vadd.f32 %v2368, %v2589
    %2591 = vdwg.mxu0
    %2592 = vmatprep.subr.bf16.mxu0 %v2310
    %2593 = vmatpush1.bf16.msra.mxu0 %v2309
    %2594 = vmatprep.subr.bf16.mxu0 %v2326
    %2595 = vmatpush1.bf16.msra.mxu0 %v2325
    %2596 = vmatprep.subr.bf16.mxu0 0
    %2597 = vmatpush1.bf16.msra.mxu0 0
    %2598 = vmatprep.subr.bf16.mxu0 0
    %2599 = vmatpush1.bf16.msra.mxu0 0
    %2600 = vmatprep.subr.bf16.mxu0 0
    %2601 = vmatpush1.bf16.msra.mxu0 0
    %2602 = vmatprep.subr.bf16.mxu0 0
    %2603 = vmatpush1.bf16.msra.mxu0 0
    %2604 = vmatprep.subr.bf16.mxu0 0
    %2605 = vmatpush1.bf16.msra.mxu0 0
    %2606 = vmatprep.subr.bf16.mxu0 0
    %2607 = vmatpush1.bf16.msra.mxu0 0
    %2608 = vmatprep.subr.bf16.mxu0 0
    %2609 = vmatpush1.bf16.msra.mxu0 0
    %2610 = vmatprep.subr.bf16.mxu0 0
    %2611 = vmatpush1.bf16.msra.mxu0 0
    %2612 = vmatprep.subr.bf16.mxu0 0
    %2613 = vmatpush1.bf16.msra.mxu0 0
    %2614 = vmatprep.subr.bf16.mxu0 0
    %2615 = vmatpush1.bf16.msra.mxu0 0
    %2616 = vmatprep.subr.bf16.mxu0 0
    %2617 = vmatpush1.bf16.msra.mxu0 0
    %2618 = vmatprep.subr.bf16.mxu0 0
    %2619 = vmatpush1.bf16.msra.mxu0 0
    %2620 = vmatprep.subr.bf16.mxu0 0
    %2621 = vmatpush1.bf16.msra.mxu0 0
    %2622 = vmatprep.subr.bf16.mxu0 0
    %2623 = vmatpush1.bf16.msra.mxu0 0
    %2624 = vmatprep.mubr.bf16.mxu0 0
    %2625 = vmatmul.mubr.bf16.gmra.mrb[0].mxu0 %v2418
    %v2626 = vpop.f32.mrb[0].mxu0
    %v2627 = vadd.f32 %v2372, %v2626
    %v2628 = vpop.f32.mrb[0].mxu0
    %v2629 = vadd.f32 %v2376, %v2628
    %v2630 = vpop.f32.mrb[0].mxu0
    %v2631 = vadd.f32 %v2372, %v2630
    %v2632 = vpop.f32.mrb[0].mxu0
    %v2633 = vadd.f32 %v2376, %v2632
    %2634 = vdwg.mxu0
    %2635 = vmatprep.subr.bf16.mxu0 %v2312
    %2636 = vmatpush1.bf16.msra.mxu0 %v2311
    %2637 = vmatprep.subr.bf16.mxu0 %v2328
    %2638 = vmatpush1.bf16.msra.mxu0 %v2327
    %2639 = vmatprep.subr.bf16.mxu0 0
    %2640 = vmatpush1.bf16.msra.mxu0 0
    %2641 = vmatprep.subr.bf16.mxu0 0
    %2642 = vmatpush1.bf16.msra.mxu0 0
    %2643 = vmatprep.subr.bf16.mxu0 0
    %2644 = vmatpush1.bf16.msra.mxu0 0
    %2645 = vmatprep.subr.bf16.mxu0 0
    %2646 = vmatpush1.bf16.msra.mxu0 0
    %2647 = vmatprep.subr.bf16.mxu0 0
    %2648 = vmatpush1.bf16.msra.mxu0 0
    %2649 = vmatprep.subr.bf16.mxu0 0
    %2650 = vmatpush1.bf16.msra.mxu0 0
    %2651 = vmatprep.subr.bf16.mxu0 0
    %2652 = vmatpush1.bf16.msra.mxu0 0
    %2653 = vmatprep.subr.bf16.mxu0 0
    %2654 = vmatpush1.bf16.msra.mxu0 0
    %2655 = vmatprep.subr.bf16.mxu0 0
    %2656 = vmatpush1.bf16.msra.mxu0 0
    %2657 = vmatprep.subr.bf16.mxu0 0
    %2658 = vmatpush1.bf16.msra.mxu0 0
    %2659 = vmatprep.subr.bf16.mxu0 0
    %2660 = vmatpush1.bf16.msra.mxu0 0
    %2661 = vmatprep.subr.bf16.mxu0 0
    %2662 = vmatpush1.bf16.msra.mxu0 0
    %2663 = vmatprep.subr.bf16.mxu0 0
    %2664 = vmatpush1.bf16.msra.mxu0 0
    %2665 = vmatprep.subr.bf16.mxu0 0
    %2666 = vmatpush1.bf16.msra.mxu0 0
    %2667 = vmatprep.mubr.bf16.mxu0 0
    %2668 = vmatmul.mubr.bf16.gmra.mrb[0].mxu0 %v2418
    %v2669 = vpop.f32.mrb[0].mxu0
    %v2670 = vadd.f32 %v2380, %v2669
    %v2671 = vpop.f32.mrb[0].mxu0
    %v2672 = vadd.f32 %v2384, %v2671
    %v2673 = vpop.f32.mrb[0].mxu0
    %v2674 = vadd.f32 %v2380, %v2673
    %v2675 = vpop.f32.mrb[0].mxu0
    %v2676 = vadd.f32 %v2384, %v2675
    %2677 = vdwg.mxu0
    %2678 = vmatprep.subr.bf16.mxu0 %v2314
    %2679 = vmatpush1.bf16.msra.mxu0 %v2313
    %2680 = vmatprep.subr.bf16.mxu0 %v2330
    %2681 = vmatpush1.bf16.msra.mxu0 %v2329
    %2682 = vmatprep.subr.bf16.mxu0 0
    %2683 = vmatpush1.bf16.msra.mxu0 0
    %2684 = vmatprep.subr.bf16.mxu0 0
    %2685 = vmatpush1.bf16.msra.mxu0 0
    %2686 = vmatprep.subr.bf16.mxu0 0
    %2687 = vmatpush1.bf16.msra.mxu0 0
    %2688 = vmatprep.subr.bf16.mxu0 0
    %2689 = vmatpush1.bf16.msra.mxu0 0
    %2690 = vmatprep.subr.bf16.mxu0 0
    %2691 = vmatpush1.bf16.msra.mxu0 0
    %2692 = vmatprep.subr.bf16.mxu0 0
    %2693 = vmatpush1.bf16.msra.mxu0 0
    %2694 = vmatprep.subr.bf16.mxu0 0
    %2695 = vmatpush1.bf16.msra.mxu0 0
    %2696 = vmatprep.subr.bf16.mxu0 0
    %2697 = vmatpush1.bf16.msra.mxu0 0
    %2698 = vmatprep.subr.bf16.mxu0 0
    %2699 = vmatpush1.bf16.msra.mxu0 0
    %2700 = vmatprep.subr.bf16.mxu0 0
    %2701 = vmatpush1.bf16.msra.mxu0 0
    %2702 = vmatprep.subr.bf16.mxu0 0
    %2703 = vmatpush1.bf16.msra.mxu0 0
    %2704 = vmatprep.subr.bf16.mxu0 0
    %2705 = vmatpush1.bf16.msra.mxu0 0
    %2706 = vmatprep.subr.bf16.mxu0 0
    %2707 = vmatpush1.bf16.msra.mxu0 0
    %2708 = vmatprep.subr.bf16.mxu0 0
    %2709 = vmatpush1.bf16.msra.mxu0 0
    %2710 = vmatprep.mubr.bf16.mxu0 0
    %2711 = vmatmul.mubr.bf16.gmra.mrb[0].mxu0 %v2418
    %v2712 = vpop.f32.mrb[0].mxu0
    %v2713 = vadd.f32 %v2388, %v2712
    %v2714 = vpop.f32.mrb[0].mxu0
    %v2715 = vadd.f32 %v2392, %v2714
    %v2716 = vpop.f32.mrb[0].mxu0
    %v2717 = vadd.f32 %v2388, %v2716
    %v2718 = vpop.f32.mrb[0].mxu0
    %v2719 = vadd.f32 %v2392, %v2718
    %2720 = vdwg.mxu0
    %2721 = vmatprep.subr.bf16.mxu0 %v2316
    %2722 = vmatpush1.bf16.msra.mxu0 %v2315
    %2723 = vmatprep.subr.bf16.mxu0 %v2332
    %2724 = vmatpush1.bf16.msra.mxu0 %v2331
    %2725 = vmatprep.subr.bf16.mxu0 0
    %2726 = vmatpush1.bf16.msra.mxu0 0
    %2727 = vmatprep.subr.bf16.mxu0 0
    %2728 = vmatpush1.bf16.msra.mxu0 0
    %2729 = vmatprep.subr.bf16.mxu0 0
    %2730 = vmatpush1.bf16.msra.mxu0 0
    %2731 = vmatprep.subr.bf16.mxu0 0
    %2732 = vmatpush1.bf16.msra.mxu0 0
    %2733 = vmatprep.subr.bf16.mxu0 0
    %2734 = vmatpush1.bf16.msra.mxu0 0
    %2735 = vmatprep.subr.bf16.mxu0 0
    %2736 = vmatpush1.bf16.msra.mxu0 0
    %2737 = vmatprep.subr.bf16.mxu0 0
    %2738 = vmatpush1.bf16.msra.mxu0 0
    %2739 = vmatprep.subr.bf16.mxu0 0
    %2740 = vmatpush1.bf16.msra.mxu0 0
    %2741 = vmatprep.subr.bf16.mxu0 0
    %2742 = vmatpush1.bf16.msra.mxu0 0
    %2743 = vmatprep.subr.bf16.mxu0 0
    %2744 = vmatpush1.bf16.msra.mxu0 0
    %2745 = vmatprep.subr.bf16.mxu0 0
    %2746 = vmatpush1.bf16.msra.mxu0 0
    %2747 = vmatprep.subr.bf16.mxu0 0
    %2748 = vmatpush1.bf16.msra.mxu0 0
    %2749 = vmatprep.subr.bf16.mxu0 0
    %2750 = vmatpush1.bf16.msra.mxu0 0
    %2751 = vmatprep.subr.bf16.mxu0 0
    %2752 = vmatpush1.bf16.msra.mxu0 0
    %2753 = vmatprep.mubr.bf16.mxu0 0
    %2754 = vmatmul.mubr.bf16.gmra.mrb[0].mxu0 %v2418
    %v2755 = vpop.f32.mrb[0].mxu0
    %v2756 = vadd.f32 %v2396, %v2755
    %v2757 = vpop.f32.mrb[0].mxu0
    %v2758 = vadd.f32 %v2400, %v2757
    %v2759 = vpop.f32.mrb[0].mxu0
    %v2760 = vadd.f32 %v2396, %v2759
    %v2761 = vpop.f32.mrb[0].mxu0
    %v2762 = vadd.f32 %v2400, %v2761
    %2763 = vdwg.mxu0
    %v2764 = vmax.f32 %v2455, 0.0
    %v2765 = vmax.f32 %v2457, 0.0
    %v2766 = vmax.f32 %v2498, 0.0
    %v2767 = vmax.f32 %v2500, 0.0
    %v2768 = vmax.f32 %v2541, 0.0
    %v2769 = vmax.f32 %v2543, 0.0
    %v2770 = vmax.f32 %v2584, 0.0
    %v2771 = vmax.f32 %v2586, 0.0
    %v2772 = vmax.f32 %v2627, 0.0
    %v2773 = vmax.f32 %v2629, 0.0
    %v2774 = vmax.f32 %v2670, 0.0
    %v2775 = vmax.f32 %v2672, 0.0
    %v2776 = vmax.f32 %v2713, 0.0
    %v2777 = vmax.f32 %v2715, 0.0
    %v2778 = vmax.f32 %v2756, 0.0
    %v2779 = vmax.f32 %v2758, 0.0
    %v2780 = vmax.f32 %v2459, 0.0
    %v2781 = vmax.f32 %v2461, 0.0
    %v2782 = vmax.f32 %v2502, 0.0
    %v2783 = vmax.f32 %v2504, 0.0
    %v2784 = vmax.f32 %v2545, 0.0
    %v2785 = vmax.f32 %v2547, 0.0
    %v2786 = vmax.f32 %v2588, 0.0
    %v2787 = vmax.f32 %v2590, 0.0
    %v2788 = vmax.f32 %v2631, 0.0
    %v2789 = vmax.f32 %v2633, 0.0
    %v2790 = vmax.f32 %v2674, 0.0
    %v2791 = vmax.f32 %v2676, 0.0
    %v2792 = vmax.f32 %v2717, 0.0
    %v2793 = vmax.f32 %v2719, 0.0
    %v2794 = vmax.f32 %v2760, 0.0
    %v2795 = vmax.f32 %v2762, 0.0
    %v2796 = vpack.c.bf16 %v2780, %v2764
    %v2797 = vpack.c.bf16 %v2781, %v2765
    %v2798 = vpack.c.bf16 %v2782, %v2766
    %v2799 = vpack.c.bf16 %v2783, %v2767
    %v2800 = vpack.c.bf16 %v2784, %v2768
    %v2801 = vpack.c.bf16 %v2785, %v2769
    %v2802 = vpack.c.bf16 %v2786, %v2770
    %v2803 = vpack.c.bf16 %v2787, %v2771
    %v2804 = vpack.c.bf16 %v2788, %v2772
    %v2805 = vpack.c.bf16 %v2789, %v2773
    %v2806 = vpack.c.bf16 %v2790, %v2774
    %v2807 = vpack.c.bf16 %v2791, %v2775
    %v2808 = vpack.c.bf16 %v2792, %v2776
    %v2809 = vpack.c.bf16 %v2793, %v2777
    %v2810 = vpack.c.bf16 %v2794, %v2778
    %v2811 = vpack.c.bf16 %v2795, %v2779
    %v2812 = vld [vmem:[#allocation3] sm:$0xff]
    %v2813 = vld [vmem:[#allocation3 + $0x8] sm:$0xff]
    %v2814 = vld [vmem:[#allocation3 + $0x10] sm:$0xff]
    %v2815 = vld [vmem:[#allocation3 + $0x18] sm:$0xff]
    %v2816 = vld [vmem:[#allocation3 + $0x20] sm:$0xff]
    %v2817 = vld [vmem:[#allocation3 + $0x28] sm:$0xff]
    %v2818 = vld [vmem:[#allocation3 + $0x30] sm:$0xff]
    %v2819 = vld [vmem:[#allocation3 + $0x38] sm:$0xff]
    %v2820 = vld [vmem:[#allocation3 + $0x40] sm:$0xff]
    %v2821 = vld [vmem:[#allocation3 + $0x48] sm:$0xff]
    %v2822 = vld [vmem:[#allocation3 + $0x50] sm:$0xff]
    %v2823 = vld [vmem:[#allocation3 + $0x58] sm:$0xff]
    %v2824 = vld [vmem:[#allocation3 + $0x60] sm:$0xff]
    %v2825 = vld [vmem:[#allocation3 + $0x68] sm:$0xff]
    %v2826 = vld [vmem:[#allocation3 + $0x70] sm:$0xff]
    %v2827 = vld [vmem:[#allocation3 + $0x78] sm:$0xff]
    %v2828 = vld [vmem:[#allocation3 + $0x80] sm:$0xff]
    %v2829 = vld [vmem:[#allocation3 + $0x88] sm:$0xff]
    %v2830 = vld [vmem:[#allocation3 + $0x90] sm:$0xff]
    %v2831 = vld [vmem:[#allocation3 + $0x98] sm:$0xff]
    %v2832 = vld [vmem:[#allocation3 + $0xa0] sm:$0xff]
    %v2833 = vld [vmem:[#allocation3 + $0xa8] sm:$0xff]
    %v2834 = vld [vmem:[#allocation3 + $0xb0] sm:$0xff]
    %v2835 = vld [vmem:[#allocation3 + $0xb8] sm:$0xff]
    %v2836 = vld [vmem:[#allocation3 + $0xc0] sm:$0xff]
    %v2837 = vld [vmem:[#allocation3 + $0xc8] sm:$0xff]
    %v2838 = vld [vmem:[#allocation3 + $0xd0] sm:$0xff]
    %v2839 = vld [vmem:[#allocation3 + $0xd8] sm:$0xff]
    %v2840 = vld [vmem:[#allocation3 + $0xe0] sm:$0xff]
    %v2841 = vld [vmem:[#allocation3 + $0xe8] sm:$0xff]
    %v2842 = vld [vmem:[#allocation3 + $0xf0] sm:$0xff]
    %v2843 = vld [vmem:[#allocation3 + $0xf8] sm:$0xff]
    %v2844 = vld [vmem:[#allocation3 + $0x100] sm:$0xff]
    %v2845 = vld [vmem:[#allocation3 + $0x108] sm:$0xff]
    %v2846 = vld [vmem:[#allocation3 + $0x110] sm:$0xff]
    %v2847 = vld [vmem:[#allocation3 + $0x118] sm:$0xff]
    %v2848 = vld [vmem:[#allocation3 + $0x120] sm:$0xff]
    %v2849 = vld [vmem:[#allocation3 + $0x128] sm:$0xff]
    %v2850 = vld [vmem:[#allocation3 + $0x130] sm:$0xff]
    %v2851 = vld [vmem:[#allocation3 + $0x138] sm:$0xff]
    %v2852 = vld [vmem:[#allocation3 + $0x140] sm:$0xff]
    %v2853 = vld [vmem:[#allocation3 + $0x148] sm:$0xff]
    %v2854 = vld [vmem:[#allocation3 + $0x150] sm:$0xff]
    %v2855 = vld [vmem:[#allocation3 + $0x158] sm:$0xff]
    %v2856 = vld [vmem:[#allocation3 + $0x160] sm:$0xff]
    %v2857 = vld [vmem:[#allocation3 + $0x168] sm:$0xff]
    %v2858 = vld [vmem:[#allocation3 + $0x170] sm:$0xff]
    %v2859 = vld [vmem:[#allocation3 + $0x178] sm:$0xff]
    %v2860 = vld [vmem:[#allocation3 + $0x180] sm:$0xff]
    %v2861 = vld [vmem:[#allocation3 + $0x188] sm:$0xff]
    %v2862 = vld [vmem:[#allocation3 + $0x190] sm:$0xff]
    %v2863 = vld [vmem:[#allocation3 + $0x198] sm:$0xff]
    %v2864 = vld [vmem:[#allocation3 + $0x1a0] sm:$0xff]
    %v2865 = vld [vmem:[#allocation3 + $0x1a8] sm:$0xff]
    %v2866 = vld [vmem:[#allocation3 + $0x1b0] sm:$0xff]
    %v2867 = vld [vmem:[#allocation3 + $0x1b8] sm:$0xff]
    %v2868 = vld [vmem:[#allocation3 + $0x1c0] sm:$0xff]
    %v2869 = vld [vmem:[#allocation3 + $0x1c8] sm:$0xff]
    %v2870 = vld [vmem:[#allocation3 + $0x1d0] sm:$0xff]
    %v2871 = vld [vmem:[#allocation3 + $0x1d8] sm:$0xff]
    %v2872 = vld [vmem:[#allocation3 + $0x1e0] sm:$0xff]
    %v2873 = vld [vmem:[#allocation3 + $0x1e8] sm:$0xff]
    %v2874 = vld [vmem:[#allocation3 + $0x1f0] sm:$0xff]
    %v2875 = vld [vmem:[#allocation3 + $0x1f8] sm:$0xff]
    %v2876 = vld [vmem:[#allocation3 + $0x200] sm:$0xff]
    %v2877 = vld [vmem:[#allocation3 + $0x208] sm:$0xff]
    %v2878 = vld [vmem:[#allocation3 + $0x210] sm:$0xff]
    %v2879 = vld [vmem:[#allocation3 + $0x218] sm:$0xff]
    %v2880 = vld [vmem:[#allocation3 + $0x220] sm:$0xff]
    %v2881 = vld [vmem:[#allocation3 + $0x228] sm:$0xff]
    %v2882 = vld [vmem:[#allocation3 + $0x230] sm:$0xff]
    %v2883 = vld [vmem:[#allocation3 + $0x238] sm:$0xff]
    %v2884 = vld [vmem:[#allocation3 + $0x240] sm:$0xff]
    %v2885 = vld [vmem:[#allocation3 + $0x248] sm:$0xff]
    %v2886 = vld [vmem:[#allocation3 + $0x250] sm:$0xff]
    %v2887 = vld [vmem:[#allocation3 + $0x258] sm:$0xff]
    %v2888 = vld [vmem:[#allocation3 + $0x260] sm:$0xff]
    %v2889 = vld [vmem:[#allocation3 + $0x268] sm:$0xff]
    %v2890 = vld [vmem:[#allocation3 + $0x270] sm:$0xff]
    %v2891 = vld [vmem:[#allocation3 + $0x278] sm:$0xff]
    %v2892 = vld [vmem:[#allocation3 + $0x280] sm:$0xff]
    %v2893 = vld [vmem:[#allocation3 + $0x288] sm:$0xff]
    %v2894 = vld [vmem:[#allocation3 + $0x290] sm:$0xff]
    %v2895 = vld [vmem:[#allocation3 + $0x298] sm:$0xff]
    %v2896 = vld [vmem:[#allocation3 + $0x2a0] sm:$0xff]
    %v2897 = vld [vmem:[#allocation3 + $0x2a8] sm:$0xff]
    %v2898 = vld [vmem:[#allocation3 + $0x2b0] sm:$0xff]
    %v2899 = vld [vmem:[#allocation3 + $0x2b8] sm:$0xff]
    %v2900 = vld [vmem:[#allocation3 + $0x2c0] sm:$0xff]
    %v2901 = vld [vmem:[#allocation3 + $0x2c8] sm:$0xff]
    %v2902 = vld [vmem:[#allocation3 + $0x2d0] sm:$0xff]
    %v2903 = vld [vmem:[#allocation3 + $0x2d8] sm:$0xff]
    %v2904 = vld [vmem:[#allocation3 + $0x2e0] sm:$0xff]
    %v2905 = vld [vmem:[#allocation3 + $0x2e8] sm:$0xff]
    %v2906 = vld [vmem:[#allocation3 + $0x2f0] sm:$0xff]
    %v2907 = vld [vmem:[#allocation3 + $0x2f8] sm:$0xff]
    %v2908 = vld [vmem:[#allocation3 + $0x300] sm:$0xff]
    %v2909 = vld [vmem:[#allocation3 + $0x308] sm:$0xff]
    %v2910 = vld [vmem:[#allocation3 + $0x310] sm:$0xff]
    %v2911 = vld [vmem:[#allocation3 + $0x318] sm:$0xff]
    %v2912 = vld [vmem:[#allocation3 + $0x320] sm:$0xff]
    %v2913 = vld [vmem:[#allocation3 + $0x328] sm:$0xff]
    %v2914 = vld [vmem:[#allocation3 + $0x330] sm:$0xff]
    %v2915 = vld [vmem:[#allocation3 + $0x338] sm:$0xff]
    %v2916 = vld [vmem:[#allocation3 + $0x340] sm:$0xff]
    %v2917 = vld [vmem:[#allocation3 + $0x348] sm:$0xff]
    %v2918 = vld [vmem:[#allocation3 + $0x350] sm:$0xff]
    %v2919 = vld [vmem:[#allocation3 + $0x358] sm:$0xff]
    %v2920 = vld [vmem:[#allocation3 + $0x360] sm:$0xff]
    %v2921 = vld [vmem:[#allocation3 + $0x368] sm:$0xff]
    %v2922 = vld [vmem:[#allocation3 + $0x370] sm:$0xff]
    %v2923 = vld [vmem:[#allocation3 + $0x378] sm:$0xff]
    %v2924 = vld [vmem:[#allocation3 + $0x380] sm:$0xff]
    %v2925 = vld [vmem:[#allocation3 + $0x388] sm:$0xff]
    %v2926 = vld [vmem:[#allocation3 + $0x390] sm:$0xff]
    %v2927 = vld [vmem:[#allocation3 + $0x398] sm:$0xff]
    %v2928 = vld [vmem:[#allocation3 + $0x3a0] sm:$0xff]
    %v2929 = vld [vmem:[#allocation3 + $0x3a8] sm:$0xff]
    %v2930 = vld [vmem:[#allocation3 + $0x3b0] sm:$0xff]
    %v2931 = vld [vmem:[#allocation3 + $0x3b8] sm:$0xff]
    %v2932 = vld [vmem:[#allocation3 + $0x3c0] sm:$0xff]
    %v2933 = vld [vmem:[#allocation3 + $0x3c8] sm:$0xff]
    %v2934 = vld [vmem:[#allocation3 + $0x3d0] sm:$0xff]
    %v2935 = vld [vmem:[#allocation3 + $0x3d8] sm:$0xff]
    %v2936 = vld [vmem:[#allocation3 + $0x3e0] sm:$0xff]
    %v2937 = vld [vmem:[#allocation3 + $0x3e8] sm:$0xff]
    %v2938 = vld [vmem:[#allocation3 + $0x3f0] sm:$0xff]
    %v2939 = vld [vmem:[#allocation3 + $0x3f8] sm:$0xff]
    %v2940 = vlaneseq
    %v2941 = vshrl.u32 %v2940, 7
    %v2942 = vsub.s32 7, %v2941
    %v2943 = vrot.slane %v621, %v2942
    %2944 = vmatprep.subr.bf16.mxu0 0
    %2945 = vmatpush1.bf16.msra.mxu0 %v2812
    %2946 = vmatprep.subr.bf16.mxu0 0
    %2947 = vmatpush1.bf16.msra.mxu0 %v2813
    %2948 = vmatprep.subr.bf16.mxu0 0
    %2949 = vmatpush1.bf16.msra.mxu0 %v2814
    %2950 = vmatprep.subr.bf16.mxu0 0
    %2951 = vmatpush1.bf16.msra.mxu0 %v2815
    %2952 = vmatprep.subr.bf16.mxu0 0
    %2953 = vmatpush1.bf16.msra.mxu0 %v2816
    %2954 = vmatprep.subr.bf16.mxu0 0
    %2955 = vmatpush1.bf16.msra.mxu0 %v2817
    %2956 = vmatprep.subr.bf16.mxu0 0
    %2957 = vmatpush1.bf16.msra.mxu0 %v2818
    %2958 = vmatprep.subr.bf16.mxu0 0
    %2959 = vmatpush1.bf16.msra.mxu0 %v2819
    %2960 = vmatprep.subr.bf16.mxu0 0
    %2961 = vmatpush1.bf16.msra.mxu0 %v2820
    %2962 = vmatprep.subr.bf16.mxu0 0
    %2963 = vmatpush1.bf16.msra.mxu0 %v2821
    %2964 = vmatprep.subr.bf16.mxu0 0
    %2965 = vmatpush1.bf16.msra.mxu0 %v2822
    %2966 = vmatprep.subr.bf16.mxu0 0
    %2967 = vmatpush1.bf16.msra.mxu0 %v2823
    %2968 = vmatprep.subr.bf16.mxu0 0
    %2969 = vmatpush1.bf16.msra.mxu0 %v2824
    %2970 = vmatprep.subr.bf16.mxu0 0
    %2971 = vmatpush1.bf16.msra.mxu0 %v2825
    %2972 = vmatprep.subr.bf16.mxu0 0
    %2973 = vmatpush1.bf16.msra.mxu0 %v2826
    %2974 = vmatprep.subr.bf16.mxu0 0
    %2975 = vmatpush1.bf16.msra.mxu0 %v2827
    %2976 = vmatprep.mubr.bf16.mxu0 %v2797
    %2977 = vmatmul.mubr.bf16.gmra.mrb[0].mxu0 %v2796
    %v2978 = vpop.f32.mrb[0].mxu0
    %v2979 = vadd.f32 %v2943, %v2978
    %v2980 = vpop.f32.mrb[0].mxu0
    %v2981 = vpop.f32.mrb[0].mxu0
    %v2982 = vadd.f32 %v2943, %v2981
    %v2983 = vpop.f32.mrb[0].mxu0
    %2984 = vdwg.mxu0
    %2985 = vmatprep.subr.bf16.mxu0 0
    %2986 = vmatpush1.bf16.msra.mxu0 %v2828
    %2987 = vmatprep.subr.bf16.mxu0 0
    %2988 = vmatpush1.bf16.msra.mxu0 %v2829
    %2989 = vmatprep.subr.bf16.mxu0 0
    %2990 = vmatpush1.bf16.msra.mxu0 %v2830
    %2991 = vmatprep.subr.bf16.mxu0 0
    %2992 = vmatpush1.bf16.msra.mxu0 %v2831
    %2993 = vmatprep.subr.bf16.mxu0 0
    %2994 = vmatpush1.bf16.msra.mxu0 %v2832
    %2995 = vmatprep.subr.bf16.mxu0 0
    %2996 = vmatpush1.bf16.msra.mxu0 %v2833
    %2997 = vmatprep.subr.bf16.mxu0 0
    %2998 = vmatpush1.bf16.msra.mxu0 %v2834
    %2999 = vmatprep.subr.bf16.mxu0 0
    %3000 = vmatpush1.bf16.msra.mxu0 %v2835
    %3001 = vmatprep.subr.bf16.mxu0 0
    %3002 = vmatpush1.bf16.msra.mxu0 %v2836
    %3003 = vmatprep.subr.bf16.mxu0 0
    %3004 = vmatpush1.bf16.msra.mxu0 %v2837
    %3005 = vmatprep.subr.bf16.mxu0 0
    %3006 = vmatpush1.bf16.msra.mxu0 %v2838
    %3007 = vmatprep.subr.bf16.mxu0 0
    %3008 = vmatpush1.bf16.msra.mxu0 %v2839
    %3009 = vmatprep.subr.bf16.mxu0 0
    %3010 = vmatpush1.bf16.msra.mxu0 %v2840
    %3011 = vmatprep.subr.bf16.mxu0 0
    %3012 = vmatpush1.bf16.msra.mxu0 %v2841
    %3013 = vmatprep.subr.bf16.mxu0 0
    %3014 = vmatpush1.bf16.msra.mxu0 %v2842
    %3015 = vmatprep.subr.bf16.mxu0 0
    %3016 = vmatpush1.bf16.msra.mxu0 %v2843
    %3017 = vmatprep.mubr.bf16.mxu0 %v2799
    %3018 = vmatmul.mubr.bf16.gmra.mrb[0].mxu0 %v2798
    %v3019 = vpop.f32.mrb[0].mxu0
    %v3020 = vadd.f32 %v2979, %v3019
    %v3021 = vpop.f32.mrb[0].mxu0
    %v3022 = vpop.f32.mrb[0].mxu0
    %v3023 = vadd.f32 %v2982, %v3022
    %v3024 = vpop.f32.mrb[0].mxu0
    %3025 = vdwg.mxu0
    %3026 = vmatprep.subr.bf16.mxu0 0
    %3027 = vmatpush1.bf16.msra.mxu0 %v2844
    %3028 = vmatprep.subr.bf16.mxu0 0
    %3029 = vmatpush1.bf16.msra.mxu0 %v2845
    %3030 = vmatprep.subr.bf16.mxu0 0
    %3031 = vmatpush1.bf16.msra.mxu0 %v2846
    %3032 = vmatprep.subr.bf16.mxu0 0
    %3033 = vmatpush1.bf16.msra.mxu0 %v2847
    %3034 = vmatprep.subr.bf16.mxu0 0
    %3035 = vmatpush1.bf16.msra.mxu0 %v2848
    %3036 = vmatprep.subr.bf16.mxu0 0
    %3037 = vmatpush1.bf16.msra.mxu0 %v2849
    %3038 = vmatprep.subr.bf16.mxu0 0
    %3039 = vmatpush1.bf16.msra.mxu0 %v2850
    %3040 = vmatprep.subr.bf16.mxu0 0
    %3041 = vmatpush1.bf16.msra.mxu0 %v2851
    %3042 = vmatprep.subr.bf16.mxu0 0
    %3043 = vmatpush1.bf16.msra.mxu0 %v2852
    %3044 = vmatprep.subr.bf16.mxu0 0
    %3045 = vmatpush1.bf16.msra.mxu0 %v2853
    %3046 = vmatprep.subr.bf16.mxu0 0
    %3047 = vmatpush1.bf16.msra.mxu0 %v2854
    %3048 = vmatprep.subr.bf16.mxu0 0
    %3049 = vmatpush1.bf16.msra.mxu0 %v2855
    %3050 = vmatprep.subr.bf16.mxu0 0
    %3051 = vmatpush1.bf16.msra.mxu0 %v2856
    %3052 = vmatprep.subr.bf16.mxu0 0
    %3053 = vmatpush1.bf16.msra.mxu0 %v2857
    %3054 = vmatprep.subr.bf16.mxu0 0
    %3055 = vmatpush1.bf16.msra.mxu0 %v2858
    %3056 = vmatprep.subr.bf16.mxu0 0
    %3057 = vmatpush1.bf16.msra.mxu0 %v2859
    %3058 = vmatprep.mubr.bf16.mxu0 %v2801
    %3059 = vmatmul.mubr.bf16.gmra.mrb[0].mxu0 %v2800
    %v3060 = vpop.f32.mrb[0].mxu0
    %v3061 = vadd.f32 %v3020, %v3060
    %v3062 = vpop.f32.mrb[0].mxu0
    %v3063 = vpop.f32.mrb[0].mxu0
    %v3064 = vadd.f32 %v3023, %v3063
    %v3065 = vpop.f32.mrb[0].mxu0
    %3066 = vdwg.mxu0
    %3067 = vmatprep.subr.bf16.mxu0 0
    %3068 = vmatpush1.bf16.msra.mxu0 %v2860
    %3069 = vmatprep.subr.bf16.mxu0 0
    %3070 = vmatpush1.bf16.msra.mxu0 %v2861
    %3071 = vmatprep.subr.bf16.mxu0 0
    %3072 = vmatpush1.bf16.msra.mxu0 %v2862
    %3073 = vmatprep.subr.bf16.mxu0 0
    %3074 = vmatpush1.bf16.msra.mxu0 %v2863
    %3075 = vmatprep.subr.bf16.mxu0 0
    %3076 = vmatpush1.bf16.msra.mxu0 %v2864
    %3077 = vmatprep.subr.bf16.mxu0 0
    %3078 = vmatpush1.bf16.msra.mxu0 %v2865
    %3079 = vmatprep.subr.bf16.mxu0 0
    %3080 = vmatpush1.bf16.msra.mxu0 %v2866
    %3081 = vmatprep.subr.bf16.mxu0 0
    %3082 = vmatpush1.bf16.msra.mxu0 %v2867
    %3083 = vmatprep.subr.bf16.mxu0 0
    %3084 = vmatpush1.bf16.msra.mxu0 %v2868
    %3085 = vmatprep.subr.bf16.mxu0 0
    %3086 = vmatpush1.bf16.msra.mxu0 %v2869
    %3087 = vmatprep.subr.bf16.mxu0 0
    %3088 = vmatpush1.bf16.msra.mxu0 %v2870
    %3089 = vmatprep.subr.bf16.mxu0 0
    %3090 = vmatpush1.bf16.msra.mxu0 %v2871
    %3091 = vmatprep.subr.bf16.mxu0 0
    %3092 = vmatpush1.bf16.msra.mxu0 %v2872
    %3093 = vmatprep.subr.bf16.mxu0 0
    %3094 = vmatpush1.bf16.msra.mxu0 %v2873
    %3095 = vmatprep.subr.bf16.mxu0 0
    %3096 = vmatpush1.bf16.msra.mxu0 %v2874
    %3097 = vmatprep.subr.bf16.mxu0 0
    %3098 = vmatpush1.bf16.msra.mxu0 %v2875
    %3099 = vmatprep.mubr.bf16.mxu0 %v2803
    %3100 = vmatmul.mubr.bf16.gmra.mrb[0].mxu0 %v2802
    %v3101 = vpop.f32.mrb[0].mxu0
    %v3102 = vadd.f32 %v3061, %v3101
    %v3103 = vpop.f32.mrb[0].mxu0
    %v3104 = vpop.f32.mrb[0].mxu0
    %v3105 = vadd.f32 %v3064, %v3104
    %v3106 = vpop.f32.mrb[0].mxu0
    %3107 = vdwg.mxu0
    %3108 = vmatprep.subr.bf16.mxu0 0
    %3109 = vmatpush1.bf16.msra.mxu0 %v2876
    %3110 = vmatprep.subr.bf16.mxu0 0
    %3111 = vmatpush1.bf16.msra.mxu0 %v2877
    %3112 = vmatprep.subr.bf16.mxu0 0
    %3113 = vmatpush1.bf16.msra.mxu0 %v2878
    %3114 = vmatprep.subr.bf16.mxu0 0
    %3115 = vmatpush1.bf16.msra.mxu0 %v2879
    %3116 = vmatprep.subr.bf16.mxu0 0
    %3117 = vmatpush1.bf16.msra.mxu0 %v2880
    %3118 = vmatprep.subr.bf16.mxu0 0
    %3119 = vmatpush1.bf16.msra.mxu0 %v2881
    %3120 = vmatprep.subr.bf16.mxu0 0
    %3121 = vmatpush1.bf16.msra.mxu0 %v2882
    %3122 = vmatprep.subr.bf16.mxu0 0
    %3123 = vmatpush1.bf16.msra.mxu0 %v2883
    %3124 = vmatprep.subr.bf16.mxu0 0
    %3125 = vmatpush1.bf16.msra.mxu0 %v2884
    %3126 = vmatprep.subr.bf16.mxu0 0
    %3127 = vmatpush1.bf16.msra.mxu0 %v2885
    %3128 = vmatprep.subr.bf16.mxu0 0
    %3129 = vmatpush1.bf16.msra.mxu0 %v2886
    %3130 = vmatprep.subr.bf16.mxu0 0
    %3131 = vmatpush1.bf16.msra.mxu0 %v2887
    %3132 = vmatprep.subr.bf16.mxu0 0
    %3133 = vmatpush1.bf16.msra.mxu0 %v2888
    %3134 = vmatprep.subr.bf16.mxu0 0
    %3135 = vmatpush1.bf16.msra.mxu0 %v2889
    %3136 = vmatprep.subr.bf16.mxu0 0
    %3137 = vmatpush1.bf16.msra.mxu0 %v2890
    %3138 = vmatprep.subr.bf16.mxu0 0
    %3139 = vmatpush1.bf16.msra.mxu0 %v2891
    %3140 = vmatprep.mubr.bf16.mxu0 %v2805
    %3141 = vmatmul.mubr.bf16.gmra.mrb[0].mxu0 %v2804
    %v3142 = vpop.f32.mrb[0].mxu0
    %v3143 = vadd.f32 %v3102, %v3142
    %v3144 = vpop.f32.mrb[0].mxu0
    %v3145 = vpop.f32.mrb[0].mxu0
    %v3146 = vadd.f32 %v3105, %v3145
    %v3147 = vpop.f32.mrb[0].mxu0
    %3148 = vdwg.mxu0
    %3149 = vmatprep.subr.bf16.mxu0 0
    %3150 = vmatpush1.bf16.msra.mxu0 %v2892
    %3151 = vmatprep.subr.bf16.mxu0 0
    %3152 = vmatpush1.bf16.msra.mxu0 %v2893
    %3153 = vmatprep.subr.bf16.mxu0 0
    %3154 = vmatpush1.bf16.msra.mxu0 %v2894
    %3155 = vmatprep.subr.bf16.mxu0 0
    %3156 = vmatpush1.bf16.msra.mxu0 %v2895
    %3157 = vmatprep.subr.bf16.mxu0 0
    %3158 = vmatpush1.bf16.msra.mxu0 %v2896
    %3159 = vmatprep.subr.bf16.mxu0 0
    %3160 = vmatpush1.bf16.msra.mxu0 %v2897
    %3161 = vmatprep.subr.bf16.mxu0 0
    %3162 = vmatpush1.bf16.msra.mxu0 %v2898
    %3163 = vmatprep.subr.bf16.mxu0 0
    %3164 = vmatpush1.bf16.msra.mxu0 %v2899
    %3165 = vmatprep.subr.bf16.mxu0 0
    %3166 = vmatpush1.bf16.msra.mxu0 %v2900
    %3167 = vmatprep.subr.bf16.mxu0 0
    %3168 = vmatpush1.bf16.msra.mxu0 %v2901
    %3169 = vmatprep.subr.bf16.mxu0 0
    %3170 = vmatpush1.bf16.msra.mxu0 %v2902
    %3171 = vmatprep.subr.bf16.mxu0 0
    %3172 = vmatpush1.bf16.msra.mxu0 %v2903
    %3173 = vmatprep.subr.bf16.mxu0 0
    %3174 = vmatpush1.bf16.msra.mxu0 %v2904
    %3175 = vmatprep.subr.bf16.mxu0 0
    %3176 = vmatpush1.bf16.msra.mxu0 %v2905
    %3177 = vmatprep.subr.bf16.mxu0 0
    %3178 = vmatpush1.bf16.msra.mxu0 %v2906
    %3179 = vmatprep.subr.bf16.mxu0 0
    %3180 = vmatpush1.bf16.msra.mxu0 %v2907
    %3181 = vmatprep.mubr.bf16.mxu0 %v2807
    %3182 = vmatmul.mubr.bf16.gmra.mrb[0].mxu0 %v2806
    %v3183 = vpop.f32.mrb[0].mxu0
    %v3184 = vadd.f32 %v3143, %v3183
    %v3185 = vpop.f32.mrb[0].mxu0
    %v3186 = vpop.f32.mrb[0].mxu0
    %v3187 = vadd.f32 %v3146, %v3186
    %v3188 = vpop.f32.mrb[0].mxu0
    %3189 = vdwg.mxu0
    %3190 = vmatprep.subr.bf16.mxu0 0
    %3191 = vmatpush1.bf16.msra.mxu0 %v2908
    %3192 = vmatprep.subr.bf16.mxu0 0
    %3193 = vmatpush1.bf16.msra.mxu0 %v2909
    %3194 = vmatprep.subr.bf16.mxu0 0
    %3195 = vmatpush1.bf16.msra.mxu0 %v2910
    %3196 = vmatprep.subr.bf16.mxu0 0
    %3197 = vmatpush1.bf16.msra.mxu0 %v2911
    %3198 = vmatprep.subr.bf16.mxu0 0
    %3199 = vmatpush1.bf16.msra.mxu0 %v2912
    %3200 = vmatprep.subr.bf16.mxu0 0
    %3201 = vmatpush1.bf16.msra.mxu0 %v2913
    %3202 = vmatprep.subr.bf16.mxu0 0
    %3203 = vmatpush1.bf16.msra.mxu0 %v2914
    %3204 = vmatprep.subr.bf16.mxu0 0
    %3205 = vmatpush1.bf16.msra.mxu0 %v2915
    %3206 = vmatprep.subr.bf16.mxu0 0
    %3207 = vmatpush1.bf16.msra.mxu0 %v2916
    %3208 = vmatprep.subr.bf16.mxu0 0
    %3209 = vmatpush1.bf16.msra.mxu0 %v2917
    %3210 = vmatprep.subr.bf16.mxu0 0
    %3211 = vmatpush1.bf16.msra.mxu0 %v2918
    %3212 = vmatprep.subr.bf16.mxu0 0
    %3213 = vmatpush1.bf16.msra.mxu0 %v2919
    %3214 = vmatprep.subr.bf16.mxu0 0
    %3215 = vmatpush1.bf16.msra.mxu0 %v2920
    %3216 = vmatprep.subr.bf16.mxu0 0
    %3217 = vmatpush1.bf16.msra.mxu0 %v2921
    %3218 = vmatprep.subr.bf16.mxu0 0
    %3219 = vmatpush1.bf16.msra.mxu0 %v2922
    %3220 = vmatprep.subr.bf16.mxu0 0
    %3221 = vmatpush1.bf16.msra.mxu0 %v2923
    %3222 = vmatprep.mubr.bf16.mxu0 %v2809
    %3223 = vmatmul.mubr.bf16.gmra.mrb[0].mxu0 %v2808
    %v3224 = vpop.f32.mrb[0].mxu0
    %v3225 = vadd.f32 %v3184, %v3224
    %v3226 = vpop.f32.mrb[0].mxu0
    %v3227 = vpop.f32.mrb[0].mxu0
    %v3228 = vadd.f32 %v3187, %v3227
    %v3229 = vpop.f32.mrb[0].mxu0
    %3230 = vdwg.mxu0
    %3231 = vmatprep.subr.bf16.mxu0 0
    %3232 = vmatpush1.bf16.msra.mxu0 %v2924
    %3233 = vmatprep.subr.bf16.mxu0 0
    %3234 = vmatpush1.bf16.msra.mxu0 %v2925
    %3235 = vmatprep.subr.bf16.mxu0 0
    %3236 = vmatpush1.bf16.msra.mxu0 %v2926
    %3237 = vmatprep.subr.bf16.mxu0 0
    %3238 = vmatpush1.bf16.msra.mxu0 %v2927
    %3239 = vmatprep.subr.bf16.mxu0 0
    %3240 = vmatpush1.bf16.msra.mxu0 %v2928
    %3241 = vmatprep.subr.bf16.mxu0 0
    %3242 = vmatpush1.bf16.msra.mxu0 %v2929
    %3243 = vmatprep.subr.bf16.mxu0 0
    %3244 = vmatpush1.bf16.msra.mxu0 %v2930
    %3245 = vmatprep.subr.bf16.mxu0 0
    %3246 = vmatpush1.bf16.msra.mxu0 %v2931
    %3247 = vmatprep.subr.bf16.mxu0 0
    %3248 = vmatpush1.bf16.msra.mxu0 %v2932
    %3249 = vmatprep.subr.bf16.mxu0 0
    %3250 = vmatpush1.bf16.msra.mxu0 %v2933
    %3251 = vmatprep.subr.bf16.mxu0 0
    %3252 = vmatpush1.bf16.msra.mxu0 %v2934
    %3253 = vmatprep.subr.bf16.mxu0 0
    %3254 = vmatpush1.bf16.msra.mxu0 %v2935
    %3255 = vmatprep.subr.bf16.mxu0 0
    %3256 = vmatpush1.bf16.msra.mxu0 %v2936
    %3257 = vmatprep.subr.bf16.mxu0 0
    %3258 = vmatpush1.bf16.msra.mxu0 %v2937
    %3259 = vmatprep.subr.bf16.mxu0 0
    %3260 = vmatpush1.bf16.msra.mxu0 %v2938
    %3261 = vmatprep.subr.bf16.mxu0 0
    %3262 = vmatpush1.bf16.msra.mxu0 %v2939
    %3263 = vmatprep.mubr.bf16.mxu0 %v2811
    %3264 = vmatmul.mubr.bf16.gmra.mrb[0].mxu0 %v2810
    %v3265 = vpop.f32.mrb[0].mxu0
    %v3266 = vadd.f32 %v3225, %v3265
    %v3267 = vpop.f32.mrb[0].mxu0
    %v3268 = vpop.f32.mrb[0].mxu0
    %v3269 = vadd.f32 %v3228, %v3268
    %v3270 = vpop.f32.mrb[0].mxu0
    %3271 = vdwg.mxu0
    %3272 = vst.msk [vmem:[#allocation5] sm:$0xff] %vm634, %v3266
    %3273 = vst.msk [vmem:[#allocation5 + $0x8] sm:$0xff] %vm634, %v3269
    // Predicated region
    $region85: #{encoder_layer.1} parent=1 // pred_check
      _
    $region86: #{encoder_layer.1} parent=1 // pred_check_branch
      %3275 = sbr.rel (0) target = $region88
    $region87: #{encoder_layer.1} parent=1 // pred_region
      %s3277 = ssub.s32 256, 256
      %3278 = vsyncadd [#allocation6], %s3277
      %s3279 = sshll.u32 [#allocation5], 4
      %s3280 = int_to_ptr.vmem [resolvable:$true] %s3279
      %3285 = dma.vmem_to_hbm [thread:$0]  %s3280, 256, %s5, [#allocation6], 128, 128, 8
    $region88: #{encoder_layer.1} parent=1 // pred_fallthru
      _
    // Predicated region
    $region89: #{encoder_layer.1} parent=1 // pred_check
      _
    $region90: #{encoder_layer.1} parent=1 // pred_check_branch
      %3287 = sbr.rel (0) target = $region92
    $region91: #{encoder_layer.1} parent=1 // pred_region
      %3288 = dma.done [#allocation6], 256
    $region92: #{encoder_layer.1} parent=1 // pred_fallthru
      _
    %3289 = vsyncpa [#allocation6], 1
  %3290 = vsyncmov [#allocation4]
  %s3291 = vpop.sfrf %3290
  %p3292 = scmp.eq.s32.totalorder %s3291, 0
  %p3293 = pneg %p3292
  %3295 = shalt.err (%p3293)
  %s3296 = scalar_lea.sflag [#allocation4], 1
  %3297 = vsyncmov %s3296
  %s3298 = vpop.sfrf %3297
  %p3299 = scmp.eq.s32.totalorder %s3298, 0
  %p3300 = pneg %p3299
  %3302 = shalt.err (%p3300)

</llo_original>
